<compile_context>
chip_gen: v5e
topology: v5e:2x2
jax: 0.10.0
libtpu: 0.0.40
codegen_flags: <defaults>
</compile_context>

<pallas_src>
import numpy as np

import jax
import jax.numpy as jnp
from jax.experimental import pallas as pl
from jax.experimental.pallas import tpu as pltpu

# ------------------------- config (small, self-consistent) -------------------------
BATCH = 128                            # per-call batch (amortizes resident weights)
TILE_B = 64                            # batch tile per grid step (multiple of 8)
NCHANNEL = 1
SIZE1 = SIZE2 = 16
HIDDEN_SIZE = 4                        # args.hidden_size
S_UNITS = HIDDEN_SIZE * NCHANNEL       # args.s_units (flatten/fc sizing requires this)
S_LAYERS = 1                           # args.s_layers
NUM_WAYS = 5
NUM_DOMAINS = 2
HIDDEN1, HIDDEN2 = 28, 14              # dataset == 'omniglot'

# Derived sizes (NCHW-flattened feature widths).
K_IN = NCHANNEL * SIZE1 * SIZE2                    # 256  (conv-stack input width)
N1 = S_UNITS * (SIZE1 // 2) * (SIZE2 // 2)         # 256  (conv1 / private-conv pooled width)
N2 = S_UNITS * (SIZE1 // 4) * (SIZE2 // 4)         # 64   (conv2 pooled width)
DH1 = NUM_DOMAINS * HIDDEN1                        # 56
DH2 = NUM_DOMAINS * HIDDEN2                        # 28
DNW = NUM_DOMAINS * NUM_WAYS                       # 10


def _r16(x):  # bf16 native tile is (16, 128): keep slab row offsets 16-aligned
    return ((x + 15) // 16) * 16


# --- packed bf16 weight slab ("wtail") row offsets ---
WT_SFW = 0                                  # sf_w    (N2, HIDDEN_SIZE)
WT_W1S = _r16(WT_SFW + N2)                  # W1s     (HIDDEN_SIZE, DH1)
WT_WGP = _r16(WT_W1S + HIDDEN_SIZE)         # W_gp    (N1, DH1)  = pl_w @ W1p (folded)
WT_W2 = _r16(WT_WGP + N1)                   # W2      (DH1, DH2) block-diagonal
WT_W3 = _r16(WT_W2 + DH1)                   # W3_all  (DH2, DNW) block-structured
WT_ROWS = _r16(WT_W3 + DH2)
WT_LANES = 128
assert max(HIDDEN_SIZE, DH1, DH2, DNW) <= WT_LANES

# --- packed f32 bias slab ("btail") layout ---
BT_CONV = 0      # row 0: s1_b[0:N1] | p_b[N1:2N1] | s2_b[2N1:2N1+N2]
BT_SFB = 1       # row 1: sf_b[0:H]
BT_B1 = 2        # row 2: (b1_all + pl_b @ W1p)[0:DH1]
BT_B2 = 3        # row 3: b2_all[0:DH2]
BT_B3 = 4        # row 4: b3_all[0:DNW]
BT_LANES = ((2 * N1 + N2 + 127) // 128) * 128      # 640 (multiple of 128)


# --------------------------------- Pallas kernel ------------------------------------
def _fused_net_kernel(xs_ref, xp_ref, tt_ref,
                      s1w_ref, pw_ref, s2w_ref, wt_ref, bt_ref, o_ref):
    f32, bf16 = jnp.float32, jnp.bfloat16
    H = HIDDEN_SIZE

    def corner_max(y, n):
        # y = x @ [Wc0 | Wc1 | Wc2 | Wc3]; maxpool corner selection = max over slabs.
        return jnp.maximum(jnp.maximum(y[:, 0:n], y[:, n:2 * n]),
                           jnp.maximum(y[:, 2 * n:3 * n], y[:, 3 * n:4 * n]))

    # ---------------- Shared branch ----------------
    # conv1 (3x3, pad 1) + bias + ReLU + maxpool(2), folded into one bf16 matmul.
    y = jnp.dot(xs_ref[...].astype(bf16), s1w_ref[...], preferred_element_type=f32)
    h = jnp.maximum(corner_max(y, N1) + bt_ref[BT_CONV:BT_CONV + 1, 0:N1], 0.0)
    # conv2 + bias + ReLU + maxpool(2).
    y = jnp.dot(h.astype(bf16), s2w_ref[...], preferred_element_type=f32)
    h2 = jnp.maximum(corner_max(y, N2)
                     + bt_ref[BT_CONV:BT_CONV + 1, 2 * N1:2 * N1 + N2], 0.0)
    # shared fc + ReLU.
    sfw = wt_ref[WT_SFW:WT_SFW + N2, 0:H].astype(f32)
    fs = jnp.maximum(jnp.dot(h2, sfw, preferred_element_type=f32)
                     + bt_ref[BT_SFB:BT_SFB + 1, 0:H], 0.0)                     # (TB, H)

    # ---------------- Private branch (selected domain) ----------------
    y = jnp.dot(xp_ref[...].astype(bf16), pw_ref[...], preferred_element_type=f32)
    g = corner_max(y, N1) + bt_ref[BT_CONV:BT_CONV + 1, N1:2 * N1]
    g = jnp.maximum(g, 0.001 * g)                      # LeakyReLU(0.001) via max  (TB, N1)

    # ---------------- Head (all-domain stacked) + per-sample routing ----------------
    # Private Linear is pre-folded into W_gp = pl_w @ W1p (no nonlinearity between), so
    # a1 = relu( fs @ W1s + g @ W_gp + (b1 + pl_b @ W1p) ).
    w1s = wt_ref[WT_W1S:WT_W1S + H, 0:DH1].astype(f32)
    wgp = wt_ref[WT_WGP:WT_WGP + N1, 0:DH1]
    a1 = (jnp.dot(fs, w1s, preferred_element_type=f32)
          + jnp.dot(g.astype(bf16), wgp, preferred_element_type=f32)
          + bt_ref[BT_B1:BT_B1 + 1, 0:DH1])
    a1 = jnp.maximum(a1, 0.0)                                                    # (TB, DH1)

    w2 = wt_ref[WT_W2:WT_W2 + DH1, 0:DH2].astype(f32)
    a2 = jnp.maximum(jnp.dot(a1, w2, preferred_element_type=f32)
                     + bt_ref[BT_B2:BT_B2 + 1, 0:DH2], 0.0)                      # (TB, DH2)

    w3 = wt_ref[WT_W3:WT_W3 + DH2, 0:DNW].astype(f32)
    yh = jnp.dot(a2, w3, preferred_element_type=f32) + bt_ref[BT_B3:BT_B3 + 1, 0:DNW]

    tt = tt_ref[...]                                   # (TB, 1) int32
    out = jnp.zeros(o_ref.shape, f32)
    for d in range(NUM_DOMAINS):
        out = jnp.where(tt == d, yh[:, d * NUM_WAYS:(d + 1) * NUM_WAYS], out)
    o_ref[...] = out


# ------------------------ init-time weight folding (host side) ----------------------
def _fold_conv_pool_cat(w, b, hin, win):
    """Fold Conv2d(k=3, s=1, p=1) + 2x2-maxpool corner selection into ONE dense matrix.

    w: (cout, cin, 3, 3) torch layout, b: (cout,).
    Input layout:  i = ci*hin*win + h*win + w   (NCHW flatten).
    Output layout: j = co*hout*wout + h'*wout + w' (NCHW flatten), hout = hin//2.
    Returns w_cat (cin*hin*win, 4*n) with the 4 corner matrices concatenated along N
    (corner-major), and b_vec (1, n), such that
        pooled = act( max_k (x @ w_cat[:, k*n:(k+1)*n]) + b_vec )
              == maxpool2( act(conv(x) + b) ).
    """
    cout, cin, _, _ = w.shape
    hout, wout = hin // 2, win // 2
    n = cout * hout * wout
    wk = np.zeros((4, cin * hin * win, n), np.float32)
    corners = ((0, 0), (0, 1), (1, 0), (1, 1))
    for k, (dh, dw) in enumerate(corners):
        for co in range(cout):
            for ho in range(hout):
                for wo in range(wout):
                    j = co * hout * wout + ho * wout + wo
                    for ci in range(cin):
                        for kh in range(3):
                            for kw in range(3):
                                hi = 2 * ho + dh + kh - 1
                                wi = 2 * wo + dw + kw - 1
                                if 0 <= hi < hin and 0 <= wi < win:
                                    i = ci * hin * win + hi * win + wi
                                    wk[k, i, j] += w[co, ci, kh, kw]
    w_cat = np.concatenate([wk[k] for k in range(4)], axis=1)
    b_vec = np.repeat(b.astype(np.float32), hout * wout)[None, :]
    return w_cat, b_vec


def init_params(key):
    assert S_LAYERS == 1  # TODO(synk): folded conv matrices built for s_layers == 1.
    ks = jax.random.split(key, 16)
    rnd = lambda k, shape, s: np.asarray(s * jax.random.normal(k, shape, jnp.float32))

    # ---- raw weights (PyTorch layouts) ----
    s1_w = rnd(ks[0], (S_UNITS, NCHANNEL, 3, 3), 0.2)
    s1_b = rnd(ks[1], (S_UNITS,), 0.1)
    s2_w = rnd(ks[2], (S_UNITS, S_UNITS, 3, 3), 0.2)
    s2_b = rnd(ks[3], (S_UNITS,), 0.1)
    sf_w = rnd(ks[4], (N2, HIDDEN_SIZE), 0.1)            # (in, out)
    sf_b = rnd(ks[5], (HIDDEN_SIZE,), 0.1)
    p_w = rnd(ks[6], (NUM_DOMAINS, HIDDEN_SIZE, NCHANNEL, 3, 3), 0.2)
    p_b = rnd(ks[7], (NUM_DOMAINS, HIDDEN_SIZE), 0.1)
    pl_w = rnd(ks[8], (NUM_DOMAINS, NCHANNEL * SIZE1 * SIZE2, HIDDEN_SIZE), 0.05)
    pl_b = rnd(ks[9], (NUM_DOMAINS, HIDDEN_SIZE), 0.1)
    h_w1 = rnd(ks[10], (NUM_DOMAINS, 2 * HIDDEN_SIZE, HIDDEN1), 0.2)
    h_b1 = rnd(ks[11], (NUM_DOMAINS, HIDDEN1), 0.1)
    h_w2 = rnd(ks[12], (NUM_DOMAINS, HIDDEN1, HIDDEN2), 0.2)
    h_b2 = rnd(ks[13], (NUM_DOMAINS, HIDDEN2), 0.1)
    h_w3 = rnd(ks[14], (NUM_DOMAINS, HIDDEN2, NUM_WAYS), 0.2)
    h_b3 = rnd(ks[15], (NUM_DOMAINS, NUM_WAYS), 0.1)

    # ---- stack per-domain head MLPs (block-diagonal / block-structured) ----
    D, H, H1, H2, NW = NUM_DOMAINS, HIDDEN_SIZE, HIDDEN1, HIDDEN2, NUM_WAYS
    w1_all = np.zeros((2 * H, D * H1), np.float32)
    b1_all = np.zeros((1, D * H1), np.float32)
    w2_blk = np.zeros((D * H1, D * H2), np.float32)
    b2_all = np.zeros((1, D * H2), np.float32)
    w3_blk = np.zeros((D * H2, D * NW), np.float32)
    b3_all = np.zeros((1, D * NW), np.float32)
    for d in range(D):
        w1_all[:, d * H1:(d + 1) * H1] = h_w1[d]
        b1_all[0, d * H1:(d + 1) * H1] = h_b1[d]
        w2_blk[d * H1:(d + 1) * H1, d * H2:(d + 1) * H2] = h_w2[d]
        b2_all[0, d * H2:(d + 1) * H2] = h_b2[d]
        w3_blk[d * H2:(d + 1) * H2, d * NW:(d + 1) * NW] = h_w3[d]
        b3_all[0, d * NW:(d + 1) * NW] = h_b3[d]
    w1s, w1p = w1_all[:H], w1_all[H:]

    # ---- fold conv+pool stages (corner-concatenated along N) ----
    s1_cat, s1_bv = _fold_conv_pool_cat(s1_w, s1_b, SIZE1, SIZE2)            # (256,1024),(1,256)
    s2_cat, s2_bv = _fold_conv_pool_cat(s2_w, s2_b, SIZE1 // 2, SIZE2 // 2)  # (256, 256),(1, 64)
    p_folds = [_fold_conv_pool_cat(p_w[d], p_b[d], SIZE1, SIZE2) for d in range(D)]

    # ---- per-domain packed slabs ----
    p_wks, wtails, btails = [], [], []
    for d in range(D):
        p_cat, p_bv = p_folds[d]
        w_gp = pl_w[d] @ w1p                         # (N1, DH1): private Linear folded into W1p
        b1_fold = b1_all + pl_b[d][None, :] @ w1p    # (1, DH1)

        wt = np.zeros((WT_ROWS, WT_LANES), np.float32)
        wt[WT_SFW:WT_SFW + N2, 0:H] = sf_w
        wt[WT_W1S:WT_W1S + H, 0:D * H1] = w1s
        wt[WT_WGP:WT_WGP + N1, 0:D * H1] = w_gp
        wt[WT_W2:WT_W2 + D * H1, 0:D * H2] = w2_blk
        wt[WT_W3:WT_W3 + D * H2, 0:D * NW] = w3_blk

        bt = np.zeros((8, BT_LANES), np.float32)
        bt[BT_CONV, 0:N1] = s1_bv[0]
        bt[BT_CONV, N1:2 * N1] = p_bv[0]
        bt[BT_CONV, 2 * N1:2 * N1 + N2] = s2_bv[0]
        bt[BT_SFB, 0:H] = sf_b
        bt[BT_B1, 0:D * H1] = b1_fold[0]
        bt[BT_B2, 0:D * H2] = b2_all[0]
        bt[BT_B3, 0:D * NW] = b3_all[0]

        p_wks.append(jnp.asarray(p_cat, jnp.bfloat16))
        wtails.append(jnp.asarray(wt, jnp.bfloat16))
        btails.append(jnp.asarray(bt, jnp.float32))

    params = {
        "s1_wk": jnp.asarray(s1_cat, jnp.bfloat16),     # (256, 1024) bf16
        "s2_wk": jnp.asarray(s2_cat, jnp.bfloat16),     # (256,  256) bf16
        "p_wk": tuple(p_wks),                           # per-domain (256, 1024) bf16
        "wtail": tuple(wtails),                         # per-domain packed bf16 weight slab
        "btail": tuple(btails),                         # per-domain packed f32 bias slab
    }
    raw = dict(s1_w=s1_w, s1_b=s1_b, s2_w=s2_w, s2_b=s2_b, sf_w=sf_w, sf_b=sf_b,
               p_w=p_w, p_b=p_b, pl_w=pl_w, pl_b=pl_b,
               h_w1=h_w1, h_b1=h_b1, h_w2=h_w2, h_b2=h_b2, h_w3=h_w3, h_b3=h_b3)
    return params, raw


# ----------------------------------- forward ----------------------------------------
def net_forward(params, x_s_nchw, x_p_nchw, tt, domain_id):
    b = x_s_nchw.shape[0]
    bp = ((b + TILE_B - 1) // TILE_B) * TILE_B
    xs = x_s_nchw.reshape(b, K_IN).astype(jnp.float32)   # NCHW flatten
    xp = x_p_nchw.reshape(b, K_IN).astype(jnp.float32)
    tt2 = tt.astype(jnp.int32).reshape(b, 1)
    if bp != b:
        pad = bp - b
        xs = jnp.pad(xs, ((0, pad), (0, 0)))
        xp = jnp.pad(xp, ((0, pad), (0, 0)))
        tt2 = jnp.pad(tt2, ((0, pad), (0, 0)))
    p = params
    nb = bp // TILE_B

    out = pl.pallas_call(
        _fused_net_kernel,
        out_shape=jax.ShapeDtypeStruct((bp, NUM_WAYS), jnp.float32),
        grid=(nb,),
        in_specs=[
            # streamed activations (block index follows the batch grid)
            pl.BlockSpec((TILE_B, K_IN), lambda i: (i, 0)),
            pl.BlockSpec((TILE_B, K_IN), lambda i: (i, 0)),
            pl.BlockSpec((TILE_B, 1), lambda i: (i, 0)),
            # resident weights (constant block index -> DMA'd once, reused every step)
            pl.BlockSpec((K_IN, 4 * N1), lambda i: (0, 0)),
            pl.BlockSpec((K_IN, 4 * N1), lambda i: (0, 0)),
            pl.BlockSpec((N1, 4 * N2), lambda i: (0, 0)),
            pl.BlockSpec((WT_ROWS, WT_LANES), lambda i: (0, 0)),
            pl.BlockSpec((8, BT_LANES), lambda i: (0, 0)),
        ],
        out_specs=pl.BlockSpec((TILE_B, NUM_WAYS), lambda i: (i, 0)),
        # "arbitrary": keep the resident weights fetched exactly once.  On v7x, switch
        # to ("parallel",) only when per-TC compute exceeds the duplicated weight DMA.
        compiler_params=pltpu.CompilerParams(dimension_semantics=("arbitrary",)),
    )(xs, xp, tt2, p["s1_wk"], p["p_wk"][domain_id], p["s2_wk"],
      p["wtail"][domain_id], p["btail"][domain_id])
    return out[:b]


# ------------------------- pure-JAX reference (for validation) ----------------------
def _reference_forward(raw, x_s, x_p, tt, domain_id):
    hi = jax.lax.Precision.HIGHEST

    def conv3x3(x, w, b):
        y = jax.lax.conv_general_dilated(
            x, jnp.asarray(w), window_strides=(1, 1), padding=((1, 1), (1, 1)),
            dimension_numbers=("NCHW", "OIHW", "NCHW"), precision=hi)
        return y + jnp.asarray(b)[None, :, None, None]

    def pool2(x):
        return jax.lax.reduce_window(x, -jnp.inf, jax.lax.max,
                                     (1, 1, 2, 2), (1, 1, 2, 2), "VALID")

    # Shared
    h = pool2(jax.nn.relu(conv3x3(x_s, raw["s1_w"], raw["s1_b"])))
    h = pool2(jax.nn.relu(conv3x3(h, raw["s2_w"], raw["s2_b"])))
    h = h.reshape(h.shape[0], -1)
    fs = jax.nn.relu(h @ raw["sf_w"] + raw["sf_b"])
    # Private (evident-intent version of the broken torch Private.forward)
    g = conv3x3(x_p, raw["p_w"][domain_id], raw["p_b"][domain_id])
    g = jnp.where(g >= 0, g, 0.001 * g)
    g = pool2(g).reshape(x_p.shape[0], -1)
    fp = g @ raw["pl_w"][domain_id] + raw["pl_b"][domain_id]
    # Head (per-sample routing on tt)
    x = jnp.concatenate([fs, fp], axis=1)
    tt_col = jnp.asarray(tt).astype(jnp.int32).reshape(-1, 1)
    out = jnp.zeros((x.shape[0], NUM_WAYS), jnp.float32)
    for d in range(NUM_DOMAINS):
        h1 = jax.nn.relu(x @ raw["h_w1"][d] + raw["h_b1"][d])
        h2 = jax.nn.relu(h1 @ raw["h_w2"][d] + raw["h_b2"][d])
        yd = h2 @ raw["h_w3"][d] + raw["h_b3"][d]
        out = jnp.where(tt_col == d, yd, out)
    return out


if __name__ == "__main__":
    key = jax.random.PRNGKey(0)
    kp, kxs, kxp, ktt = jax.random.split(key, 4)
    params, raw = init_params(kp)
    x_s = jax.random.normal(kxs, (BATCH, NCHANNEL, SIZE1, SIZE2), jnp.float32)
    x_p = jax.random.normal(kxp, (BATCH, NCHANNEL, SIZE1, SIZE2), jnp.float32)
    tt = jax.random.randint(ktt, (BATCH,), 0, NUM_DOMAINS, jnp.int32)
    domain_id = 1

    fwd = jax.jit(net_forward, static_argnums=(4,))
    out = jax.block_until_ready(fwd(params, x_s, x_p, tt, domain_id))
    assert out.shape == (BATCH, NUM_WAYS), out.shape
    assert bool(jnp.all(jnp.isfinite(out)))

    ref = _reference_forward(raw, x_s, x_p, np.asarray(tt), domain_id)
    # Tolerance covers the bf16 weight storage (MXU operands); math/accumulation is f32.
    np.testing.assert_allclose(np.asarray(out), np.asarray(ref), rtol=5e-2, atol=5e-2)
    print("KERNEL_OK")
</pallas_src>

<mosaic_0001>
module attributes {stable_mosaic.version = 11 : i64} {
  func.func @_fused_net_kernel(%arg0: i32, %arg1: memref<64x256xf32, #tpu.memory_space<vmem>>, %arg2: memref<64x256xf32, #tpu.memory_space<vmem>>, %arg3: memref<64x1xi32, #tpu.memory_space<vmem>>, %arg4: memref<256x1024xbf16, #tpu.memory_space<vmem>>, %arg5: memref<256x1024xbf16, #tpu.memory_space<vmem>>, %arg6: memref<256x256xbf16, #tpu.memory_space<vmem>>, %arg7: memref<432x128xbf16, #tpu.memory_space<vmem>>, %arg8: memref<8x640xf32, #tpu.memory_space<vmem>>, %arg9: memref<64x5xf32, #tpu.memory_space<vmem>>) attributes {dimension_semantics = [#tpu.dimension_semantics<arbitrary>], iteration_bounds = array<i64: 2>, scalar_prefetch = 0 : i64, scratch_operands = 0 : i64, tpu.core_type = #tpu.core_type<tc>, window_params = [{transform_indices = @transform_0, window_bounds = array<i64: 64, 256>}, {transform_indices = @transform_1, window_bounds = array<i64: 64, 256>}, {transform_indices = @transform_2, window_bounds = array<i64: 64, 1>}, {pipeline_mode = #tpu.pipeline_mode<synchronous>, transform_indices = @transform_3, window_bounds = array<i64: 256, 1024>}, {pipeline_mode = #tpu.pipeline_mode<synchronous>, transform_indices = @transform_4, window_bounds = array<i64: 256, 1024>}, {pipeline_mode = #tpu.pipeline_mode<synchronous>, transform_indices = @transform_5, window_bounds = array<i64: 256, 256>}, {pipeline_mode = #tpu.pipeline_mode<synchronous>, transform_indices = @transform_6, window_bounds = array<i64: 432, 128>}, {pipeline_mode = #tpu.pipeline_mode<synchronous>, transform_indices = @transform_7, window_bounds = array<i64: 8, 640>}, {transform_indices = @transform_8, window_bounds = array<i64: 64, 5>}]} {
    %c0 = arith.constant 0 : index
    %c0_0 = arith.constant 0 : index
    %0 = vector.load %arg1[%c0, %c0_0] : memref<64x256xf32, #tpu.memory_space<vmem>>, vector<64x256xf32>
    %1 = arith.truncf %0 : vector<64x256xf32> to vector<64x256xbf16>
    %c0_1 = arith.constant 0 : index
    %c0_2 = arith.constant 0 : index
    %2 = vector.load %arg4[%c0_1, %c0_2] : memref<256x1024xbf16, #tpu.memory_space<vmem>>, vector<256x1024xbf16>
    %cst = arith.constant dense<0.000000e+00> : vector<64x1024xf32>
    %3 = tpu.matmul %1, %2, %cst {dimension_numbers = #tpu.dot_dimension_numbers<[1], [0], [0], [1], [0, 0, 1, 1], [], []>} : vector<64x256xbf16>, vector<256x1024xbf16>, vector<64x1024xf32> -> vector<64x1024xf32>
    %4 = vector.extract_strided_slice %3 {offsets = [0, 0], sizes = [64, 256], strides = [1, 1]} : vector<64x1024xf32> to vector<64x256xf32>
    %5 = vector.extract_strided_slice %3 {offsets = [0, 256], sizes = [64, 256], strides = [1, 1]} : vector<64x1024xf32> to vector<64x256xf32>
    %6 = arith.maximumf %4, %5 : vector<64x256xf32>
    %7 = vector.extract_strided_slice %3 {offsets = [0, 512], sizes = [64, 256], strides = [1, 1]} : vector<64x1024xf32> to vector<64x256xf32>
    %8 = vector.extract_strided_slice %3 {offsets = [0, 768], sizes = [64, 256], strides = [1, 1]} : vector<64x1024xf32> to vector<64x256xf32>
    %9 = arith.maximumf %7, %8 : vector<64x256xf32>
    %10 = arith.maximumf %6, %9 : vector<64x256xf32>
    %c0_3 = arith.constant 0 : index
    %c0_4 = arith.constant 0 : index
    %11 = vector.load %arg8[%c0_3, %c0_4] : memref<8x640xf32, #tpu.memory_space<vmem>>, vector<1x256xf32>
    %12 = vector.broadcast %11 : vector<1x256xf32> to vector<64x256xf32>
    %13 = arith.addf %10, %12 : vector<64x256xf32>
    %cst_5 = arith.constant 0.000000e+00 : f32
    %14 = vector.broadcast %cst_5 : f32 to vector<64x256xf32>
    %15 = arith.maximumf %13, %14 : vector<64x256xf32>
    %16 = arith.truncf %15 : vector<64x256xf32> to vector<64x256xbf16>
    %c0_6 = arith.constant 0 : index
    %c0_7 = arith.constant 0 : index
    %17 = vector.load %arg6[%c0_6, %c0_7] : memref<256x256xbf16, #tpu.memory_space<vmem>>, vector<256x256xbf16>
    %cst_8 = arith.constant dense<0.000000e+00> : vector<64x256xf32>
    %18 = tpu.matmul %16, %17, %cst_8 {dimension_numbers = #tpu.dot_dimension_numbers<[1], [0], [0], [1], [0, 0, 1, 1], [], []>} : vector<64x256xbf16>, vector<256x256xbf16>, vector<64x256xf32> -> vector<64x256xf32>
    %19 = vector.extract_strided_slice %18 {offsets = [0, 0], sizes = [64, 64], strides = [1, 1]} : vector<64x256xf32> to vector<64x64xf32>
    %20 = vector.extract_strided_slice %18 {offsets = [0, 64], sizes = [64, 64], strides = [1, 1]} : vector<64x256xf32> to vector<64x64xf32>
    %21 = arith.maximumf %19, %20 : vector<64x64xf32>
    %22 = vector.extract_strided_slice %18 {offsets = [0, 128], sizes = [64, 64], strides = [1, 1]} : vector<64x256xf32> to vector<64x64xf32>
    %23 = vector.extract_strided_slice %18 {offsets = [0, 192], sizes = [64, 64], strides = [1, 1]} : vector<64x256xf32> to vector<64x64xf32>
    %24 = arith.maximumf %22, %23 : vector<64x64xf32>
    %25 = arith.maximumf %21, %24 : vector<64x64xf32>
    %c0_9 = arith.constant 0 : index
    %c512 = arith.constant 512 : index
    %26 = vector.load %arg8[%c0_9, %c512] : memref<8x640xf32, #tpu.memory_space<vmem>>, vector<1x64xf32>
    %27 = vector.broadcast %26 : vector<1x64xf32> to vector<64x64xf32>
    %28 = arith.addf %25, %27 : vector<64x64xf32>
    %cst_10 = arith.constant 0.000000e+00 : f32
    %29 = vector.broadcast %cst_10 : f32 to vector<64x64xf32>
    %30 = arith.maximumf %28, %29 : vector<64x64xf32>
    %c0_11 = arith.constant 0 : index
    %c0_12 = arith.constant 0 : index
    %31 = vector.load %arg7[%c0_11, %c0_12] : memref<432x128xbf16, #tpu.memory_space<vmem>>, vector<64x4xbf16>
    %32 = arith.extf %31 : vector<64x4xbf16> to vector<64x4xf32>
    %cst_13 = arith.constant dense<0.000000e+00> : vector<64x4xf32>
    %33 = tpu.matmul %30, %32, %cst_13 {dimension_numbers = #tpu.dot_dimension_numbers<[1], [0], [0], [1], [0, 0, 1, 1], [], []>} : vector<64x64xf32>, vector<64x4xf32>, vector<64x4xf32> -> vector<64x4xf32>
    %c1 = arith.constant 1 : index
    %c0_14 = arith.constant 0 : index
    %34 = vector.load %arg8[%c1, %c0_14] : memref<8x640xf32, #tpu.memory_space<vmem>>, vector<1x4xf32>
    %35 = vector.broadcast %34 : vector<1x4xf32> to vector<64x4xf32>
    %36 = arith.addf %33, %35 : vector<64x4xf32>
    %cst_15 = arith.constant 0.000000e+00 : f32
    %37 = vector.broadcast %cst_15 : f32 to vector<64x4xf32>
    %38 = arith.maximumf %36, %37 : vector<64x4xf32>
    %c0_16 = arith.constant 0 : index
    %c0_17 = arith.constant 0 : index
    %39 = vector.load %arg2[%c0_16, %c0_17] : memref<64x256xf32, #tpu.memory_space<vmem>>, vector<64x256xf32>
    %40 = arith.truncf %39 : vector<64x256xf32> to vector<64x256xbf16>
    %c0_18 = arith.constant 0 : index
    %c0_19 = arith.constant 0 : index
    %41 = vector.load %arg5[%c0_18, %c0_19] : memref<256x1024xbf16, #tpu.memory_space<vmem>>, vector<256x1024xbf16>
    %cst_20 = arith.constant dense<0.000000e+00> : vector<64x1024xf32>
    %42 = tpu.matmul %40, %41, %cst_20 {dimension_numbers = #tpu.dot_dimension_numbers<[1], [0], [0], [1], [0, 0, 1, 1], [], []>} : vector<64x256xbf16>, vector<256x1024xbf16>, vector<64x1024xf32> -> vector<64x1024xf32>
    %43 = vector.extract_strided_slice %42 {offsets = [0, 0], sizes = [64, 256], strides = [1, 1]} : vector<64x1024xf32> to vector<64x256xf32>
    %44 = vector.extract_strided_slice %42 {offsets = [0, 256], sizes = [64, 256], strides = [1, 1]} : vector<64x1024xf32> to vector<64x256xf32>
    %45 = arith.maximumf %43, %44 : vector<64x256xf32>
    %46 = vector.extract_strided_slice %42 {offsets = [0, 512], sizes = [64, 256], strides = [1, 1]} : vector<64x1024xf32> to vector<64x256xf32>
    %47 = vector.extract_strided_slice %42 {offsets = [0, 768], sizes = [64, 256], strides = [1, 1]} : vector<64x1024xf32> to vector<64x256xf32>
    %48 = arith.maximumf %46, %47 : vector<64x256xf32>
    %49 = arith.maximumf %45, %48 : vector<64x256xf32>
    %c0_21 = arith.constant 0 : index
    %c256 = arith.constant 256 : index
    %50 = vector.load %arg8[%c0_21, %c256] : memref<8x640xf32, #tpu.memory_space<vmem>>, vector<1x256xf32>
    %51 = vector.broadcast %50 : vector<1x256xf32> to vector<64x256xf32>
    %52 = arith.addf %49, %51 : vector<64x256xf32>
    %cst_22 = arith.constant 1.000000e-03 : f32
    %53 = vector.broadcast %cst_22 : f32 to vector<64x256xf32>
    %54 = arith.mulf %53, %52 : vector<64x256xf32>
    %55 = arith.maximumf %52, %54 : vector<64x256xf32>
    %c64 = arith.constant 64 : index
    %c0_23 = arith.constant 0 : index
    %56 = vector.load %arg7[%c64, %c0_23] : memref<432x128xbf16, #tpu.memory_space<vmem>>, vector<4x56xbf16>
    %57 = arith.extf %56 : vector<4x56xbf16> to vector<4x56xf32>
    %c80 = arith.constant 80 : index
    %c0_24 = arith.constant 0 : index
    %58 = vector.load %arg7[%c80, %c0_24] : memref<432x128xbf16, #tpu.memory_space<vmem>>, vector<256x56xbf16>
    %cst_25 = arith.constant dense<0.000000e+00> : vector<64x56xf32>
    %59 = tpu.matmul %38, %57, %cst_25 {dimension_numbers = #tpu.dot_dimension_numbers<[1], [0], [0], [1], [0, 0, 1, 1], [], []>} : vector<64x4xf32>, vector<4x56xf32>, vector<64x56xf32> -> vector<64x56xf32>
    %60 = arith.truncf %55 : vector<64x256xf32> to vector<64x256xbf16>
    %cst_26 = arith.constant dense<0.000000e+00> : vector<64x56xf32>
    %61 = tpu.matmul %60, %58, %cst_26 {dimension_numbers = #tpu.dot_dimension_numbers<[1], [0], [0], [1], [0, 0, 1, 1], [], []>} : vector<64x256xbf16>, vector<256x56xbf16>, vector<64x56xf32> -> vector<64x56xf32>
    %62 = arith.addf %59, %61 : vector<64x56xf32>
    %c2 = arith.constant 2 : index
    %c0_27 = arith.constant 0 : index
    %63 = vector.load %arg8[%c2, %c0_27] : memref<8x640xf32, #tpu.memory_space<vmem>>, vector<1x56xf32>
    %64 = vector.broadcast %63 : vector<1x56xf32> to vector<64x56xf32>
    %65 = arith.addf %62, %64 : vector<64x56xf32>
    %cst_28 = arith.constant 0.000000e+00 : f32
    %66 = vector.broadcast %cst_28 : f32 to vector<64x56xf32>
    %67 = arith.maximumf %65, %66 : vector<64x56xf32>
    %c336 = arith.constant 336 : index
    %c0_29 = arith.constant 0 : index
    %68 = vector.load %arg7[%c336, %c0_29] : memref<432x128xbf16, #tpu.memory_space<vmem>>, vector<56x28xbf16>
    %69 = arith.extf %68 : vector<56x28xbf16> to vector<56x28xf32>
    %cst_30 = arith.constant dense<0.000000e+00> : vector<64x28xf32>
    %70 = tpu.matmul %67, %69, %cst_30 {dimension_numbers = #tpu.dot_dimension_numbers<[1], [0], [0], [1], [0, 0, 1, 1], [], []>} : vector<64x56xf32>, vector<56x28xf32>, vector<64x28xf32> -> vector<64x28xf32>
    %c3 = arith.constant 3 : index
    %c0_31 = arith.constant 0 : index
    %71 = vector.load %arg8[%c3, %c0_31] : memref<8x640xf32, #tpu.memory_space<vmem>>, vector<1x28xf32>
    %72 = vector.broadcast %71 : vector<1x28xf32> to vector<64x28xf32>
    %73 = arith.addf %70, %72 : vector<64x28xf32>
    %cst_32 = arith.constant 0.000000e+00 : f32
    %74 = vector.broadcast %cst_32 : f32 to vector<64x28xf32>
    %75 = arith.maximumf %73, %74 : vector<64x28xf32>
    %c400 = arith.constant 400 : index
    %c0_33 = arith.constant 0 : index
    %76 = vector.load %arg7[%c400, %c0_33] : memref<432x128xbf16, #tpu.memory_space<vmem>>, vector<28x10xbf16>
    %77 = arith.extf %76 : vector<28x10xbf16> to vector<28x10xf32>
    %cst_34 = arith.constant dense<0.000000e+00> : vector<64x10xf32>
    %78 = tpu.matmul %75, %77, %cst_34 {dimension_numbers = #tpu.dot_dimension_numbers<[1], [0], [0], [1], [0, 0, 1, 1], [], []>} : vector<64x28xf32>, vector<28x10xf32>, vector<64x10xf32> -> vector<64x10xf32>
    %c4 = arith.constant 4 : index
    %c0_35 = arith.constant 0 : index
    %79 = vector.load %arg8[%c4, %c0_35] : memref<8x640xf32, #tpu.memory_space<vmem>>, vector<1x10xf32>
    %80 = vector.broadcast %79 : vector<1x10xf32> to vector<64x10xf32>
    %81 = arith.addf %78, %80 : vector<64x10xf32>
    %c0_36 = arith.constant 0 : index
    %c0_37 = arith.constant 0 : index
    %82 = vector.load %arg3[%c0_36, %c0_37] : memref<64x1xi32, #tpu.memory_space<vmem>>, vector<64x1xi32>
    %cst_38 = arith.constant 0.000000e+00 : f32
    %83 = vector.broadcast %cst_38 : f32 to vector<64x5xf32>
    %c0_i32 = arith.constant 0 : i32
    %84 = vector.broadcast %c0_i32 : i32 to vector<64x1xi32>
    %85 = arith.cmpi eq, %82, %84 : vector<64x1xi32>
    %86 = vector.extract_strided_slice %81 {offsets = [0, 0], sizes = [64, 5], strides = [1, 1]} : vector<64x10xf32> to vector<64x5xf32>
    %87 = vector.shape_cast %85 : vector<64x1xi1> to vector<64x1xi1>
    %88 = vector.broadcast %87 : vector<64x1xi1> to vector<64x5xi1>
    %89 = arith.select %88, %86, %83 : vector<64x5xi1>, vector<64x5xf32>
    %c1_i32 = arith.constant 1 : i32
    %90 = vector.broadcast %c1_i32 : i32 to vector<64x1xi32>
    %91 = arith.cmpi eq, %82, %90 : vector<64x1xi32>
    %92 = vector.extract_strided_slice %81 {offsets = [0, 5], sizes = [64, 5], strides = [1, 1]} : vector<64x10xf32> to vector<64x5xf32>
    %93 = vector.shape_cast %91 : vector<64x1xi1> to vector<64x1xi1>
    %94 = vector.broadcast %93 : vector<64x1xi1> to vector<64x5xi1>
    %95 = arith.select %94, %92, %89 : vector<64x5xi1>, vector<64x5xf32>
    %c0_39 = arith.constant 0 : index
    %c0_40 = arith.constant 0 : index
    %96 = vector.load %arg9[%c0_39, %c0_40] : memref<64x5xf32, #tpu.memory_space<vmem>>, vector<64x5xf32>
    tpu.vector_store %arg9[%c0_39, %c0_40], %95 {strides = array<i32>} : memref<64x5xf32, #tpu.memory_space<vmem>>, vector<64x5xf32>,
    return
  }
  func.func @transform_0(%arg0: i32) -> (i32, i32) {
    %c0_i32 = arith.constant 0 : i32
    %c0_i32_0 = arith.constant 0 : i32
    return %arg0, %c0_i32 : i32, i32
  }
  func.func @transform_1(%arg0: i32) -> (i32, i32) {
    %c0_i32 = arith.constant 0 : i32
    %c0_i32_0 = arith.constant 0 : i32
    return %arg0, %c0_i32 : i32, i32
  }
  func.func @transform_2(%arg0: i32) -> (i32, i32) {
    %c0_i32 = arith.constant 0 : i32
    %c0_i32_0 = arith.constant 0 : i32
    return %arg0, %c0_i32 : i32, i32
  }
  func.func @transform_3(%arg0: i32) -> (i32, i32) {
    %c0_i32 = arith.constant 0 : i32
    %c0_i32_0 = arith.constant 0 : i32
    %c0_i32_1 = arith.constant 0 : i32
    return %c0_i32, %c0_i32_0 : i32, i32
  }
  func.func @transform_4(%arg0: i32) -> (i32, i32) {
    %c0_i32 = arith.constant 0 : i32
    %c0_i32_0 = arith.constant 0 : i32
    %c0_i32_1 = arith.constant 0 : i32
    return %c0_i32, %c0_i32_0 : i32, i32
  }
  func.func @transform_5(%arg0: i32) -> (i32, i32) {
    %c0_i32 = arith.constant 0 : i32
    %c0_i32_0 = arith.constant 0 : i32
    %c0_i32_1 = arith.constant 0 : i32
    return %c0_i32, %c0_i32_0 : i32, i32
  }
  func.func @transform_6(%arg0: i32) -> (i32, i32) {
    %c0_i32 = arith.constant 0 : i32
    %c0_i32_0 = arith.constant 0 : i32
    %c0_i32_1 = arith.constant 0 : i32
    return %c0_i32, %c0_i32_0 : i32, i32
  }
  func.func @transform_7(%arg0: i32) -> (i32, i32) {
    %c0_i32 = arith.constant 0 : i32
    %c0_i32_0 = arith.constant 0 : i32
    %c0_i32_1 = arith.constant 0 : i32
    return %c0_i32, %c0_i32_0 : i32, i32
  }
  func.func @transform_8(%arg0: i32) -> (i32, i32) {
    %c0_i32 = arith.constant 0 : i32
    %c0_i32_0 = arith.constant 0 : i32
    return %arg0, %c0_i32 : i32, i32
  }
}

</mosaic_0001>

<llo_original>
// kernel: net_forward.1
$region0: #{net_forward.1}
  #allocation0 [shape = 'u32[]', space=smem, size = 0x4, offset = 0x4, fixed_abs, tag = 'smem constant byte address 0x4 - core index']
  #allocation1 [shape = 'u32[72,128]{1,0:T(1,128)}', space=vmem, size = 0x9000, scoped, tag = 'internal scratch']
  %s0 = inlined_call_operand.vmem [shape: f32[128,256], index: 0, kind: input, shape index: {}]
  %s1 = inlined_call_operand.vmem [shape: f32[128,256], index: 1, kind: input, shape index: {}]
  %s2 = inlined_call_operand.vmem [shape: s32[128,1], index: 2, kind: input, shape index: {}]
  %s3 = inlined_call_operand.hbm [shape: bf16[256,1024], index: 3, kind: input, shape index: {}]
  %s4 = inlined_call_operand.hbm [shape: bf16[256,1024], index: 4, kind: input, shape index: {}]
  %s5 = inlined_call_operand.vmem [shape: bf16[256,256], index: 5, kind: input, shape index: {}]
  %s6 = inlined_call_operand.vmem [shape: bf16[432,128], index: 6, kind: input, shape index: {}]
  %s7 = inlined_call_operand.vmem [shape: f32[8,640], index: 7, kind: input, shape index: {}]
  %s8 = inlined_call_operand.vmem [shape: f32[128,5], index: 8, kind: output, shape index: {}]
  %s9 = sld [smem:[#allocation0]]
  $region73: #{net_forward.1} parent=0
    _
  %s11 = ssub.s32 1, %s9
  %s12 = scalar_select 0, %s11, %s9
  $region1: #{net_forward.1} parent=0
    #allocation2 [shape = 'u8[524288]{0}', space=vmem, size = 0x80000, scoped, tag = 'input window, operand 3, single buffered']
    #allocation3 [shape = 's32[2]{0}', space=sflag, size = 0x8, scoped, tag = 'scoped memory for net_forward.1']
    #allocation4 [shape = 'u8[524288]{0}', space=vmem, size = 0x80000, scoped, tag = 'input window, operand 4, single buffered']
    #allocation5 [shape = 's32[1]{0}', space=sflag, size = 0x4, scoped, tag = 'scoped memory for net_forward.1']
    %13 = vsyncpa [#allocation3], 0
    %14 = vsyncpa [#allocation5], 0
    loop: start=0, step=1, limit=4
    $region2: #{net_forward.1} parent=1 // loop_pre_header
      _
    $region3: #{net_forward.1} parent=1 // loop_header
      %s16 = sphi 0, %s20
      %p17 = scmp.ge.s32.totalorder %s16, 4
      %s26 = sphi 0, %s28
      %s29 = sphi 0, %s26
      %s30 = sphi 0, %s29
      %s46 = sphi 0, %s30
      %s52 = sphi 0, %s54
      %s55 = sphi 0, %s52
      %s56 = sphi 0, %s55
      %s72 = sphi 0, %s56
      %s78 = sphi 0, %s80
      %s81 = sphi 0, %s78
      %s82 = sphi 0, %s81
      %s98 = sphi 0, %s82
      %s102 = sphi 0, %s102
      %s104 = sphi 0, %s102
      %s105 = sphi 0, %s104
      %s119 = sphi 0, %s105
      %s123 = sphi 0, %s123
      %s125 = sphi 0, %s123
      %s126 = sphi 0, %s125
      %s140 = sphi 0, %s126
      %s144 = sphi 0, %s144
      %s146 = sphi 0, %s144
      %s147 = sphi 0, %s146
      %s161 = sphi 0, %s147
      %s165 = sphi 0, %s165
      %s167 = sphi 0, %s165
      %s168 = sphi 0, %s167
      %s182 = sphi 0, %s168
      %s186 = sphi 0, %s186
      %s188 = sphi 0, %s186
      %s189 = sphi 0, %s188
      %s203 = sphi 0, %s189
      %s209 = sphi 0, %s211
      %s212 = sphi 0, %s209
      %s213 = sphi 0, %s212
      %s229 = sphi 0, %s213
    $region4: #{net_forward.1} parent=1 // loop_header_branch
      %19 = sbr.rel (%p17) target = $region8
    $region5: #{net_forward.1} parent=1 // loop_body
      %s21 = ssub.s32 %s16, 1
      %s22 = ssub.s32 %s16, 2
      %s23 = sadd.s32 %s16, 1
      %s24 = ssub.s32 %s16, %s23
      %p25 = scmp.eq.s32.totalorder %s24, 0
      %s27 = sadd.s32 %s26, 1
      %s28 = scalar_select %p25, %s26, %s27
      %p31 = pneg %p25
      %p32 = scmp.eq.s32.totalorder %s16, 1
      %p33 = por %p31, %p32
      %p34 = scmp.ne.s32.totalorder %s26, %s29
      %p35 = scmp.eq.s32.totalorder %s16, 0
      %p36 = por %p34, %p35
      %p37 = scmp.ne.s32.totalorder %s26, %s29
      %p38 = scmp.eq.s32.totalorder %s21, 1
      %p39 = por %p37, %p38
      %p40 = scmp.ne.s32.totalorder %s29, %s30
      %p41 = scmp.eq.s32.totalorder %s21, 0
      %p42 = por %p40, %p41
      %p43 = scmp.ne.s32.totalorder %s29, %s30
      %p44 = scmp.eq.s32.totalorder %s22, 1
      %p45 = por %p43, %p44
      %p47 = scmp.ne.s32.totalorder %s30, %s46
      %p48 = scmp.eq.s32.totalorder %s22, 0
      %p49 = por %p47, %p48
      %s50 = ssub.s32 %s16, %s23
      %p51 = scmp.eq.s32.totalorder %s50, 0
      %s53 = sadd.s32 %s52, 1
      %s54 = scalar_select %p51, %s52, %s53
      %p57 = pneg %p51
      %p58 = scmp.eq.s32.totalorder %s16, 1
      %p59 = por %p57, %p58
      %p60 = scmp.ne.s32.totalorder %s52, %s55
      %p61 = scmp.eq.s32.totalorder %s16, 0
      %p62 = por %p60, %p61
      %p63 = scmp.ne.s32.totalorder %s52, %s55
      %p64 = scmp.eq.s32.totalorder %s21, 1
      %p65 = por %p63, %p64
      %p66 = scmp.ne.s32.totalorder %s55, %s56
      %p67 = scmp.eq.s32.totalorder %s21, 0
      %p68 = por %p66, %p67
      %p69 = scmp.ne.s32.totalorder %s55, %s56
      %p70 = scmp.eq.s32.totalorder %s22, 1
      %p71 = por %p69, %p70
      %p73 = scmp.ne.s32.totalorder %s56, %s72
      %p74 = scmp.eq.s32.totalorder %s22, 0
      %p75 = por %p73, %p74
      %s76 = ssub.s32 %s16, %s23
      %p77 = scmp.eq.s32.totalorder %s76, 0
      %s79 = sadd.s32 %s78, 1
      %s80 = scalar_select %p77, %s78, %s79
      %p83 = pneg %p77
      %p84 = scmp.eq.s32.totalorder %s16, 1
      %p85 = por %p83, %p84
      %p86 = scmp.ne.s32.totalorder %s78, %s81
      %p87 = scmp.eq.s32.totalorder %s16, 0
      %p88 = por %p86, %p87
      %p89 = scmp.ne.s32.totalorder %s78, %s81
      %p90 = scmp.eq.s32.totalorder %s21, 1
      %p91 = por %p89, %p90
      %p92 = scmp.ne.s32.totalorder %s81, %s82
      %p93 = scmp.eq.s32.totalorder %s21, 0
      %p94 = por %p92, %p93
      %p95 = scmp.ne.s32.totalorder %s81, %s82
      %p96 = scmp.eq.s32.totalorder %s22, 1
      %p97 = por %p95, %p96
      %p99 = scmp.ne.s32.totalorder %s82, %s98
      %p100 = scmp.eq.s32.totalorder %s22, 0
      %p101 = por %p99, %p100
      %s103 = sadd.s32 %s102, 1
      %p106 = scmp.eq.s32.totalorder %s16, 1
      %p107 = scmp.ne.s32.totalorder %s102, %s104
      %p108 = scmp.eq.s32.totalorder %s16, 0
      %p109 = por %p107, %p108
      %p110 = scmp.ne.s32.totalorder %s102, %s104
      %p111 = scmp.eq.s32.totalorder %s21, 1
      %p112 = por %p110, %p111
      %p113 = scmp.ne.s32.totalorder %s104, %s105
      %p114 = scmp.eq.s32.totalorder %s21, 0
      %p115 = por %p113, %p114
      %p116 = scmp.ne.s32.totalorder %s104, %s105
      %p117 = scmp.eq.s32.totalorder %s22, 1
      %p118 = por %p116, %p117
      %p120 = scmp.ne.s32.totalorder %s105, %s119
      %p121 = scmp.eq.s32.totalorder %s22, 0
      %p122 = por %p120, %p121
      %s124 = sadd.s32 %s123, 1
      %p127 = scmp.eq.s32.totalorder %s16, 1
      %p128 = scmp.ne.s32.totalorder %s123, %s125
      %p129 = scmp.eq.s32.totalorder %s16, 0
      %p130 = por %p128, %p129
      %p131 = scmp.ne.s32.totalorder %s123, %s125
      %p132 = scmp.eq.s32.totalorder %s21, 1
      %p133 = por %p131, %p132
      %p134 = scmp.ne.s32.totalorder %s125, %s126
      %p135 = scmp.eq.s32.totalorder %s21, 0
      %p136 = por %p134, %p135
      %p137 = scmp.ne.s32.totalorder %s125, %s126
      %p138 = scmp.eq.s32.totalorder %s22, 1
      %p139 = por %p137, %p138
      %p141 = scmp.ne.s32.totalorder %s126, %s140
      %p142 = scmp.eq.s32.totalorder %s22, 0
      %p143 = por %p141, %p142
      %s145 = sadd.s32 %s144, 1
      %p148 = scmp.eq.s32.totalorder %s16, 1
      %p149 = scmp.ne.s32.totalorder %s144, %s146
      %p150 = scmp.eq.s32.totalorder %s16, 0
      %p151 = por %p149, %p150
      %p152 = scmp.ne.s32.totalorder %s144, %s146
      %p153 = scmp.eq.s32.totalorder %s21, 1
      %p154 = por %p152, %p153
      %p155 = scmp.ne.s32.totalorder %s146, %s147
      %p156 = scmp.eq.s32.totalorder %s21, 0
      %p157 = por %p155, %p156
      %p158 = scmp.ne.s32.totalorder %s146, %s147
      %p159 = scmp.eq.s32.totalorder %s22, 1
      %p160 = por %p158, %p159
      %p162 = scmp.ne.s32.totalorder %s147, %s161
      %p163 = scmp.eq.s32.totalorder %s22, 0
      %p164 = por %p162, %p163
      %s166 = sadd.s32 %s165, 1
      %p169 = scmp.eq.s32.totalorder %s16, 1
      %p170 = scmp.ne.s32.totalorder %s165, %s167
      %p171 = scmp.eq.s32.totalorder %s16, 0
      %p172 = por %p170, %p171
      %p173 = scmp.ne.s32.totalorder %s165, %s167
      %p174 = scmp.eq.s32.totalorder %s21, 1
      %p175 = por %p173, %p174
      %p176 = scmp.ne.s32.totalorder %s167, %s168
      %p177 = scmp.eq.s32.totalorder %s21, 0
      %p178 = por %p176, %p177
      %p179 = scmp.ne.s32.totalorder %s167, %s168
      %p180 = scmp.eq.s32.totalorder %s22, 1
      %p181 = por %p179, %p180
      %p183 = scmp.ne.s32.totalorder %s168, %s182
      %p184 = scmp.eq.s32.totalorder %s22, 0
      %p185 = por %p183, %p184
      %s187 = sadd.s32 %s186, 1
      %p190 = scmp.eq.s32.totalorder %s16, 1
      %p191 = scmp.ne.s32.totalorder %s186, %s188
      %p192 = scmp.eq.s32.totalorder %s16, 0
      %p193 = por %p191, %p192
      %p194 = scmp.ne.s32.totalorder %s186, %s188
      %p195 = scmp.eq.s32.totalorder %s21, 1
      %p196 = por %p194, %p195
      %p197 = scmp.ne.s32.totalorder %s188, %s189
      %p198 = scmp.eq.s32.totalorder %s21, 0
      %p199 = por %p197, %p198
      %p200 = scmp.ne.s32.totalorder %s188, %s189
      %p201 = scmp.eq.s32.totalorder %s22, 1
      %p202 = por %p200, %p201
      %p204 = scmp.ne.s32.totalorder %s189, %s203
      %p205 = scmp.eq.s32.totalorder %s22, 0
      %p206 = por %p204, %p205
      %s207 = ssub.s32 %s16, %s23
      %p208 = scmp.eq.s32.totalorder %s207, 0
      %s210 = sadd.s32 %s209, 1
      %s211 = scalar_select %p208, %s209, %s210
      %p214 = pneg %p208
      %p215 = scmp.eq.s32.totalorder %s16, 1
      %p216 = por %p214, %p215
      %p217 = scmp.ne.s32.totalorder %s209, %s212
      %p218 = scmp.eq.s32.totalorder %s16, 0
      %p219 = por %p217, %p218
      %p220 = scmp.ne.s32.totalorder %s209, %s212
      %p221 = scmp.eq.s32.totalorder %s21, 1
      %p222 = por %p220, %p221
      %p223 = scmp.ne.s32.totalorder %s212, %s213
      %p224 = scmp.eq.s32.totalorder %s21, 0
      %p225 = por %p223, %p224
      %p226 = scmp.ne.s32.totalorder %s212, %s213
      %p227 = scmp.eq.s32.totalorder %s22, 1
      %p228 = por %p226, %p227
      %p230 = scmp.ne.s32.totalorder %s213, %s229
      %p231 = scmp.eq.s32.totalorder %s22, 0
      %p232 = por %p230, %p231
      %p233 = scmp.le.s32.totalorder 1, %s16
      %p234 = scmp.lt.s32.totalorder %s16, 3
      %p235 = pnand %p233, %p234
      %p236 = pneg %p235
      // Predicated region
      $region9: #{net_forward.1} parent=5 // pred_check
        _
      $region10: #{net_forward.1} parent=5 // pred_check_branch
        %238 = sbr.rel (%p235) target = $region12
      $region11: #{net_forward.1} parent=5 // pred_region
        %s239 = ssub.s32 %s16, 1
        // Predicated region
        $region13: #{net_forward.1} parent=11 // pred_check
          %p240 = pneg %p115
        $region14: #{net_forward.1} parent=11 // pred_check_branch
          %242 = sbr.rel (%p240) target = $region16
        $region15: #{net_forward.1} parent=11 // pred_region
          %244 = vsyncadd [#allocation3], 0
          %s245 = sshll.u32 %s3, 4
          %s246 = int_to_ptr.hbm [resolvable:$true] %s245
          %s247 = sshll.u32 [#allocation2], 4
          %s248 = int_to_ptr.vmem [resolvable:$true] %s247
          %253 = dma.hbm_to_vmem [thread:$0]  %s246, 16384, %s248, [#allocation3], 512, 512, 32
        $region16: #{net_forward.1} parent=11 // pred_fallthru
          _
        // Predicated region
        $region17: #{net_forward.1} parent=11 // pred_check
          %p254 = pneg %p136
        $region18: #{net_forward.1} parent=11 // pred_check_branch
          %256 = sbr.rel (%p254) target = $region20
        $region19: #{net_forward.1} parent=11 // pred_region
          %258 = vsyncadd [#allocation5], 0
          %s259 = sshll.u32 %s4, 4
          %s260 = int_to_ptr.hbm [resolvable:$true] %s259
          %s261 = sshll.u32 [#allocation4], 4
          %s262 = int_to_ptr.vmem [resolvable:$true] %s261
          %267 = dma.hbm_to_vmem [thread:$0]  %s260, 16384, %s262, [#allocation5], 512, 512, 32
        $region20: #{net_forward.1} parent=11 // pred_fallthru
          _
        // Predicated region
        $region21: #{net_forward.1} parent=11 // pred_check
          %p268 = pneg %p157
        $region22: #{net_forward.1} parent=11 // pred_check_branch
          %270 = sbr.rel (%p268) target = $region24
        $region23: #{net_forward.1} parent=11 // pred_region
          _
        $region24: #{net_forward.1} parent=11 // pred_fallthru
          _
        // Predicated region
        $region25: #{net_forward.1} parent=11 // pred_check
          %p271 = pneg %p178
        $region26: #{net_forward.1} parent=11 // pred_check_branch
          %273 = sbr.rel (%p271) target = $region28
        $region27: #{net_forward.1} parent=11 // pred_region
          _
        $region28: #{net_forward.1} parent=11 // pred_fallthru
          _
        // Predicated region
        $region29: #{net_forward.1} parent=11 // pred_check
          %p274 = pneg %p199
        $region30: #{net_forward.1} parent=11 // pred_check_branch
          %276 = sbr.rel (%p274) target = $region32
        $region31: #{net_forward.1} parent=11 // pred_region
          _
        $region32: #{net_forward.1} parent=11 // pred_fallthru
          _
      $region12: #{net_forward.1} parent=5 // pred_fallthru
        _
      %p277 = scmp.lt.s32.totalorder %s16, 2
      // Predicated region
      $region33: #{net_forward.1} parent=5 // pred_check
        %p278 = pneg %p277
      $region34: #{net_forward.1} parent=5 // pred_check_branch
        %280 = sbr.rel (%p278) target = $region36
      $region35: #{net_forward.1} parent=5 // pred_region
        // Predicated region
        $region37: #{net_forward.1} parent=35 // pred_check
          %p281 = pneg %p36
        $region38: #{net_forward.1} parent=35 // pred_check_branch
          %283 = sbr.rel (%p281) target = $region40
        $region39: #{net_forward.1} parent=35 // pred_region
          %s284 = smul.u32 8, %s16
          %p285 = scmp.lt.s32.totalorder %s284, 15
          %s286 = scalar_select %p285, %s284, 15
          %s287 = smul.addr %s286, 2
          %s288 = smul.addr %s287, 8
          %s289 = scalar_lea.vmem %s0, %s288
          %s290 = smul.u32 8, %s16
        $region40: #{net_forward.1} parent=35 // pred_fallthru
          _
        // Predicated region
        $region41: #{net_forward.1} parent=35 // pred_check
          %p291 = pneg %p62
        $region42: #{net_forward.1} parent=35 // pred_check_branch
          %293 = sbr.rel (%p291) target = $region44
        $region43: #{net_forward.1} parent=35 // pred_region
          %s294 = smul.u32 8, %s16
          %p295 = scmp.lt.s32.totalorder %s294, 15
          %s296 = scalar_select %p295, %s294, 15
          %s297 = smul.addr %s296, 2
          %s298 = smul.addr %s297, 8
          %s299 = scalar_lea.vmem %s1, %s298
          %s300 = smul.u32 8, %s16
        $region44: #{net_forward.1} parent=35 // pred_fallthru
          _
        // Predicated region
        $region45: #{net_forward.1} parent=35 // pred_check
          %p301 = pneg %p88
        $region46: #{net_forward.1} parent=35 // pred_check_branch
          %303 = sbr.rel (%p301) target = $region48
        $region47: #{net_forward.1} parent=35 // pred_region
          %s304 = smul.u32 8, %s16
          %p305 = scmp.lt.s32.totalorder %s304, 15
          %s306 = scalar_select %p305, %s304, 15
          %s307 = smul.addr %s306, 8
          %s308 = scalar_lea.vmem %s2, %s307
          %s309 = smul.u32 8, %s16
        $region48: #{net_forward.1} parent=35 // pred_fallthru
          _
      $region36: #{net_forward.1} parent=5 // pred_fallthru
        _
      %p310 = scmp.le.s32.totalorder 1, %s16
      %p311 = scmp.lt.s32.totalorder %s16, 3
      %p312 = pnand %p310, %p311
      %p313 = pneg %p312
      // Predicated region
      $region49: #{net_forward.1} parent=5 // pred_check
        _
      $region50: #{net_forward.1} parent=5 // pred_check_branch
        %315 = sbr.rel (%p312) target = $region52
      $region51: #{net_forward.1} parent=5 // pred_region
        %s316 = ssub.s32 %s16, 1
        // Predicated region
        $region53: #{net_forward.1} parent=51 // pred_check
          %p317 = pneg %p115
        $region54: #{net_forward.1} parent=51 // pred_check_branch
          %319 = sbr.rel (%p317) target = $region56
        $region55: #{net_forward.1} parent=51 // pred_region
          %321 = dma.done [#allocation3], 16384
        $region56: #{net_forward.1} parent=51 // pred_fallthru
          _
        // Predicated region
        $region57: #{net_forward.1} parent=51 // pred_check
          %p322 = pneg %p136
        $region58: #{net_forward.1} parent=51 // pred_check_branch
          %324 = sbr.rel (%p322) target = $region60
        $region59: #{net_forward.1} parent=51 // pred_region
          %326 = dma.done [#allocation5], 16384
        $region60: #{net_forward.1} parent=51 // pred_fallthru
          _
        %s327 = smul.u32 8, %s21
        %p328 = scmp.lt.s32.totalorder %s327, 15
        %s329 = scalar_select %p328, %s327, 15
        %s330 = smul.addr %s329, 2
        %s331 = smul.addr %s330, 8
        %s332 = scalar_lea.vmem %s0, %s331
        %p333 = pneg %p42
        %p334 = pneg %p39
        %s335 = smul.u32 8, %s21
        %p336 = scmp.lt.s32.totalorder %s335, 15
        %s337 = scalar_select %p336, %s335, 15
        %s338 = smul.addr %s337, 2
        %s339 = smul.addr %s338, 8
        %s340 = scalar_lea.vmem %s1, %s339
        %p341 = pneg %p68
        %p342 = pneg %p65
        %s343 = smul.u32 8, %s21
        %p344 = scmp.lt.s32.totalorder %s343, 15
        %s345 = scalar_select %p344, %s343, 15
        %s346 = smul.addr %s345, 8
        %s347 = scalar_lea.vmem %s2, %s346
        %p348 = pneg %p94
        %p349 = pneg %p91
        %p350 = pneg %p115
        %p351 = pneg %p112
        %p352 = pneg %p136
        %p353 = pneg %p133
        %p354 = pneg %p157
        %p355 = pneg %p154
        %p356 = pneg %p178
        %p357 = pneg %p175
        %p358 = pneg %p199
        %p359 = pneg %p196
        %p360 = pneg %p225
        %p361 = pneg %p222
        %s362 = smul.u32 8, %s21
        %p363 = scmp.lt.s32.totalorder %s362, 15
        %s364 = scalar_select %p363, %s362, 15
        %s365 = smul.addr %s364, 8
        %s366 = scalar_lea.vmem %s8, %s365
        %s367 = smul.u32 8, %s21
        %p368 = scmp.lt.s32.totalorder %s367, 15
        %s369 = scalar_select %p368, %s367, 15
        %s370 = smul.addr %s369, 2
        %s371 = smul.addr %s370, 8
        %s372 = scalar_lea.vmem %s0, %s371
        %s373 = smul.u32 8, %s21
        %s374 = smul.u32 8, %s21
        %p375 = scmp.lt.s32.totalorder %s374, 15
        %s376 = scalar_select %p375, %s374, 15
        %s377 = smul.addr %s376, 2
        %s378 = smul.addr %s377, 8
        %s379 = scalar_lea.vmem %s1, %s378
        %s380 = smul.u32 8, %s21
        %s381 = smul.u32 8, %s21
        %p382 = scmp.lt.s32.totalorder %s381, 15
        %s383 = scalar_select %p382, %s381, 15
        %s384 = smul.addr %s383, 8
        %s385 = scalar_lea.vmem %s2, %s384
        %s386 = smul.u32 8, %s21
        %s387 = smul.u32 8, %s21
        %p388 = scmp.lt.s32.totalorder %s387, 15
        %s389 = scalar_select %p388, %s387, 15
        %s390 = smul.addr %s389, 8
        %s391 = scalar_lea.vmem %s8, %s390
        %s392 = smul.u32 8, %s21
        %v393 = vld [vmem:[%s372] sm:$0xff]
        %v394 = vld [vmem:[%s372 + $0x8] sm:$0xff]
        %v395 = vld [vmem:[%s372 + $0x10] sm:$0xff]
        %v396 = vld [vmem:[%s372 + $0x18] sm:$0xff]
        %v397 = vld [vmem:[%s372 + $0x20] sm:$0xff]
        %v398 = vld [vmem:[%s372 + $0x28] sm:$0xff]
        %v399 = vld [vmem:[%s372 + $0x30] sm:$0xff]
        %v400 = vld [vmem:[%s372 + $0x38] sm:$0xff]
        %v401 = vld [vmem:[%s372 + $0x40] sm:$0xff]
        %v402 = vld [vmem:[%s372 + $0x48] sm:$0xff]
        %v403 = vld [vmem:[%s372 + $0x50] sm:$0xff]
        %v404 = vld [vmem:[%s372 + $0x58] sm:$0xff]
        %v405 = vld [vmem:[%s372 + $0x60] sm:$0xff]
        %v406 = vld [vmem:[%s372 + $0x68] sm:$0xff]
        %v407 = vld [vmem:[%s372 + $0x70] sm:$0xff]
        %v408 = vld [vmem:[%s372 + $0x78] sm:$0xff]
        %v409 = vpack.c.bf16 %v395, %v393
        %v410 = vpack.c.bf16 %v396, %v394
        %v411 = vpack.c.bf16 %v399, %v397
        %v412 = vpack.c.bf16 %v400, %v398
        %v413 = vpack.c.bf16 %v403, %v401
        %v414 = vpack.c.bf16 %v404, %v402
        %v415 = vpack.c.bf16 %v407, %v405
        %v416 = vpack.c.bf16 %v408, %v406
        %v417 = vld [vmem:[#allocation2] sm:$0xff]
        %v418 = vld [vmem:[#allocation2 + $0x8] sm:$0xff]
        %v419 = vld [vmem:[#allocation2 + $0x10] sm:$0xff]
        %v420 = vld [vmem:[#allocation2 + $0x18] sm:$0xff]
        %v421 = vld [vmem:[#allocation2 + $0x20] sm:$0xff]
        %v422 = vld [vmem:[#allocation2 + $0x28] sm:$0xff]
        %v423 = vld [vmem:[#allocation2 + $0x30] sm:$0xff]
        %v424 = vld [vmem:[#allocation2 + $0x38] sm:$0xff]
        %v425 = vld [vmem:[#allocation2 + $0x40] sm:$0xff]
        %v426 = vld [vmem:[#allocation2 + $0x48] sm:$0xff]
        %v427 = vld [vmem:[#allocation2 + $0x50] sm:$0xff]
        %v428 = vld [vmem:[#allocation2 + $0x58] sm:$0xff]
        %v429 = vld [vmem:[#allocation2 + $0x60] sm:$0xff]
        %v430 = vld [vmem:[#allocation2 + $0x68] sm:$0xff]
        %v431 = vld [vmem:[#allocation2 + $0x70] sm:$0xff]
        %v432 = vld [vmem:[#allocation2 + $0x78] sm:$0xff]
        %v433 = vld [vmem:[#allocation2 + $0x80] sm:$0xff]
        %v434 = vld [vmem:[#allocation2 + $0x88] sm:$0xff]
        %v435 = vld [vmem:[#allocation2 + $0x90] sm:$0xff]
        %v436 = vld [vmem:[#allocation2 + $0x98] sm:$0xff]
        %v437 = vld [vmem:[#allocation2 + $0xa0] sm:$0xff]
        %v438 = vld [vmem:[#allocation2 + $0xa8] sm:$0xff]
        %v439 = vld [vmem:[#allocation2 + $0xb0] sm:$0xff]
        %v440 = vld [vmem:[#allocation2 + $0xb8] sm:$0xff]
        %v441 = vld [vmem:[#allocation2 + $0xc0] sm:$0xff]
        %v442 = vld [vmem:[#allocation2 + $0xc8] sm:$0xff]
        %v443 = vld [vmem:[#allocation2 + $0xd0] sm:$0xff]
        %v444 = vld [vmem:[#allocation2 + $0xd8] sm:$0xff]
        %v445 = vld [vmem:[#allocation2 + $0xe0] sm:$0xff]
        %v446 = vld [vmem:[#allocation2 + $0xe8] sm:$0xff]
        %v447 = vld [vmem:[#allocation2 + $0xf0] sm:$0xff]
        %v448 = vld [vmem:[#allocation2 + $0xf8] sm:$0xff]
        %v449 = vld [vmem:[#allocation2 + $0x100] sm:$0xff]
        %v450 = vld [vmem:[#allocation2 + $0x108] sm:$0xff]
        %v451 = vld [vmem:[#allocation2 + $0x110] sm:$0xff]
        %v452 = vld [vmem:[#allocation2 + $0x118] sm:$0xff]
        %v453 = vld [vmem:[#allocation2 + $0x120] sm:$0xff]
        %v454 = vld [vmem:[#allocation2 + $0x128] sm:$0xff]
        %v455 = vld [vmem:[#allocation2 + $0x130] sm:$0xff]
        %v456 = vld [vmem:[#allocation2 + $0x138] sm:$0xff]
        %v457 = vld [vmem:[#allocation2 + $0x140] sm:$0xff]
        %v458 = vld [vmem:[#allocation2 + $0x148] sm:$0xff]
        %v459 = vld [vmem:[#allocation2 + $0x150] sm:$0xff]
        %v460 = vld [vmem:[#allocation2 + $0x158] sm:$0xff]
        %v461 = vld [vmem:[#allocation2 + $0x160] sm:$0xff]
        %v462 = vld [vmem:[#allocation2 + $0x168] sm:$0xff]
        %v463 = vld [vmem:[#allocation2 + $0x170] sm:$0xff]
        %v464 = vld [vmem:[#allocation2 + $0x178] sm:$0xff]
        %v465 = vld [vmem:[#allocation2 + $0x180] sm:$0xff]
        %v466 = vld [vmem:[#allocation2 + $0x188] sm:$0xff]
        %v467 = vld [vmem:[#allocation2 + $0x190] sm:$0xff]
        %v468 = vld [vmem:[#allocation2 + $0x198] sm:$0xff]
        %v469 = vld [vmem:[#allocation2 + $0x1a0] sm:$0xff]
        %v470 = vld [vmem:[#allocation2 + $0x1a8] sm:$0xff]
        %v471 = vld [vmem:[#allocation2 + $0x1b0] sm:$0xff]
        %v472 = vld [vmem:[#allocation2 + $0x1b8] sm:$0xff]
        %v473 = vld [vmem:[#allocation2 + $0x1c0] sm:$0xff]
        %v474 = vld [vmem:[#allocation2 + $0x1c8] sm:$0xff]
        %v475 = vld [vmem:[#allocation2 + $0x1d0] sm:$0xff]
        %v476 = vld [vmem:[#allocation2 + $0x1d8] sm:$0xff]
        %v477 = vld [vmem:[#allocation2 + $0x1e0] sm:$0xff]
        %v478 = vld [vmem:[#allocation2 + $0x1e8] sm:$0xff]
        %v479 = vld [vmem:[#allocation2 + $0x1f0] sm:$0xff]
        %v480 = vld [vmem:[#allocation2 + $0x1f8] sm:$0xff]
        %v481 = vld [vmem:[#allocation2 + $0x200] sm:$0xff]
        %v482 = vld [vmem:[#allocation2 + $0x208] sm:$0xff]
        %v483 = vld [vmem:[#allocation2 + $0x210] sm:$0xff]
        %v484 = vld [vmem:[#allocation2 + $0x218] sm:$0xff]
        %v485 = vld [vmem:[#allocation2 + $0x220] sm:$0xff]
        %v486 = vld [vmem:[#allocation2 + $0x228] sm:$0xff]
        %v487 = vld [vmem:[#allocation2 + $0x230] sm:$0xff]
        %v488 = vld [vmem:[#allocation2 + $0x238] sm:$0xff]
        %v489 = vld [vmem:[#allocation2 + $0x240] sm:$0xff]
        %v490 = vld [vmem:[#allocation2 + $0x248] sm:$0xff]
        %v491 = vld [vmem:[#allocation2 + $0x250] sm:$0xff]
        %v492 = vld [vmem:[#allocation2 + $0x258] sm:$0xff]
        %v493 = vld [vmem:[#allocation2 + $0x260] sm:$0xff]
        %v494 = vld [vmem:[#allocation2 + $0x268] sm:$0xff]
        %v495 = vld [vmem:[#allocation2 + $0x270] sm:$0xff]
        %v496 = vld [vmem:[#allocation2 + $0x278] sm:$0xff]
        %v497 = vld [vmem:[#allocation2 + $0x280] sm:$0xff]
        %v498 = vld [vmem:[#allocation2 + $0x288] sm:$0xff]
        %v499 = vld [vmem:[#allocation2 + $0x290] sm:$0xff]
        %v500 = vld [vmem:[#allocation2 + $0x298] sm:$0xff]
        %v501 = vld [vmem:[#allocation2 + $0x2a0] sm:$0xff]
        %v502 = vld [vmem:[#allocation2 + $0x2a8] sm:$0xff]
        %v503 = vld [vmem:[#allocation2 + $0x2b0] sm:$0xff]
        %v504 = vld [vmem:[#allocation2 + $0x2b8] sm:$0xff]
        %v505 = vld [vmem:[#allocation2 + $0x2c0] sm:$0xff]
        %v506 = vld [vmem:[#allocation2 + $0x2c8] sm:$0xff]
        %v507 = vld [vmem:[#allocation2 + $0x2d0] sm:$0xff]
        %v508 = vld [vmem:[#allocation2 + $0x2d8] sm:$0xff]
        %v509 = vld [vmem:[#allocation2 + $0x2e0] sm:$0xff]
        %v510 = vld [vmem:[#allocation2 + $0x2e8] sm:$0xff]
        %v511 = vld [vmem:[#allocation2 + $0x2f0] sm:$0xff]
        %v512 = vld [vmem:[#allocation2 + $0x2f8] sm:$0xff]
        %v513 = vld [vmem:[#allocation2 + $0x300] sm:$0xff]
        %v514 = vld [vmem:[#allocation2 + $0x308] sm:$0xff]
        %v515 = vld [vmem:[#allocation2 + $0x310] sm:$0xff]
        %v516 = vld [vmem:[#allocation2 + $0x318] sm:$0xff]
        %v517 = vld [vmem:[#allocation2 + $0x320] sm:$0xff]
        %v518 = vld [vmem:[#allocation2 + $0x328] sm:$0xff]
        %v519 = vld [vmem:[#allocation2 + $0x330] sm:$0xff]
        %v520 = vld [vmem:[#allocation2 + $0x338] sm:$0xff]
        %v521 = vld [vmem:[#allocation2 + $0x340] sm:$0xff]
        %v522 = vld [vmem:[#allocation2 + $0x348] sm:$0xff]
        %v523 = vld [vmem:[#allocation2 + $0x350] sm:$0xff]
        %v524 = vld [vmem:[#allocation2 + $0x358] sm:$0xff]
        %v525 = vld [vmem:[#allocation2 + $0x360] sm:$0xff]
        %v526 = vld [vmem:[#allocation2 + $0x368] sm:$0xff]
        %v527 = vld [vmem:[#allocation2 + $0x370] sm:$0xff]
        %v528 = vld [vmem:[#allocation2 + $0x378] sm:$0xff]
        %v529 = vld [vmem:[#allocation2 + $0x380] sm:$0xff]
        %v530 = vld [vmem:[#allocation2 + $0x388] sm:$0xff]
        %v531 = vld [vmem:[#allocation2 + $0x390] sm:$0xff]
        %v532 = vld [vmem:[#allocation2 + $0x398] sm:$0xff]
        %v533 = vld [vmem:[#allocation2 + $0x3a0] sm:$0xff]
        %v534 = vld [vmem:[#allocation2 + $0x3a8] sm:$0xff]
        %v535 = vld [vmem:[#allocation2 + $0x3b0] sm:$0xff]
        %v536 = vld [vmem:[#allocation2 + $0x3b8] sm:$0xff]
        %v537 = vld [vmem:[#allocation2 + $0x3c0] sm:$0xff]
        %v538 = vld [vmem:[#allocation2 + $0x3c8] sm:$0xff]
        %v539 = vld [vmem:[#allocation2 + $0x3d0] sm:$0xff]
        %v540 = vld [vmem:[#allocation2 + $0x3d8] sm:$0xff]
        %v541 = vld [vmem:[#allocation2 + $0x3e0] sm:$0xff]
        %v542 = vld [vmem:[#allocation2 + $0x3e8] sm:$0xff]
        %v543 = vld [vmem:[#allocation2 + $0x3f0] sm:$0xff]
        %v544 = vld [vmem:[#allocation2 + $0x3f8] sm:$0xff]
        %v673 = vunpack.c.l.b16 %v417
        %v674 = vunpack.c.h.b16 %v417
        %v675 = vunpack.c.l.b16 %v418
        %v676 = vunpack.c.h.b16 %v418
        %v677 = vunpack.c.l.b16 %v419
        %v678 = vunpack.c.h.b16 %v419
        %v679 = vunpack.c.l.b16 %v420
        %v680 = vunpack.c.h.b16 %v420
        %v681 = vunpack.c.l.b16 %v421
        %v682 = vunpack.c.h.b16 %v421
        %v683 = vunpack.c.l.b16 %v422
        %v684 = vunpack.c.h.b16 %v422
        %v685 = vunpack.c.l.b16 %v423
        %v686 = vunpack.c.h.b16 %v423
        %v687 = vunpack.c.l.b16 %v424
        %v688 = vunpack.c.h.b16 %v424
        %v689 = vunpack.c.l.b16 %v425
        %v690 = vunpack.c.h.b16 %v425
        %v691 = vunpack.c.l.b16 %v426
        %v692 = vunpack.c.h.b16 %v426
        %v693 = vunpack.c.l.b16 %v427
        %v694 = vunpack.c.h.b16 %v427
        %v695 = vunpack.c.l.b16 %v428
        %v696 = vunpack.c.h.b16 %v428
        %v697 = vunpack.c.l.b16 %v429
        %v698 = vunpack.c.h.b16 %v429
        %v699 = vunpack.c.l.b16 %v430
        %v700 = vunpack.c.h.b16 %v430
        %v701 = vunpack.c.l.b16 %v431
        %v702 = vunpack.c.h.b16 %v431
        %v703 = vunpack.c.l.b16 %v432
        %v704 = vunpack.c.h.b16 %v432
        %v705 = vunpack.c.l.b16 %v433
        %v706 = vunpack.c.h.b16 %v433
        %v707 = vunpack.c.l.b16 %v434
        %v708 = vunpack.c.h.b16 %v434
        %v709 = vunpack.c.l.b16 %v435
        %v710 = vunpack.c.h.b16 %v435
        %v711 = vunpack.c.l.b16 %v436
        %v712 = vunpack.c.h.b16 %v436
        %v713 = vunpack.c.l.b16 %v437
        %v714 = vunpack.c.h.b16 %v437
        %v715 = vunpack.c.l.b16 %v438
        %v716 = vunpack.c.h.b16 %v438
        %v717 = vunpack.c.l.b16 %v439
        %v718 = vunpack.c.h.b16 %v439
        %v719 = vunpack.c.l.b16 %v440
        %v720 = vunpack.c.h.b16 %v440
        %v721 = vunpack.c.l.b16 %v441
        %v722 = vunpack.c.h.b16 %v441
        %v723 = vunpack.c.l.b16 %v442
        %v724 = vunpack.c.h.b16 %v442
        %v725 = vunpack.c.l.b16 %v443
        %v726 = vunpack.c.h.b16 %v443
        %v727 = vunpack.c.l.b16 %v444
        %v728 = vunpack.c.h.b16 %v444
        %v729 = vunpack.c.l.b16 %v445
        %v730 = vunpack.c.h.b16 %v445
        %v731 = vunpack.c.l.b16 %v446
        %v732 = vunpack.c.h.b16 %v446
        %v733 = vunpack.c.l.b16 %v447
        %v734 = vunpack.c.h.b16 %v447
        %v735 = vunpack.c.l.b16 %v448
        %v736 = vunpack.c.h.b16 %v448
        %v737 = vunpack.c.l.b16 %v449
        %v738 = vunpack.c.h.b16 %v449
        %v739 = vunpack.c.l.b16 %v450
        %v740 = vunpack.c.h.b16 %v450
        %v741 = vunpack.c.l.b16 %v451
        %v742 = vunpack.c.h.b16 %v451
        %v743 = vunpack.c.l.b16 %v452
        %v744 = vunpack.c.h.b16 %v452
        %v745 = vunpack.c.l.b16 %v453
        %v746 = vunpack.c.h.b16 %v453
        %v747 = vunpack.c.l.b16 %v454
        %v748 = vunpack.c.h.b16 %v454
        %v749 = vunpack.c.l.b16 %v455
        %v750 = vunpack.c.h.b16 %v455
        %v751 = vunpack.c.l.b16 %v456
        %v752 = vunpack.c.h.b16 %v456
        %v753 = vunpack.c.l.b16 %v457
        %v754 = vunpack.c.h.b16 %v457
        %v755 = vunpack.c.l.b16 %v458
        %v756 = vunpack.c.h.b16 %v458
        %v757 = vunpack.c.l.b16 %v459
        %v758 = vunpack.c.h.b16 %v459
        %v759 = vunpack.c.l.b16 %v460
        %v760 = vunpack.c.h.b16 %v460
        %v761 = vunpack.c.l.b16 %v461
        %v762 = vunpack.c.h.b16 %v461
        %v763 = vunpack.c.l.b16 %v462
        %v764 = vunpack.c.h.b16 %v462
        %v765 = vunpack.c.l.b16 %v463
        %v766 = vunpack.c.h.b16 %v463
        %v767 = vunpack.c.l.b16 %v464
        %v768 = vunpack.c.h.b16 %v464
        %v769 = vunpack.c.l.b16 %v465
        %v770 = vunpack.c.h.b16 %v465
        %v771 = vunpack.c.l.b16 %v466
        %v772 = vunpack.c.h.b16 %v466
        %v773 = vunpack.c.l.b16 %v467
        %v774 = vunpack.c.h.b16 %v467
        %v775 = vunpack.c.l.b16 %v468
        %v776 = vunpack.c.h.b16 %v468
        %v777 = vunpack.c.l.b16 %v469
        %v778 = vunpack.c.h.b16 %v469
        %v779 = vunpack.c.l.b16 %v470
        %v780 = vunpack.c.h.b16 %v470
        %v781 = vunpack.c.l.b16 %v471
        %v782 = vunpack.c.h.b16 %v471
        %v783 = vunpack.c.l.b16 %v472
        %v784 = vunpack.c.h.b16 %v472
        %v785 = vunpack.c.l.b16 %v473
        %v786 = vunpack.c.h.b16 %v473
        %v787 = vunpack.c.l.b16 %v474
        %v788 = vunpack.c.h.b16 %v474
        %v789 = vunpack.c.l.b16 %v475
        %v790 = vunpack.c.h.b16 %v475
        %v791 = vunpack.c.l.b16 %v476
        %v792 = vunpack.c.h.b16 %v476
        %v793 = vunpack.c.l.b16 %v477
        %v794 = vunpack.c.h.b16 %v477
        %v795 = vunpack.c.l.b16 %v478
        %v796 = vunpack.c.h.b16 %v478
        %v797 = vunpack.c.l.b16 %v479
        %v798 = vunpack.c.h.b16 %v479
        %v799 = vunpack.c.l.b16 %v480
        %v800 = vunpack.c.h.b16 %v480
        %v801 = vunpack.c.l.b16 %v481
        %v802 = vunpack.c.h.b16 %v481
        %v803 = vunpack.c.l.b16 %v482
        %v804 = vunpack.c.h.b16 %v482
        %v805 = vunpack.c.l.b16 %v483
        %v806 = vunpack.c.h.b16 %v483
        %v807 = vunpack.c.l.b16 %v484
        %v808 = vunpack.c.h.b16 %v484
        %v809 = vunpack.c.l.b16 %v485
        %v810 = vunpack.c.h.b16 %v485
        %v811 = vunpack.c.l.b16 %v486
        %v812 = vunpack.c.h.b16 %v486
        %v813 = vunpack.c.l.b16 %v487
        %v814 = vunpack.c.h.b16 %v487
        %v815 = vunpack.c.l.b16 %v488
        %v816 = vunpack.c.h.b16 %v488
        %v817 = vunpack.c.l.b16 %v489
        %v818 = vunpack.c.h.b16 %v489
        %v819 = vunpack.c.l.b16 %v490
        %v820 = vunpack.c.h.b16 %v490
        %v821 = vunpack.c.l.b16 %v491
        %v822 = vunpack.c.h.b16 %v491
        %v823 = vunpack.c.l.b16 %v492
        %v824 = vunpack.c.h.b16 %v492
        %v825 = vunpack.c.l.b16 %v493
        %v826 = vunpack.c.h.b16 %v493
        %v827 = vunpack.c.l.b16 %v494
        %v828 = vunpack.c.h.b16 %v494
        %v829 = vunpack.c.l.b16 %v495
        %v830 = vunpack.c.h.b16 %v495
        %v831 = vunpack.c.l.b16 %v496
        %v832 = vunpack.c.h.b16 %v496
        %v833 = vunpack.c.l.b16 %v497
        %v834 = vunpack.c.h.b16 %v497
        %v835 = vunpack.c.l.b16 %v498
        %v836 = vunpack.c.h.b16 %v498
        %v837 = vunpack.c.l.b16 %v499
        %v838 = vunpack.c.h.b16 %v499
        %v839 = vunpack.c.l.b16 %v500
        %v840 = vunpack.c.h.b16 %v500
        %v841 = vunpack.c.l.b16 %v501
        %v842 = vunpack.c.h.b16 %v501
        %v843 = vunpack.c.l.b16 %v502
        %v844 = vunpack.c.h.b16 %v502
        %v845 = vunpack.c.l.b16 %v503
        %v846 = vunpack.c.h.b16 %v503
        %v847 = vunpack.c.l.b16 %v504
        %v848 = vunpack.c.h.b16 %v504
        %v849 = vunpack.c.l.b16 %v505
        %v850 = vunpack.c.h.b16 %v505
        %v851 = vunpack.c.l.b16 %v506
        %v852 = vunpack.c.h.b16 %v506
        %v853 = vunpack.c.l.b16 %v507
        %v854 = vunpack.c.h.b16 %v507
        %v855 = vunpack.c.l.b16 %v508
        %v856 = vunpack.c.h.b16 %v508
        %v857 = vunpack.c.l.b16 %v509
        %v858 = vunpack.c.h.b16 %v509
        %v859 = vunpack.c.l.b16 %v510
        %v860 = vunpack.c.h.b16 %v510
        %v861 = vunpack.c.l.b16 %v511
        %v862 = vunpack.c.h.b16 %v511
        %v863 = vunpack.c.l.b16 %v512
        %v864 = vunpack.c.h.b16 %v512
        %v865 = vunpack.c.l.b16 %v513
        %v866 = vunpack.c.h.b16 %v513
        %v867 = vunpack.c.l.b16 %v514
        %v868 = vunpack.c.h.b16 %v514
        %v869 = vunpack.c.l.b16 %v515
        %v870 = vunpack.c.h.b16 %v515
        %v871 = vunpack.c.l.b16 %v516
        %v872 = vunpack.c.h.b16 %v516
        %v873 = vunpack.c.l.b16 %v517
        %v874 = vunpack.c.h.b16 %v517
        %v875 = vunpack.c.l.b16 %v518
        %v876 = vunpack.c.h.b16 %v518
        %v877 = vunpack.c.l.b16 %v519
        %v878 = vunpack.c.h.b16 %v519
        %v879 = vunpack.c.l.b16 %v520
        %v880 = vunpack.c.h.b16 %v520
        %v881 = vunpack.c.l.b16 %v521
        %v882 = vunpack.c.h.b16 %v521
        %v883 = vunpack.c.l.b16 %v522
        %v884 = vunpack.c.h.b16 %v522
        %v885 = vunpack.c.l.b16 %v523
        %v886 = vunpack.c.h.b16 %v523
        %v887 = vunpack.c.l.b16 %v524
        %v888 = vunpack.c.h.b16 %v524
        %v889 = vunpack.c.l.b16 %v525
        %v890 = vunpack.c.h.b16 %v525
        %v891 = vunpack.c.l.b16 %v526
        %v892 = vunpack.c.h.b16 %v526
        %v893 = vunpack.c.l.b16 %v527
        %v894 = vunpack.c.h.b16 %v527
        %v895 = vunpack.c.l.b16 %v528
        %v896 = vunpack.c.h.b16 %v528
        %v897 = vunpack.c.l.b16 %v529
        %v898 = vunpack.c.h.b16 %v529
        %v899 = vunpack.c.l.b16 %v530
        %v900 = vunpack.c.h.b16 %v530
        %v901 = vunpack.c.l.b16 %v531
        %v902 = vunpack.c.h.b16 %v531
        %v903 = vunpack.c.l.b16 %v532
        %v904 = vunpack.c.h.b16 %v532
        %v905 = vunpack.c.l.b16 %v533
        %v906 = vunpack.c.h.b16 %v533
        %v907 = vunpack.c.l.b16 %v534
        %v908 = vunpack.c.h.b16 %v534
        %v909 = vunpack.c.l.b16 %v535
        %v910 = vunpack.c.h.b16 %v535
        %v911 = vunpack.c.l.b16 %v536
        %v912 = vunpack.c.h.b16 %v536
        %v913 = vunpack.c.l.b16 %v537
        %v914 = vunpack.c.h.b16 %v537
        %v915 = vunpack.c.l.b16 %v538
        %v916 = vunpack.c.h.b16 %v538
        %v917 = vunpack.c.l.b16 %v539
        %v918 = vunpack.c.h.b16 %v539
        %v919 = vunpack.c.l.b16 %v540
        %v920 = vunpack.c.h.b16 %v540
        %v921 = vunpack.c.l.b16 %v541
        %v922 = vunpack.c.h.b16 %v541
        %v923 = vunpack.c.l.b16 %v542
        %v924 = vunpack.c.h.b16 %v542
        %v925 = vunpack.c.l.b16 %v543
        %v926 = vunpack.c.h.b16 %v543
        %v927 = vunpack.c.l.b16 %v544
        %v928 = vunpack.c.h.b16 %v544
        %v929 = vpack.c.b16 %v681, %v673
        %v930 = vpack.c.b16 %v682, %v674
        %v931 = vpack.c.b16 %v683, %v675
        %v932 = vpack.c.b16 %v684, %v676
        %v933 = vpack.c.b16 %v685, %v677
        %v934 = vpack.c.b16 %v686, %v678
        %v935 = vpack.c.b16 %v687, %v679
        %v936 = vpack.c.b16 %v688, %v680
        %v937 = vpack.c.b16 %v697, %v689
        %v938 = vpack.c.b16 %v698, %v690
        %v939 = vpack.c.b16 %v699, %v691
        %v940 = vpack.c.b16 %v700, %v692
        %v941 = vpack.c.b16 %v701, %v693
        %v942 = vpack.c.b16 %v702, %v694
        %v943 = vpack.c.b16 %v703, %v695
        %v944 = vpack.c.b16 %v704, %v696
        %v945 = vpack.c.b16 %v713, %v705
        %v946 = vpack.c.b16 %v714, %v706
        %v947 = vpack.c.b16 %v715, %v707
        %v948 = vpack.c.b16 %v716, %v708
        %v949 = vpack.c.b16 %v717, %v709
        %v950 = vpack.c.b16 %v718, %v710
        %v951 = vpack.c.b16 %v719, %v711
        %v952 = vpack.c.b16 %v720, %v712
        %v953 = vpack.c.b16 %v729, %v721
        %v954 = vpack.c.b16 %v730, %v722
        %v955 = vpack.c.b16 %v731, %v723
        %v956 = vpack.c.b16 %v732, %v724
        %v957 = vpack.c.b16 %v733, %v725
        %v958 = vpack.c.b16 %v734, %v726
        %v959 = vpack.c.b16 %v735, %v727
        %v960 = vpack.c.b16 %v736, %v728
        %v961 = vpack.c.b16 %v745, %v737
        %v962 = vpack.c.b16 %v746, %v738
        %v963 = vpack.c.b16 %v747, %v739
        %v964 = vpack.c.b16 %v748, %v740
        %v965 = vpack.c.b16 %v749, %v741
        %v966 = vpack.c.b16 %v750, %v742
        %v967 = vpack.c.b16 %v751, %v743
        %v968 = vpack.c.b16 %v752, %v744
        %v969 = vpack.c.b16 %v761, %v753
        %v970 = vpack.c.b16 %v762, %v754
        %v971 = vpack.c.b16 %v763, %v755
        %v972 = vpack.c.b16 %v764, %v756
        %v973 = vpack.c.b16 %v765, %v757
        %v974 = vpack.c.b16 %v766, %v758
        %v975 = vpack.c.b16 %v767, %v759
        %v976 = vpack.c.b16 %v768, %v760
        %v977 = vpack.c.b16 %v777, %v769
        %v978 = vpack.c.b16 %v778, %v770
        %v979 = vpack.c.b16 %v779, %v771
        %v980 = vpack.c.b16 %v780, %v772
        %v981 = vpack.c.b16 %v781, %v773
        %v982 = vpack.c.b16 %v782, %v774
        %v983 = vpack.c.b16 %v783, %v775
        %v984 = vpack.c.b16 %v784, %v776
        %v985 = vpack.c.b16 %v793, %v785
        %v986 = vpack.c.b16 %v794, %v786
        %v987 = vpack.c.b16 %v795, %v787
        %v988 = vpack.c.b16 %v796, %v788
        %v989 = vpack.c.b16 %v797, %v789
        %v990 = vpack.c.b16 %v798, %v790
        %v991 = vpack.c.b16 %v799, %v791
        %v992 = vpack.c.b16 %v800, %v792
        %v993 = vpack.c.b16 %v809, %v801
        %v994 = vpack.c.b16 %v810, %v802
        %v995 = vpack.c.b16 %v811, %v803
        %v996 = vpack.c.b16 %v812, %v804
        %v997 = vpack.c.b16 %v813, %v805
        %v998 = vpack.c.b16 %v814, %v806
        %v999 = vpack.c.b16 %v815, %v807
        %v1000 = vpack.c.b16 %v816, %v808
        %v1001 = vpack.c.b16 %v825, %v817
        %v1002 = vpack.c.b16 %v826, %v818
        %v1003 = vpack.c.b16 %v827, %v819
        %v1004 = vpack.c.b16 %v828, %v820
        %v1005 = vpack.c.b16 %v829, %v821
        %v1006 = vpack.c.b16 %v830, %v822
        %v1007 = vpack.c.b16 %v831, %v823
        %v1008 = vpack.c.b16 %v832, %v824
        %v1009 = vpack.c.b16 %v841, %v833
        %v1010 = vpack.c.b16 %v842, %v834
        %v1011 = vpack.c.b16 %v843, %v835
        %v1012 = vpack.c.b16 %v844, %v836
        %v1013 = vpack.c.b16 %v845, %v837
        %v1014 = vpack.c.b16 %v846, %v838
        %v1015 = vpack.c.b16 %v847, %v839
        %v1016 = vpack.c.b16 %v848, %v840
        %v1017 = vpack.c.b16 %v857, %v849
        %v1018 = vpack.c.b16 %v858, %v850
        %v1019 = vpack.c.b16 %v859, %v851
        %v1020 = vpack.c.b16 %v860, %v852
        %v1021 = vpack.c.b16 %v861, %v853
        %v1022 = vpack.c.b16 %v862, %v854
        %v1023 = vpack.c.b16 %v863, %v855
        %v1024 = vpack.c.b16 %v864, %v856
        %v1025 = vpack.c.b16 %v873, %v865
        %v1026 = vpack.c.b16 %v874, %v866
        %v1027 = vpack.c.b16 %v875, %v867
        %v1028 = vpack.c.b16 %v876, %v868
        %v1029 = vpack.c.b16 %v877, %v869
        %v1030 = vpack.c.b16 %v878, %v870
        %v1031 = vpack.c.b16 %v879, %v871
        %v1032 = vpack.c.b16 %v880, %v872
        %v1033 = vpack.c.b16 %v889, %v881
        %v1034 = vpack.c.b16 %v890, %v882
        %v1035 = vpack.c.b16 %v891, %v883
        %v1036 = vpack.c.b16 %v892, %v884
        %v1037 = vpack.c.b16 %v893, %v885
        %v1038 = vpack.c.b16 %v894, %v886
        %v1039 = vpack.c.b16 %v895, %v887
        %v1040 = vpack.c.b16 %v896, %v888
        %v1041 = vpack.c.b16 %v905, %v897
        %v1042 = vpack.c.b16 %v906, %v898
        %v1043 = vpack.c.b16 %v907, %v899
        %v1044 = vpack.c.b16 %v908, %v900
        %v1045 = vpack.c.b16 %v909, %v901
        %v1046 = vpack.c.b16 %v910, %v902
        %v1047 = vpack.c.b16 %v911, %v903
        %v1048 = vpack.c.b16 %v912, %v904
        %v1049 = vpack.c.b16 %v921, %v913
        %v1050 = vpack.c.b16 %v922, %v914
        %v1051 = vpack.c.b16 %v923, %v915
        %v1052 = vpack.c.b16 %v924, %v916
        %v1053 = vpack.c.b16 %v925, %v917
        %v1054 = vpack.c.b16 %v926, %v918
        %v1055 = vpack.c.b16 %v927, %v919
        %v1056 = vpack.c.b16 %v928, %v920
        %1185 = vmatpush.bf16.msra.mxu0 %v985
        %1186 = vmatpush.bf16.msra.mxu0 %v977
        %1187 = vmatpush.bf16.msra.mxu0 %v969
        %1188 = vmatpush.bf16.msra.mxu0 %v961
        %1189 = vmatpush.bf16.msra.mxu0 %v953
        %1190 = vmatpush.bf16.msra.mxu0 %v945
        %1191 = vmatpush.bf16.msra.mxu0 %v937
        %1192 = vmatpush.bf16.msra.mxu0 %v929
        %1193 = vmatmul.bf16.gmra.mxu0 %v409
        %v1194 = vpop.f32.mrf.mxu0
        %v1195 = vadd.f32 0.0, %v1194
        %v1196 = vpop.f32.mrf.mxu0
        %v1197 = vadd.f32 0.0, %v1196
        %1198 = vmatmul.bf16.gmra.mxu0 %v411
        %v1199 = vpop.f32.mrf.mxu0
        %v1200 = vadd.f32 0.0, %v1199
        %v1201 = vpop.f32.mrf.mxu0
        %v1202 = vadd.f32 0.0, %v1201
        %1203 = vmatmul.bf16.gmra.mxu0 %v413
        %v1204 = vpop.f32.mrf.mxu0
        %v1205 = vadd.f32 0.0, %v1204
        %v1206 = vpop.f32.mrf.mxu0
        %v1207 = vadd.f32 0.0, %v1206
        %1208 = vmatmul.bf16.gmra.mxu0 %v415
        %v1209 = vpop.f32.mrf.mxu0
        %v1210 = vadd.f32 0.0, %v1209
        %v1211 = vpop.f32.mrf.mxu0
        %v1212 = vadd.f32 0.0, %v1211
        %1213 = vdwg.mxu0
        %1214 = vmatpush.bf16.msra.mxu0 %v1049
        %1215 = vmatpush.bf16.msra.mxu0 %v1041
        %1216 = vmatpush.bf16.msra.mxu0 %v1033
        %1217 = vmatpush.bf16.msra.mxu0 %v1025
        %1218 = vmatpush.bf16.msra.mxu0 %v1017
        %1219 = vmatpush.bf16.msra.mxu0 %v1009
        %1220 = vmatpush.bf16.msra.mxu0 %v1001
        %1221 = vmatpush.bf16.msra.mxu0 %v993
        %1222 = vmatmul.bf16.gmra.mxu0 %v410
        %v1223 = vpop.f32.mrf.mxu0
        %v1224 = vadd.f32 %v1195, %v1223
        %v1225 = vpop.f32.mrf.mxu0
        %v1226 = vadd.f32 %v1197, %v1225
        %1227 = vmatmul.bf16.gmra.mxu0 %v412
        %v1228 = vpop.f32.mrf.mxu0
        %v1229 = vadd.f32 %v1200, %v1228
        %v1230 = vpop.f32.mrf.mxu0
        %v1231 = vadd.f32 %v1202, %v1230
        %1232 = vmatmul.bf16.gmra.mxu0 %v414
        %v1233 = vpop.f32.mrf.mxu0
        %v1234 = vadd.f32 %v1205, %v1233
        %v1235 = vpop.f32.mrf.mxu0
        %v1236 = vadd.f32 %v1207, %v1235
        %1237 = vmatmul.bf16.gmra.mxu0 %v416
        %v1238 = vpop.f32.mrf.mxu0
        %v1239 = vadd.f32 %v1210, %v1238
        %v1240 = vpop.f32.mrf.mxu0
        %v1241 = vadd.f32 %v1212, %v1240
        %1242 = vdwg.mxu0
        %1243 = vmatpush.bf16.msra.mxu0 %v986
        %1244 = vmatpush.bf16.msra.mxu0 %v978
        %1245 = vmatpush.bf16.msra.mxu0 %v970
        %1246 = vmatpush.bf16.msra.mxu0 %v962
        %1247 = vmatpush.bf16.msra.mxu0 %v954
        %1248 = vmatpush.bf16.msra.mxu0 %v946
        %1249 = vmatpush.bf16.msra.mxu0 %v938
        %1250 = vmatpush.bf16.msra.mxu0 %v930
        %1251 = vmatmul.bf16.gmra.mxu0 %v409
        %v1252 = vpop.f32.mrf.mxu0
        %v1253 = vadd.f32 0.0, %v1252
        %v1254 = vpop.f32.mrf.mxu0
        %v1255 = vadd.f32 0.0, %v1254
        %1256 = vmatmul.bf16.gmra.mxu0 %v411
        %v1257 = vpop.f32.mrf.mxu0
        %v1258 = vadd.f32 0.0, %v1257
        %v1259 = vpop.f32.mrf.mxu0
        %v1260 = vadd.f32 0.0, %v1259
        %1261 = vmatmul.bf16.gmra.mxu0 %v413
        %v1262 = vpop.f32.mrf.mxu0
        %v1263 = vadd.f32 0.0, %v1262
        %v1264 = vpop.f32.mrf.mxu0
        %v1265 = vadd.f32 0.0, %v1264
        %1266 = vmatmul.bf16.gmra.mxu0 %v415
        %v1267 = vpop.f32.mrf.mxu0
        %v1268 = vadd.f32 0.0, %v1267
        %v1269 = vpop.f32.mrf.mxu0
        %v1270 = vadd.f32 0.0, %v1269
        %1271 = vdwg.mxu0
        %1272 = vmatpush.bf16.msra.mxu0 %v1050
        %1273 = vmatpush.bf16.msra.mxu0 %v1042
        %1274 = vmatpush.bf16.msra.mxu0 %v1034
        %1275 = vmatpush.bf16.msra.mxu0 %v1026
        %1276 = vmatpush.bf16.msra.mxu0 %v1018
        %1277 = vmatpush.bf16.msra.mxu0 %v1010
        %1278 = vmatpush.bf16.msra.mxu0 %v1002
        %1279 = vmatpush.bf16.msra.mxu0 %v994
        %1280 = vmatmul.bf16.gmra.mxu0 %v410
        %v1281 = vpop.f32.mrf.mxu0
        %v1282 = vadd.f32 %v1253, %v1281
        %v1283 = vpop.f32.mrf.mxu0
        %v1284 = vadd.f32 %v1255, %v1283
        %1285 = vmatmul.bf16.gmra.mxu0 %v412
        %v1286 = vpop.f32.mrf.mxu0
        %v1287 = vadd.f32 %v1258, %v1286
        %v1288 = vpop.f32.mrf.mxu0
        %v1289 = vadd.f32 %v1260, %v1288
        %1290 = vmatmul.bf16.gmra.mxu0 %v414
        %v1291 = vpop.f32.mrf.mxu0
        %v1292 = vadd.f32 %v1263, %v1291
        %v1293 = vpop.f32.mrf.mxu0
        %v1294 = vadd.f32 %v1265, %v1293
        %1295 = vmatmul.bf16.gmra.mxu0 %v416
        %v1296 = vpop.f32.mrf.mxu0
        %v1297 = vadd.f32 %v1268, %v1296
        %v1298 = vpop.f32.mrf.mxu0
        %v1299 = vadd.f32 %v1270, %v1298
        %1300 = vdwg.mxu0
        %1301 = vmatpush.bf16.msra.mxu0 %v987
        %1302 = vmatpush.bf16.msra.mxu0 %v979
        %1303 = vmatpush.bf16.msra.mxu0 %v971
        %1304 = vmatpush.bf16.msra.mxu0 %v963
        %1305 = vmatpush.bf16.msra.mxu0 %v955
        %1306 = vmatpush.bf16.msra.mxu0 %v947
        %1307 = vmatpush.bf16.msra.mxu0 %v939
        %1308 = vmatpush.bf16.msra.mxu0 %v931
        %1309 = vmatmul.bf16.gmra.mxu0 %v409
        %v1310 = vpop.f32.mrf.mxu0
        %v1311 = vadd.f32 0.0, %v1310
        %v1312 = vpop.f32.mrf.mxu0
        %v1313 = vadd.f32 0.0, %v1312
        %1314 = vmatmul.bf16.gmra.mxu0 %v411
        %v1315 = vpop.f32.mrf.mxu0
        %v1316 = vadd.f32 0.0, %v1315
        %v1317 = vpop.f32.mrf.mxu0
        %v1318 = vadd.f32 0.0, %v1317
        %1319 = vmatmul.bf16.gmra.mxu0 %v413
        %v1320 = vpop.f32.mrf.mxu0
        %v1321 = vadd.f32 0.0, %v1320
        %v1322 = vpop.f32.mrf.mxu0
        %v1323 = vadd.f32 0.0, %v1322
        %1324 = vmatmul.bf16.gmra.mxu0 %v415
        %v1325 = vpop.f32.mrf.mxu0
        %v1326 = vadd.f32 0.0, %v1325
        %v1327 = vpop.f32.mrf.mxu0
        %v1328 = vadd.f32 0.0, %v1327
        %1329 = vdwg.mxu0
        %1330 = vmatpush.bf16.msra.mxu0 %v1051
        %1331 = vmatpush.bf16.msra.mxu0 %v1043
        %1332 = vmatpush.bf16.msra.mxu0 %v1035
        %1333 = vmatpush.bf16.msra.mxu0 %v1027
        %1334 = vmatpush.bf16.msra.mxu0 %v1019
        %1335 = vmatpush.bf16.msra.mxu0 %v1011
        %1336 = vmatpush.bf16.msra.mxu0 %v1003
        %1337 = vmatpush.bf16.msra.mxu0 %v995
        %1338 = vmatmul.bf16.gmra.mxu0 %v410
        %v1339 = vpop.f32.mrf.mxu0
        %v1340 = vadd.f32 %v1311, %v1339
        %v1341 = vpop.f32.mrf.mxu0
        %v1342 = vadd.f32 %v1313, %v1341
        %1343 = vmatmul.bf16.gmra.mxu0 %v412
        %v1344 = vpop.f32.mrf.mxu0
        %v1345 = vadd.f32 %v1316, %v1344
        %v1346 = vpop.f32.mrf.mxu0
        %v1347 = vadd.f32 %v1318, %v1346
        %1348 = vmatmul.bf16.gmra.mxu0 %v414
        %v1349 = vpop.f32.mrf.mxu0
        %v1350 = vadd.f32 %v1321, %v1349
        %v1351 = vpop.f32.mrf.mxu0
        %v1352 = vadd.f32 %v1323, %v1351
        %1353 = vmatmul.bf16.gmra.mxu0 %v416
        %v1354 = vpop.f32.mrf.mxu0
        %v1355 = vadd.f32 %v1326, %v1354
        %v1356 = vpop.f32.mrf.mxu0
        %v1357 = vadd.f32 %v1328, %v1356
        %1358 = vdwg.mxu0
        %1359 = vmatpush.bf16.msra.mxu0 %v988
        %1360 = vmatpush.bf16.msra.mxu0 %v980
        %1361 = vmatpush.bf16.msra.mxu0 %v972
        %1362 = vmatpush.bf16.msra.mxu0 %v964
        %1363 = vmatpush.bf16.msra.mxu0 %v956
        %1364 = vmatpush.bf16.msra.mxu0 %v948
        %1365 = vmatpush.bf16.msra.mxu0 %v940
        %1366 = vmatpush.bf16.msra.mxu0 %v932
        %1367 = vmatmul.bf16.gmra.mxu0 %v409
        %v1368 = vpop.f32.mrf.mxu0
        %v1369 = vadd.f32 0.0, %v1368
        %v1370 = vpop.f32.mrf.mxu0
        %v1371 = vadd.f32 0.0, %v1370
        %1372 = vmatmul.bf16.gmra.mxu0 %v411
        %v1373 = vpop.f32.mrf.mxu0
        %v1374 = vadd.f32 0.0, %v1373
        %v1375 = vpop.f32.mrf.mxu0
        %v1376 = vadd.f32 0.0, %v1375
        %1377 = vmatmul.bf16.gmra.mxu0 %v413
        %v1378 = vpop.f32.mrf.mxu0
        %v1379 = vadd.f32 0.0, %v1378
        %v1380 = vpop.f32.mrf.mxu0
        %v1381 = vadd.f32 0.0, %v1380
        %1382 = vmatmul.bf16.gmra.mxu0 %v415
        %v1383 = vpop.f32.mrf.mxu0
        %v1384 = vadd.f32 0.0, %v1383
        %v1385 = vpop.f32.mrf.mxu0
        %v1386 = vadd.f32 0.0, %v1385
        %1387 = vdwg.mxu0
        %1388 = vmatpush.bf16.msra.mxu0 %v1052
        %1389 = vmatpush.bf16.msra.mxu0 %v1044
        %1390 = vmatpush.bf16.msra.mxu0 %v1036
        %1391 = vmatpush.bf16.msra.mxu0 %v1028
        %1392 = vmatpush.bf16.msra.mxu0 %v1020
        %1393 = vmatpush.bf16.msra.mxu0 %v1012
        %1394 = vmatpush.bf16.msra.mxu0 %v1004
        %1395 = vmatpush.bf16.msra.mxu0 %v996
        %1396 = vmatmul.bf16.gmra.mxu0 %v410
        %v1397 = vpop.f32.mrf.mxu0
        %v1398 = vadd.f32 %v1369, %v1397
        %v1399 = vpop.f32.mrf.mxu0
        %v1400 = vadd.f32 %v1371, %v1399
        %1401 = vmatmul.bf16.gmra.mxu0 %v412
        %v1402 = vpop.f32.mrf.mxu0
        %v1403 = vadd.f32 %v1374, %v1402
        %v1404 = vpop.f32.mrf.mxu0
        %v1405 = vadd.f32 %v1376, %v1404
        %1406 = vmatmul.bf16.gmra.mxu0 %v414
        %v1407 = vpop.f32.mrf.mxu0
        %v1408 = vadd.f32 %v1379, %v1407
        %v1409 = vpop.f32.mrf.mxu0
        %v1410 = vadd.f32 %v1381, %v1409
        %1411 = vmatmul.bf16.gmra.mxu0 %v416
        %v1412 = vpop.f32.mrf.mxu0
        %v1413 = vadd.f32 %v1384, %v1412
        %v1414 = vpop.f32.mrf.mxu0
        %v1415 = vadd.f32 %v1386, %v1414
        %1416 = vdwg.mxu0
        %1417 = vmatpush.bf16.msra.mxu0 %v989
        %1418 = vmatpush.bf16.msra.mxu0 %v981
        %1419 = vmatpush.bf16.msra.mxu0 %v973
        %1420 = vmatpush.bf16.msra.mxu0 %v965
        %1421 = vmatpush.bf16.msra.mxu0 %v957
        %1422 = vmatpush.bf16.msra.mxu0 %v949
        %1423 = vmatpush.bf16.msra.mxu0 %v941
        %1424 = vmatpush.bf16.msra.mxu0 %v933
        %1425 = vmatmul.bf16.gmra.mxu0 %v409
        %v1426 = vpop.f32.mrf.mxu0
        %v1427 = vadd.f32 0.0, %v1426
        %v1428 = vpop.f32.mrf.mxu0
        %v1429 = vadd.f32 0.0, %v1428
        %1430 = vmatmul.bf16.gmra.mxu0 %v411
        %v1431 = vpop.f32.mrf.mxu0
        %v1432 = vadd.f32 0.0, %v1431
        %v1433 = vpop.f32.mrf.mxu0
        %v1434 = vadd.f32 0.0, %v1433
        %1435 = vmatmul.bf16.gmra.mxu0 %v413
        %v1436 = vpop.f32.mrf.mxu0
        %v1437 = vadd.f32 0.0, %v1436
        %v1438 = vpop.f32.mrf.mxu0
        %v1439 = vadd.f32 0.0, %v1438
        %1440 = vmatmul.bf16.gmra.mxu0 %v415
        %v1441 = vpop.f32.mrf.mxu0
        %v1442 = vadd.f32 0.0, %v1441
        %v1443 = vpop.f32.mrf.mxu0
        %v1444 = vadd.f32 0.0, %v1443
        %1445 = vdwg.mxu0
        %1446 = vmatpush.bf16.msra.mxu0 %v1053
        %1447 = vmatpush.bf16.msra.mxu0 %v1045
        %1448 = vmatpush.bf16.msra.mxu0 %v1037
        %1449 = vmatpush.bf16.msra.mxu0 %v1029
        %1450 = vmatpush.bf16.msra.mxu0 %v1021
        %1451 = vmatpush.bf16.msra.mxu0 %v1013
        %1452 = vmatpush.bf16.msra.mxu0 %v1005
        %1453 = vmatpush.bf16.msra.mxu0 %v997
        %1454 = vmatmul.bf16.gmra.mxu0 %v410
        %v1455 = vpop.f32.mrf.mxu0
        %v1456 = vadd.f32 %v1427, %v1455
        %v1457 = vpop.f32.mrf.mxu0
        %v1458 = vadd.f32 %v1429, %v1457
        %1459 = vmatmul.bf16.gmra.mxu0 %v412
        %v1460 = vpop.f32.mrf.mxu0
        %v1461 = vadd.f32 %v1432, %v1460
        %v1462 = vpop.f32.mrf.mxu0
        %v1463 = vadd.f32 %v1434, %v1462
        %1464 = vmatmul.bf16.gmra.mxu0 %v414
        %v1465 = vpop.f32.mrf.mxu0
        %v1466 = vadd.f32 %v1437, %v1465
        %v1467 = vpop.f32.mrf.mxu0
        %v1468 = vadd.f32 %v1439, %v1467
        %1469 = vmatmul.bf16.gmra.mxu0 %v416
        %v1470 = vpop.f32.mrf.mxu0
        %v1471 = vadd.f32 %v1442, %v1470
        %v1472 = vpop.f32.mrf.mxu0
        %v1473 = vadd.f32 %v1444, %v1472
        %1474 = vdwg.mxu0
        %1475 = vmatpush.bf16.msra.mxu0 %v990
        %1476 = vmatpush.bf16.msra.mxu0 %v982
        %1477 = vmatpush.bf16.msra.mxu0 %v974
        %1478 = vmatpush.bf16.msra.mxu0 %v966
        %1479 = vmatpush.bf16.msra.mxu0 %v958
        %1480 = vmatpush.bf16.msra.mxu0 %v950
        %1481 = vmatpush.bf16.msra.mxu0 %v942
        %1482 = vmatpush.bf16.msra.mxu0 %v934
        %1483 = vmatmul.bf16.gmra.mxu0 %v409
        %v1484 = vpop.f32.mrf.mxu0
        %v1485 = vadd.f32 0.0, %v1484
        %v1486 = vpop.f32.mrf.mxu0
        %v1487 = vadd.f32 0.0, %v1486
        %1488 = vmatmul.bf16.gmra.mxu0 %v411
        %v1489 = vpop.f32.mrf.mxu0
        %v1490 = vadd.f32 0.0, %v1489
        %v1491 = vpop.f32.mrf.mxu0
        %v1492 = vadd.f32 0.0, %v1491
        %1493 = vmatmul.bf16.gmra.mxu0 %v413
        %v1494 = vpop.f32.mrf.mxu0
        %v1495 = vadd.f32 0.0, %v1494
        %v1496 = vpop.f32.mrf.mxu0
        %v1497 = vadd.f32 0.0, %v1496
        %1498 = vmatmul.bf16.gmra.mxu0 %v415
        %v1499 = vpop.f32.mrf.mxu0
        %v1500 = vadd.f32 0.0, %v1499
        %v1501 = vpop.f32.mrf.mxu0
        %v1502 = vadd.f32 0.0, %v1501
        %1503 = vdwg.mxu0
        %1504 = vmatpush.bf16.msra.mxu0 %v1054
        %1505 = vmatpush.bf16.msra.mxu0 %v1046
        %1506 = vmatpush.bf16.msra.mxu0 %v1038
        %1507 = vmatpush.bf16.msra.mxu0 %v1030
        %1508 = vmatpush.bf16.msra.mxu0 %v1022
        %1509 = vmatpush.bf16.msra.mxu0 %v1014
        %1510 = vmatpush.bf16.msra.mxu0 %v1006
        %1511 = vmatpush.bf16.msra.mxu0 %v998
        %1512 = vmatmul.bf16.gmra.mxu0 %v410
        %v1513 = vpop.f32.mrf.mxu0
        %v1514 = vadd.f32 %v1485, %v1513
        %v1515 = vpop.f32.mrf.mxu0
        %v1516 = vadd.f32 %v1487, %v1515
        %1517 = vmatmul.bf16.gmra.mxu0 %v412
        %v1518 = vpop.f32.mrf.mxu0
        %v1519 = vadd.f32 %v1490, %v1518
        %v1520 = vpop.f32.mrf.mxu0
        %v1521 = vadd.f32 %v1492, %v1520
        %1522 = vmatmul.bf16.gmra.mxu0 %v414
        %v1523 = vpop.f32.mrf.mxu0
        %v1524 = vadd.f32 %v1495, %v1523
        %v1525 = vpop.f32.mrf.mxu0
        %v1526 = vadd.f32 %v1497, %v1525
        %1527 = vmatmul.bf16.gmra.mxu0 %v416
        %v1528 = vpop.f32.mrf.mxu0
        %v1529 = vadd.f32 %v1500, %v1528
        %v1530 = vpop.f32.mrf.mxu0
        %v1531 = vadd.f32 %v1502, %v1530
        %1532 = vdwg.mxu0
        %1533 = vmatpush.bf16.msra.mxu0 %v991
        %1534 = vmatpush.bf16.msra.mxu0 %v983
        %1535 = vmatpush.bf16.msra.mxu0 %v975
        %1536 = vmatpush.bf16.msra.mxu0 %v967
        %1537 = vmatpush.bf16.msra.mxu0 %v959
        %1538 = vmatpush.bf16.msra.mxu0 %v951
        %1539 = vmatpush.bf16.msra.mxu0 %v943
        %1540 = vmatpush.bf16.msra.mxu0 %v935
        %1541 = vmatmul.bf16.gmra.mxu0 %v409
        %v1542 = vpop.f32.mrf.mxu0
        %v1543 = vadd.f32 0.0, %v1542
        %v1544 = vpop.f32.mrf.mxu0
        %v1545 = vadd.f32 0.0, %v1544
        %1546 = vmatmul.bf16.gmra.mxu0 %v411
        %v1547 = vpop.f32.mrf.mxu0
        %v1548 = vadd.f32 0.0, %v1547
        %v1549 = vpop.f32.mrf.mxu0
        %v1550 = vadd.f32 0.0, %v1549
        %1551 = vmatmul.bf16.gmra.mxu0 %v413
        %v1552 = vpop.f32.mrf.mxu0
        %v1553 = vadd.f32 0.0, %v1552
        %v1554 = vpop.f32.mrf.mxu0
        %v1555 = vadd.f32 0.0, %v1554
        %1556 = vmatmul.bf16.gmra.mxu0 %v415
        %v1557 = vpop.f32.mrf.mxu0
        %v1558 = vadd.f32 0.0, %v1557
        %v1559 = vpop.f32.mrf.mxu0
        %v1560 = vadd.f32 0.0, %v1559
        %1561 = vdwg.mxu0
        %1562 = vmatpush.bf16.msra.mxu0 %v1055
        %1563 = vmatpush.bf16.msra.mxu0 %v1047
        %1564 = vmatpush.bf16.msra.mxu0 %v1039
        %1565 = vmatpush.bf16.msra.mxu0 %v1031
        %1566 = vmatpush.bf16.msra.mxu0 %v1023
        %1567 = vmatpush.bf16.msra.mxu0 %v1015
        %1568 = vmatpush.bf16.msra.mxu0 %v1007
        %1569 = vmatpush.bf16.msra.mxu0 %v999
        %1570 = vmatmul.bf16.gmra.mxu0 %v410
        %v1571 = vpop.f32.mrf.mxu0
        %v1572 = vadd.f32 %v1543, %v1571
        %v1573 = vpop.f32.mrf.mxu0
        %v1574 = vadd.f32 %v1545, %v1573
        %1575 = vmatmul.bf16.gmra.mxu0 %v412
        %v1576 = vpop.f32.mrf.mxu0
        %v1577 = vadd.f32 %v1548, %v1576
        %v1578 = vpop.f32.mrf.mxu0
        %v1579 = vadd.f32 %v1550, %v1578
        %1580 = vmatmul.bf16.gmra.mxu0 %v414
        %v1581 = vpop.f32.mrf.mxu0
        %v1582 = vadd.f32 %v1553, %v1581
        %v1583 = vpop.f32.mrf.mxu0
        %v1584 = vadd.f32 %v1555, %v1583
        %1585 = vmatmul.bf16.gmra.mxu0 %v416
        %v1586 = vpop.f32.mrf.mxu0
        %v1587 = vadd.f32 %v1558, %v1586
        %v1588 = vpop.f32.mrf.mxu0
        %v1589 = vadd.f32 %v1560, %v1588
        %1590 = vdwg.mxu0
        %1591 = vmatpush.bf16.msra.mxu0 %v992
        %1592 = vmatpush.bf16.msra.mxu0 %v984
        %1593 = vmatpush.bf16.msra.mxu0 %v976
        %1594 = vmatpush.bf16.msra.mxu0 %v968
        %1595 = vmatpush.bf16.msra.mxu0 %v960
        %1596 = vmatpush.bf16.msra.mxu0 %v952
        %1597 = vmatpush.bf16.msra.mxu0 %v944
        %1598 = vmatpush.bf16.msra.mxu0 %v936
        %1599 = vmatmul.bf16.gmra.mxu0 %v409
        %v1600 = vpop.f32.mrf.mxu0
        %v1601 = vadd.f32 0.0, %v1600
        %v1602 = vpop.f32.mrf.mxu0
        %v1603 = vadd.f32 0.0, %v1602
        %1604 = vmatmul.bf16.gmra.mxu0 %v411
        %v1605 = vpop.f32.mrf.mxu0
        %v1606 = vadd.f32 0.0, %v1605
        %v1607 = vpop.f32.mrf.mxu0
        %v1608 = vadd.f32 0.0, %v1607
        %1609 = vmatmul.bf16.gmra.mxu0 %v413
        %v1610 = vpop.f32.mrf.mxu0
        %v1611 = vadd.f32 0.0, %v1610
        %v1612 = vpop.f32.mrf.mxu0
        %v1613 = vadd.f32 0.0, %v1612
        %1614 = vmatmul.bf16.gmra.mxu0 %v415
        %v1615 = vpop.f32.mrf.mxu0
        %v1616 = vadd.f32 0.0, %v1615
        %v1617 = vpop.f32.mrf.mxu0
        %v1618 = vadd.f32 0.0, %v1617
        %1619 = vdwg.mxu0
        %1620 = vmatpush.bf16.msra.mxu0 %v1056
        %1621 = vmatpush.bf16.msra.mxu0 %v1048
        %1622 = vmatpush.bf16.msra.mxu0 %v1040
        %1623 = vmatpush.bf16.msra.mxu0 %v1032
        %1624 = vmatpush.bf16.msra.mxu0 %v1024
        %1625 = vmatpush.bf16.msra.mxu0 %v1016
        %1626 = vmatpush.bf16.msra.mxu0 %v1008
        %1627 = vmatpush.bf16.msra.mxu0 %v1000
        %1628 = vmatmul.bf16.gmra.mxu0 %v410
        %v1629 = vpop.f32.mrf.mxu0
        %v1630 = vadd.f32 %v1601, %v1629
        %v1631 = vpop.f32.mrf.mxu0
        %v1632 = vadd.f32 %v1603, %v1631
        %1633 = vmatmul.bf16.gmra.mxu0 %v412
        %v1634 = vpop.f32.mrf.mxu0
        %v1635 = vadd.f32 %v1606, %v1634
        %v1636 = vpop.f32.mrf.mxu0
        %v1637 = vadd.f32 %v1608, %v1636
        %1638 = vmatmul.bf16.gmra.mxu0 %v414
        %v1639 = vpop.f32.mrf.mxu0
        %v1640 = vadd.f32 %v1611, %v1639
        %v1641 = vpop.f32.mrf.mxu0
        %v1642 = vadd.f32 %v1613, %v1641
        %1643 = vmatmul.bf16.gmra.mxu0 %v416
        %v1644 = vpop.f32.mrf.mxu0
        %v1645 = vadd.f32 %v1616, %v1644
        %v1646 = vpop.f32.mrf.mxu0
        %v1647 = vadd.f32 %v1618, %v1646
        %1648 = vdwg.mxu0
        %v1649 = vmax.f32 %v1224, %v1340
        %v1650 = vmax.f32 %v1282, %v1398
        %v1651 = vmax.f32 %v1226, %v1342
        %v1652 = vmax.f32 %v1284, %v1400
        %v1653 = vmax.f32 %v1229, %v1345
        %v1654 = vmax.f32 %v1287, %v1403
        %v1655 = vmax.f32 %v1231, %v1347
        %v1656 = vmax.f32 %v1289, %v1405
        %v1657 = vmax.f32 %v1234, %v1350
        %v1658 = vmax.f32 %v1292, %v1408
        %v1659 = vmax.f32 %v1236, %v1352
        %v1660 = vmax.f32 %v1294, %v1410
        %v1661 = vmax.f32 %v1239, %v1355
        %v1662 = vmax.f32 %v1297, %v1413
        %v1663 = vmax.f32 %v1241, %v1357
        %v1664 = vmax.f32 %v1299, %v1415
        %v1665 = vmax.f32 %v1456, %v1572
        %v1666 = vmax.f32 %v1514, %v1630
        %v1667 = vmax.f32 %v1458, %v1574
        %v1668 = vmax.f32 %v1516, %v1632
        %v1669 = vmax.f32 %v1461, %v1577
        %v1670 = vmax.f32 %v1519, %v1635
        %v1671 = vmax.f32 %v1463, %v1579
        %v1672 = vmax.f32 %v1521, %v1637
        %v1673 = vmax.f32 %v1466, %v1582
        %v1674 = vmax.f32 %v1524, %v1640
        %v1675 = vmax.f32 %v1468, %v1584
        %v1676 = vmax.f32 %v1526, %v1642
        %v1677 = vmax.f32 %v1471, %v1587
        %v1678 = vmax.f32 %v1529, %v1645
        %v1679 = vmax.f32 %v1473, %v1589
        %v1680 = vmax.f32 %v1531, %v1647
        %v1681 = vmax.f32 %v1649, %v1665
        %v1682 = vmax.f32 %v1650, %v1666
        %v1683 = vmax.f32 %v1651, %v1667
        %v1684 = vmax.f32 %v1652, %v1668
        %v1685 = vmax.f32 %v1653, %v1669
        %v1686 = vmax.f32 %v1654, %v1670
        %v1687 = vmax.f32 %v1655, %v1671
        %v1688 = vmax.f32 %v1656, %v1672
        %v1689 = vmax.f32 %v1657, %v1673
        %v1690 = vmax.f32 %v1658, %v1674
        %v1691 = vmax.f32 %v1659, %v1675
        %v1692 = vmax.f32 %v1660, %v1676
        %v1693 = vmax.f32 %v1661, %v1677
        %v1694 = vmax.f32 %v1662, %v1678
        %v1695 = vmax.f32 %v1663, %v1679
        %v1696 = vmax.f32 %v1664, %v1680
        %v1697 = vld [vmem:[%s7] ss:$8 sm:$0x3]
        %v1699 = vperm.slane %v1697, 0
        %v1700 = vperm.slane %v1697, 1
        %v1703 = vadd.f32 %v1681, %v1699
        %v1704 = vadd.f32 %v1682, %v1700
        %v1705 = vadd.f32 %v1683, %v1699
        %v1706 = vadd.f32 %v1684, %v1700
        %v1707 = vadd.f32 %v1685, %v1699
        %v1708 = vadd.f32 %v1686, %v1700
        %v1709 = vadd.f32 %v1687, %v1699
        %v1710 = vadd.f32 %v1688, %v1700
        %v1711 = vadd.f32 %v1689, %v1699
        %v1712 = vadd.f32 %v1690, %v1700
        %v1713 = vadd.f32 %v1691, %v1699
        %v1714 = vadd.f32 %v1692, %v1700
        %v1715 = vadd.f32 %v1693, %v1699
        %v1716 = vadd.f32 %v1694, %v1700
        %v1717 = vadd.f32 %v1695, %v1699
        %v1718 = vadd.f32 %v1696, %v1700
        %v1719 = vmax.f32 %v1703, 0.0
        %v1720 = vmax.f32 %v1704, 0.0
        %v1721 = vmax.f32 %v1705, 0.0
        %v1722 = vmax.f32 %v1706, 0.0
        %v1723 = vmax.f32 %v1707, 0.0
        %v1724 = vmax.f32 %v1708, 0.0
        %v1725 = vmax.f32 %v1709, 0.0
        %v1726 = vmax.f32 %v1710, 0.0
        %v1727 = vmax.f32 %v1711, 0.0
        %v1728 = vmax.f32 %v1712, 0.0
        %v1729 = vmax.f32 %v1713, 0.0
        %v1730 = vmax.f32 %v1714, 0.0
        %v1731 = vmax.f32 %v1715, 0.0
        %v1732 = vmax.f32 %v1716, 0.0
        %v1733 = vmax.f32 %v1717, 0.0
        %v1734 = vmax.f32 %v1718, 0.0
        %v1735 = vpack.c.bf16 %v1721, %v1719
        %v1736 = vpack.c.bf16 %v1722, %v1720
        %v1737 = vpack.c.bf16 %v1725, %v1723
        %v1738 = vpack.c.bf16 %v1726, %v1724
        %v1739 = vpack.c.bf16 %v1729, %v1727
        %v1740 = vpack.c.bf16 %v1730, %v1728
        %v1741 = vpack.c.bf16 %v1733, %v1731
        %v1742 = vpack.c.bf16 %v1734, %v1732
        %v1743 = vld [vmem:[%s5] sm:$0xff]
        %v1744 = vld [vmem:[%s5 + $0x8] sm:$0xff]
        %v1745 = vld [vmem:[%s5 + $0x10] sm:$0xff]
        %v1746 = vld [vmem:[%s5 + $0x18] sm:$0xff]
        %v1747 = vld [vmem:[%s5 + $0x20] sm:$0xff]
        %v1748 = vld [vmem:[%s5 + $0x28] sm:$0xff]
        %v1749 = vld [vmem:[%s5 + $0x30] sm:$0xff]
        %v1750 = vld [vmem:[%s5 + $0x38] sm:$0xff]
        %v1751 = vld [vmem:[%s5 + $0x40] sm:$0xff]
        %v1752 = vld [vmem:[%s5 + $0x48] sm:$0xff]
        %v1753 = vld [vmem:[%s5 + $0x50] sm:$0xff]
        %v1754 = vld [vmem:[%s5 + $0x58] sm:$0xff]
        %v1755 = vld [vmem:[%s5 + $0x60] sm:$0xff]
        %v1756 = vld [vmem:[%s5 + $0x68] sm:$0xff]
        %v1757 = vld [vmem:[%s5 + $0x70] sm:$0xff]
        %v1758 = vld [vmem:[%s5 + $0x78] sm:$0xff]
        %v1759 = vld [vmem:[%s5 + $0x80] sm:$0xff]
        %v1760 = vld [vmem:[%s5 + $0x88] sm:$0xff]
        %v1761 = vld [vmem:[%s5 + $0x90] sm:$0xff]
        %v1762 = vld [vmem:[%s5 + $0x98] sm:$0xff]
        %v1763 = vld [vmem:[%s5 + $0xa0] sm:$0xff]
        %v1764 = vld [vmem:[%s5 + $0xa8] sm:$0xff]
        %v1765 = vld [vmem:[%s5 + $0xb0] sm:$0xff]
        %v1766 = vld [vmem:[%s5 + $0xb8] sm:$0xff]
        %v1767 = vld [vmem:[%s5 + $0xc0] sm:$0xff]
        %v1768 = vld [vmem:[%s5 + $0xc8] sm:$0xff]
        %v1769 = vld [vmem:[%s5 + $0xd0] sm:$0xff]
        %v1770 = vld [vmem:[%s5 + $0xd8] sm:$0xff]
        %v1771 = vld [vmem:[%s5 + $0xe0] sm:$0xff]
        %v1772 = vld [vmem:[%s5 + $0xe8] sm:$0xff]
        %v1773 = vld [vmem:[%s5 + $0xf0] sm:$0xff]
        %v1774 = vld [vmem:[%s5 + $0xf8] sm:$0xff]
        %v1807 = vunpack.c.l.b16 %v1743
        %v1808 = vunpack.c.h.b16 %v1743
        %v1809 = vunpack.c.l.b16 %v1744
        %v1810 = vunpack.c.h.b16 %v1744
        %v1811 = vunpack.c.l.b16 %v1745
        %v1812 = vunpack.c.h.b16 %v1745
        %v1813 = vunpack.c.l.b16 %v1746
        %v1814 = vunpack.c.h.b16 %v1746
        %v1815 = vunpack.c.l.b16 %v1747
        %v1816 = vunpack.c.h.b16 %v1747
        %v1817 = vunpack.c.l.b16 %v1748
        %v1818 = vunpack.c.h.b16 %v1748
        %v1819 = vunpack.c.l.b16 %v1749
        %v1820 = vunpack.c.h.b16 %v1749
        %v1821 = vunpack.c.l.b16 %v1750
        %v1822 = vunpack.c.h.b16 %v1750
        %v1823 = vunpack.c.l.b16 %v1751
        %v1824 = vunpack.c.h.b16 %v1751
        %v1825 = vunpack.c.l.b16 %v1752
        %v1826 = vunpack.c.h.b16 %v1752
        %v1827 = vunpack.c.l.b16 %v1753
        %v1828 = vunpack.c.h.b16 %v1753
        %v1829 = vunpack.c.l.b16 %v1754
        %v1830 = vunpack.c.h.b16 %v1754
        %v1831 = vunpack.c.l.b16 %v1755
        %v1832 = vunpack.c.h.b16 %v1755
        %v1833 = vunpack.c.l.b16 %v1756
        %v1834 = vunpack.c.h.b16 %v1756
        %v1835 = vunpack.c.l.b16 %v1757
        %v1836 = vunpack.c.h.b16 %v1757
        %v1837 = vunpack.c.l.b16 %v1758
        %v1838 = vunpack.c.h.b16 %v1758
        %v1839 = vunpack.c.l.b16 %v1759
        %v1840 = vunpack.c.h.b16 %v1759
        %v1841 = vunpack.c.l.b16 %v1760
        %v1842 = vunpack.c.h.b16 %v1760
        %v1843 = vunpack.c.l.b16 %v1761
        %v1844 = vunpack.c.h.b16 %v1761
        %v1845 = vunpack.c.l.b16 %v1762
        %v1846 = vunpack.c.h.b16 %v1762
        %v1847 = vunpack.c.l.b16 %v1763
        %v1848 = vunpack.c.h.b16 %v1763
        %v1849 = vunpack.c.l.b16 %v1764
        %v1850 = vunpack.c.h.b16 %v1764
        %v1851 = vunpack.c.l.b16 %v1765
        %v1852 = vunpack.c.h.b16 %v1765
        %v1853 = vunpack.c.l.b16 %v1766
        %v1854 = vunpack.c.h.b16 %v1766
        %v1855 = vunpack.c.l.b16 %v1767
        %v1856 = vunpack.c.h.b16 %v1767
        %v1857 = vunpack.c.l.b16 %v1768
        %v1858 = vunpack.c.h.b16 %v1768
        %v1859 = vunpack.c.l.b16 %v1769
        %v1860 = vunpack.c.h.b16 %v1769
        %v1861 = vunpack.c.l.b16 %v1770
        %v1862 = vunpack.c.h.b16 %v1770
        %v1863 = vunpack.c.l.b16 %v1771
        %v1864 = vunpack.c.h.b16 %v1771
        %v1865 = vunpack.c.l.b16 %v1772
        %v1866 = vunpack.c.h.b16 %v1772
        %v1867 = vunpack.c.l.b16 %v1773
        %v1868 = vunpack.c.h.b16 %v1773
        %v1869 = vunpack.c.l.b16 %v1774
        %v1870 = vunpack.c.h.b16 %v1774
        %v1871 = vpack.c.b16 %v1809, %v1807
        %v1872 = vpack.c.b16 %v1810, %v1808
        %v1873 = vpack.c.b16 %v1813, %v1811
        %v1874 = vpack.c.b16 %v1814, %v1812
        %v1875 = vpack.c.b16 %v1817, %v1815
        %v1876 = vpack.c.b16 %v1818, %v1816
        %v1877 = vpack.c.b16 %v1821, %v1819
        %v1878 = vpack.c.b16 %v1822, %v1820
        %v1879 = vpack.c.b16 %v1825, %v1823
        %v1880 = vpack.c.b16 %v1826, %v1824
        %v1881 = vpack.c.b16 %v1829, %v1827
        %v1882 = vpack.c.b16 %v1830, %v1828
        %v1883 = vpack.c.b16 %v1833, %v1831
        %v1884 = vpack.c.b16 %v1834, %v1832
        %v1885 = vpack.c.b16 %v1837, %v1835
        %v1886 = vpack.c.b16 %v1838, %v1836
        %v1887 = vpack.c.b16 %v1841, %v1839
        %v1888 = vpack.c.b16 %v1842, %v1840
        %v1889 = vpack.c.b16 %v1845, %v1843
        %v1890 = vpack.c.b16 %v1846, %v1844
        %v1891 = vpack.c.b16 %v1849, %v1847
        %v1892 = vpack.c.b16 %v1850, %v1848
        %v1893 = vpack.c.b16 %v1853, %v1851
        %v1894 = vpack.c.b16 %v1854, %v1852
        %v1895 = vpack.c.b16 %v1857, %v1855
        %v1896 = vpack.c.b16 %v1858, %v1856
        %v1897 = vpack.c.b16 %v1861, %v1859
        %v1898 = vpack.c.b16 %v1862, %v1860
        %v1899 = vpack.c.b16 %v1865, %v1863
        %v1900 = vpack.c.b16 %v1866, %v1864
        %v1901 = vpack.c.b16 %v1869, %v1867
        %v1902 = vpack.c.b16 %v1870, %v1868
        %1935 = vmatpush.bf16.msra.mxu0 %v1885
        %1936 = vmatpush.bf16.msra.mxu0 %v1883
        %1937 = vmatpush.bf16.msra.mxu0 %v1881
        %1938 = vmatpush.bf16.msra.mxu0 %v1879
        %1939 = vmatpush.bf16.msra.mxu0 %v1877
        %1940 = vmatpush.bf16.msra.mxu0 %v1875
        %1941 = vmatpush.bf16.msra.mxu0 %v1873
        %1942 = vmatpush.bf16.msra.mxu0 %v1871
        %1943 = vmatmul.bf16.gmra.mxu0 %v1735
        %v1944 = vpop.f32.mrf.mxu0
        %v1945 = vadd.f32 0.0, %v1944
        %v1946 = vpop.f32.mrf.mxu0
        %v1947 = vadd.f32 0.0, %v1946
        %1948 = vmatmul.bf16.gmra.mxu0 %v1737
        %v1949 = vpop.f32.mrf.mxu0
        %v1950 = vadd.f32 0.0, %v1949
        %v1951 = vpop.f32.mrf.mxu0
        %v1952 = vadd.f32 0.0, %v1951
        %1953 = vmatmul.bf16.gmra.mxu0 %v1739
        %v1954 = vpop.f32.mrf.mxu0
        %v1955 = vadd.f32 0.0, %v1954
        %v1956 = vpop.f32.mrf.mxu0
        %v1957 = vadd.f32 0.0, %v1956
        %1958 = vmatmul.bf16.gmra.mxu0 %v1741
        %v1959 = vpop.f32.mrf.mxu0
        %v1960 = vadd.f32 0.0, %v1959
        %v1961 = vpop.f32.mrf.mxu0
        %v1962 = vadd.f32 0.0, %v1961
        %1963 = vdwg.mxu0
        %1964 = vmatpush.bf16.msra.mxu0 %v1901
        %1965 = vmatpush.bf16.msra.mxu0 %v1899
        %1966 = vmatpush.bf16.msra.mxu0 %v1897
        %1967 = vmatpush.bf16.msra.mxu0 %v1895
        %1968 = vmatpush.bf16.msra.mxu0 %v1893
        %1969 = vmatpush.bf16.msra.mxu0 %v1891
        %1970 = vmatpush.bf16.msra.mxu0 %v1889
        %1971 = vmatpush.bf16.msra.mxu0 %v1887
        %1972 = vmatmul.bf16.gmra.mxu0 %v1736
        %v1973 = vpop.f32.mrf.mxu0
        %v1974 = vadd.f32 %v1945, %v1973
        %v1975 = vpop.f32.mrf.mxu0
        %v1976 = vadd.f32 %v1947, %v1975
        %1977 = vmatmul.bf16.gmra.mxu0 %v1738
        %v1978 = vpop.f32.mrf.mxu0
        %v1979 = vadd.f32 %v1950, %v1978
        %v1980 = vpop.f32.mrf.mxu0
        %v1981 = vadd.f32 %v1952, %v1980
        %1982 = vmatmul.bf16.gmra.mxu0 %v1740
        %v1983 = vpop.f32.mrf.mxu0
        %v1984 = vadd.f32 %v1955, %v1983
        %v1985 = vpop.f32.mrf.mxu0
        %v1986 = vadd.f32 %v1957, %v1985
        %1987 = vmatmul.bf16.gmra.mxu0 %v1742
        %v1988 = vpop.f32.mrf.mxu0
        %v1989 = vadd.f32 %v1960, %v1988
        %v1990 = vpop.f32.mrf.mxu0
        %v1991 = vadd.f32 %v1962, %v1990
        %1992 = vdwg.mxu0
        %1993 = vmatpush.bf16.msra.mxu0 %v1886
        %1994 = vmatpush.bf16.msra.mxu0 %v1884
        %1995 = vmatpush.bf16.msra.mxu0 %v1882
        %1996 = vmatpush.bf16.msra.mxu0 %v1880
        %1997 = vmatpush.bf16.msra.mxu0 %v1878
        %1998 = vmatpush.bf16.msra.mxu0 %v1876
        %1999 = vmatpush.bf16.msra.mxu0 %v1874
        %2000 = vmatpush.bf16.msra.mxu0 %v1872
        %2001 = vmatmul.bf16.gmra.mxu0 %v1735
        %v2002 = vpop.f32.mrf.mxu0
        %v2003 = vadd.f32 0.0, %v2002
        %v2004 = vpop.f32.mrf.mxu0
        %v2005 = vadd.f32 0.0, %v2004
        %2006 = vmatmul.bf16.gmra.mxu0 %v1737
        %v2007 = vpop.f32.mrf.mxu0
        %v2008 = vadd.f32 0.0, %v2007
        %v2009 = vpop.f32.mrf.mxu0
        %v2010 = vadd.f32 0.0, %v2009
        %2011 = vmatmul.bf16.gmra.mxu0 %v1739
        %v2012 = vpop.f32.mrf.mxu0
        %v2013 = vadd.f32 0.0, %v2012
        %v2014 = vpop.f32.mrf.mxu0
        %v2015 = vadd.f32 0.0, %v2014
        %2016 = vmatmul.bf16.gmra.mxu0 %v1741
        %v2017 = vpop.f32.mrf.mxu0
        %v2018 = vadd.f32 0.0, %v2017
        %v2019 = vpop.f32.mrf.mxu0
        %v2020 = vadd.f32 0.0, %v2019
        %2021 = vdwg.mxu0
        %2022 = vmatpush.bf16.msra.mxu0 %v1902
        %2023 = vmatpush.bf16.msra.mxu0 %v1900
        %2024 = vmatpush.bf16.msra.mxu0 %v1898
        %2025 = vmatpush.bf16.msra.mxu0 %v1896
        %2026 = vmatpush.bf16.msra.mxu0 %v1894
        %2027 = vmatpush.bf16.msra.mxu0 %v1892
        %2028 = vmatpush.bf16.msra.mxu0 %v1890
        %2029 = vmatpush.bf16.msra.mxu0 %v1888
        %2030 = vmatmul.bf16.gmra.mxu0 %v1736
        %v2031 = vpop.f32.mrf.mxu0
        %v2032 = vadd.f32 %v2003, %v2031
        %v2033 = vpop.f32.mrf.mxu0
        %v2034 = vadd.f32 %v2005, %v2033
        %2035 = vmatmul.bf16.gmra.mxu0 %v1738
        %v2036 = vpop.f32.mrf.mxu0
        %v2037 = vadd.f32 %v2008, %v2036
        %v2038 = vpop.f32.mrf.mxu0
        %v2039 = vadd.f32 %v2010, %v2038
        %2040 = vmatmul.bf16.gmra.mxu0 %v1740
        %v2041 = vpop.f32.mrf.mxu0
        %v2042 = vadd.f32 %v2013, %v2041
        %v2043 = vpop.f32.mrf.mxu0
        %v2044 = vadd.f32 %v2015, %v2043
        %2045 = vmatmul.bf16.gmra.mxu0 %v1742
        %v2046 = vpop.f32.mrf.mxu0
        %v2047 = vadd.f32 %v2018, %v2046
        %v2048 = vpop.f32.mrf.mxu0
        %v2049 = vadd.f32 %v2020, %v2048
        %2050 = vdwg.mxu0
        %2059 = vrot.lane.b32.xlu0 %v1974, 64
        %v2060 = vpop.permute.xlu0 %2059
        %2061 = vrot.lane.b32.xlu0 %v1976, 64
        %v2062 = vpop.permute.xlu0 %2061
        %2063 = vrot.lane.b32.xlu0 %v1979, 64
        %v2064 = vpop.permute.xlu0 %2063
        %2065 = vrot.lane.b32.xlu0 %v1981, 64
        %v2066 = vpop.permute.xlu0 %2065
        %2067 = vrot.lane.b32.xlu0 %v1984, 64
        %v2068 = vpop.permute.xlu0 %2067
        %2069 = vrot.lane.b32.xlu0 %v1986, 64
        %v2070 = vpop.permute.xlu0 %2069
        %2071 = vrot.lane.b32.xlu0 %v1989, 64
        %v2072 = vpop.permute.xlu0 %2071
        %2073 = vrot.lane.b32.xlu0 %v1991, 64
        %v2074 = vpop.permute.xlu0 %2073
        %v2083 = vmax.f32 %v1974, %v2060
        %v2084 = vmax.f32 %v1976, %v2062
        %v2085 = vmax.f32 %v1979, %v2064
        %v2086 = vmax.f32 %v1981, %v2066
        %v2087 = vmax.f32 %v1984, %v2068
        %v2088 = vmax.f32 %v1986, %v2070
        %v2089 = vmax.f32 %v1989, %v2072
        %v2090 = vmax.f32 %v1991, %v2074
        %2099 = vrot.lane.b32.xlu0 %v2032, 64
        %v2100 = vpop.permute.xlu0 %2099
        %2101 = vrot.lane.b32.xlu0 %v2034, 64
        %v2102 = vpop.permute.xlu0 %2101
        %2103 = vrot.lane.b32.xlu0 %v2037, 64
        %v2104 = vpop.permute.xlu0 %2103
        %2105 = vrot.lane.b32.xlu0 %v2039, 64
        %v2106 = vpop.permute.xlu0 %2105
        %2107 = vrot.lane.b32.xlu0 %v2042, 64
        %v2108 = vpop.permute.xlu0 %2107
        %2109 = vrot.lane.b32.xlu0 %v2044, 64
        %v2110 = vpop.permute.xlu0 %2109
        %2111 = vrot.lane.b32.xlu0 %v2047, 64
        %v2112 = vpop.permute.xlu0 %2111
        %2113 = vrot.lane.b32.xlu0 %v2049, 64
        %v2114 = vpop.permute.xlu0 %2113
        %v2123 = vmax.f32 %v2032, %v2100
        %v2124 = vmax.f32 %v2034, %v2102
        %v2125 = vmax.f32 %v2037, %v2104
        %v2126 = vmax.f32 %v2039, %v2106
        %v2127 = vmax.f32 %v2042, %v2108
        %v2128 = vmax.f32 %v2044, %v2110
        %v2129 = vmax.f32 %v2047, %v2112
        %v2130 = vmax.f32 %v2049, %v2114
        %v2131 = vmax.f32 %v2083, %v2123
        %v2132 = vmax.f32 %v2084, %v2124
        %v2133 = vmax.f32 %v2085, %v2125
        %v2134 = vmax.f32 %v2086, %v2126
        %v2135 = vmax.f32 %v2087, %v2127
        %v2136 = vmax.f32 %v2088, %v2128
        %v2137 = vmax.f32 %v2089, %v2129
        %v2138 = vmax.f32 %v2090, %v2130
        %v2139 = vld [vmem:[%s7 + $0x20] ss:$0 sm:$0xff]
        %v2140 = vadd.f32 %v2131, %v2139
        %v2141 = vadd.f32 %v2132, %v2139
        %v2142 = vadd.f32 %v2133, %v2139
        %v2143 = vadd.f32 %v2134, %v2139
        %v2144 = vadd.f32 %v2135, %v2139
        %v2145 = vadd.f32 %v2136, %v2139
        %v2146 = vadd.f32 %v2137, %v2139
        %v2147 = vadd.f32 %v2138, %v2139
        %v2148 = vmax.f32 %v2140, 0.0
        %v2149 = vmax.f32 %v2141, 0.0
        %v2150 = vmax.f32 %v2142, 0.0
        %v2151 = vmax.f32 %v2143, 0.0
        %v2152 = vmax.f32 %v2144, 0.0
        %v2153 = vmax.f32 %v2145, 0.0
        %v2154 = vmax.f32 %v2146, 0.0
        %v2155 = vmax.f32 %v2147, 0.0
        %v2156 = vld [vmem:[%s6] sm:$0xf]
        %v2157 = vld [vmem:[%s6 + $0x4] sm:$0xf]
        %v2158 = vld [vmem:[%s6 + $0x8] sm:$0xf]
        %v2159 = vld [vmem:[%s6 + $0xc] sm:$0xf]
        %v2160 = vld [vmem:[%s6 + $0x10] sm:$0xf]
        %v2161 = vld [vmem:[%s6 + $0x14] sm:$0xf]
        %v2162 = vld [vmem:[%s6 + $0x18] sm:$0xf]
        %v2163 = vld [vmem:[%s6 + $0x1c] sm:$0xf]
        %v2164 = vunpack.c.l.bf16 %v2156
        %v2165 = vunpack.c.l.bf16 %v2157
        %v2166 = vunpack.c.l.bf16 %v2158
        %v2167 = vunpack.c.l.bf16 %v2159
        %v2168 = vunpack.c.l.bf16 %v2160
        %v2169 = vunpack.c.l.bf16 %v2161
        %v2170 = vunpack.c.l.bf16 %v2162
        %v2171 = vunpack.c.l.bf16 %v2163
        %v2172 = vld [vmem:[%s7 + $0x1] ss:$0 sm:$0xff]
        %vm2173 = vcmask 523264
        %v2175 = vsel %vm2173, %v2148, 0
        %v2178 = vsel %vm2173, %v2149, 0
        %v2181 = vsel %vm2173, %v2150, 0
        %v2184 = vsel %vm2173, %v2151, 0
        %v2187 = vsel %vm2173, %v2152, 0
        %v2190 = vsel %vm2173, %v2153, 0
        %v2193 = vsel %vm2173, %v2154, 0
        %v2196 = vsel %vm2173, %v2155, 0
        %2198 = vmatpush.msra.mxu0 0.0
        %2199 = vmatpush.msra.mxu0 0.0
        %2200 = vmatpush.msra.mxu0 0.0
        %2201 = vmatpush.msra.mxu0 0.0
        %2202 = vmatpush.msra.mxu0 0.0
        %2203 = vmatpush.msra.mxu0 0.0
        %2204 = vmatpush.msra.mxu0 0.0
        %2205 = vmatpush.msra.mxu0 0.0
        %2206 = vmatpush.msra.mxu0 %v2171
        %2207 = vmatpush.msra.mxu0 %v2170
        %2208 = vmatpush.msra.mxu0 %v2169
        %2209 = vmatpush.msra.mxu0 %v2168
        %2210 = vmatpush.msra.mxu0 %v2167
        %2211 = vmatpush.msra.mxu0 %v2166
        %2212 = vmatpush.msra.mxu0 %v2165
        %2213 = vmatpush.msra.mxu0 %v2164
        %2214 = vmatmul.f32.gmra.mxu0 %v2175
        %v2215 = vpop.f32.mrf.mxu0
        %v2216 = vadd.f32 %v2172, %v2215
        %2217 = vmatmul.f32.gmra.mxu0 %v2178
        %v2218 = vpop.f32.mrf.mxu0
        %v2219 = vadd.f32 %v2172, %v2218
        %2220 = vmatmul.f32.gmra.mxu0 %v2181
        %v2221 = vpop.f32.mrf.mxu0
        %v2222 = vadd.f32 %v2172, %v2221
        %2223 = vmatmul.f32.gmra.mxu0 %v2184
        %v2224 = vpop.f32.mrf.mxu0
        %v2225 = vadd.f32 %v2172, %v2224
        %2226 = vmatmul.f32.gmra.mxu0 %v2187
        %v2227 = vpop.f32.mrf.mxu0
        %v2228 = vadd.f32 %v2172, %v2227
        %2229 = vmatmul.f32.gmra.mxu0 %v2190
        %v2230 = vpop.f32.mrf.mxu0
        %v2231 = vadd.f32 %v2172, %v2230
        %2232 = vmatmul.f32.gmra.mxu0 %v2193
        %v2233 = vpop.f32.mrf.mxu0
        %v2234 = vadd.f32 %v2172, %v2233
        %2235 = vmatmul.f32.gmra.mxu0 %v2196
        %v2236 = vpop.f32.mrf.mxu0
        %v2237 = vadd.f32 %v2172, %v2236
        %2238 = vdwg.mxu0
        %v2239 = vmax.f32 %v2216, 0.0
        %v2240 = vmax.f32 %v2219, 0.0
        %v2241 = vmax.f32 %v2222, 0.0
        %v2242 = vmax.f32 %v2225, 0.0
        %v2243 = vmax.f32 %v2228, 0.0
        %v2244 = vmax.f32 %v2231, 0.0
        %v2245 = vmax.f32 %v2234, 0.0
        %v2246 = vmax.f32 %v2237, 0.0
        %v2247 = vld [vmem:[%s379] sm:$0xff]
        %v2248 = vld [vmem:[%s379 + $0x8] sm:$0xff]
        %v2249 = vld [vmem:[%s379 + $0x10] sm:$0xff]
        %v2250 = vld [vmem:[%s379 + $0x18] sm:$0xff]
        %v2251 = vld [vmem:[%s379 + $0x20] sm:$0xff]
        %v2252 = vld [vmem:[%s379 + $0x28] sm:$0xff]
        %v2253 = vld [vmem:[%s379 + $0x30] sm:$0xff]
        %v2254 = vld [vmem:[%s379 + $0x38] sm:$0xff]
        %v2255 = vld [vmem:[%s379 + $0x40] sm:$0xff]
        %v2256 = vld [vmem:[%s379 + $0x48] sm:$0xff]
        %v2257 = vld [vmem:[%s379 + $0x50] sm:$0xff]
        %v2258 = vld [vmem:[%s379 + $0x58] sm:$0xff]
        %v2259 = vld [vmem:[%s379 + $0x60] sm:$0xff]
        %v2260 = vld [vmem:[%s379 + $0x68] sm:$0xff]
        %v2261 = vld [vmem:[%s379 + $0x70] sm:$0xff]
        %v2262 = vld [vmem:[%s379 + $0x78] sm:$0xff]
        %v2263 = vpack.c.bf16 %v2249, %v2247
        %v2264 = vpack.c.bf16 %v2250, %v2248
        %v2265 = vpack.c.bf16 %v2253, %v2251
        %v2266 = vpack.c.bf16 %v2254, %v2252
        %v2267 = vpack.c.bf16 %v2257, %v2255
        %v2268 = vpack.c.bf16 %v2258, %v2256
        %v2269 = vpack.c.bf16 %v2261, %v2259
        %v2270 = vpack.c.bf16 %v2262, %v2260
        %v2271 = vld [vmem:[#allocation4] sm:$0xff]
        %v2272 = vld [vmem:[#allocation4 + $0x8] sm:$0xff]
        %v2273 = vld [vmem:[#allocation4 + $0x10] sm:$0xff]
        %v2274 = vld [vmem:[#allocation4 + $0x18] sm:$0xff]
        %v2275 = vld [vmem:[#allocation4 + $0x20] sm:$0xff]
        %v2276 = vld [vmem:[#allocation4 + $0x28] sm:$0xff]
        %v2277 = vld [vmem:[#allocation4 + $0x30] sm:$0xff]
        %v2278 = vld [vmem:[#allocation4 + $0x38] sm:$0xff]
        %v2279 = vld [vmem:[#allocation4 + $0x40] sm:$0xff]
        %v2280 = vld [vmem:[#allocation4 + $0x48] sm:$0xff]
        %v2281 = vld [vmem:[#allocation4 + $0x50] sm:$0xff]
        %v2282 = vld [vmem:[#allocation4 + $0x58] sm:$0xff]
        %v2283 = vld [vmem:[#allocation4 + $0x60] sm:$0xff]
        %v2284 = vld [vmem:[#allocation4 + $0x68] sm:$0xff]
        %v2285 = vld [vmem:[#allocation4 + $0x70] sm:$0xff]
        %v2286 = vld [vmem:[#allocation4 + $0x78] sm:$0xff]
        %v2287 = vld [vmem:[#allocation4 + $0x80] sm:$0xff]
        %v2288 = vld [vmem:[#allocation4 + $0x88] sm:$0xff]
        %v2289 = vld [vmem:[#allocation4 + $0x90] sm:$0xff]
        %v2290 = vld [vmem:[#allocation4 + $0x98] sm:$0xff]
        %v2291 = vld [vmem:[#allocation4 + $0xa0] sm:$0xff]
        %v2292 = vld [vmem:[#allocation4 + $0xa8] sm:$0xff]
        %v2293 = vld [vmem:[#allocation4 + $0xb0] sm:$0xff]
        %v2294 = vld [vmem:[#allocation4 + $0xb8] sm:$0xff]
        %v2295 = vld [vmem:[#allocation4 + $0xc0] sm:$0xff]
        %v2296 = vld [vmem:[#allocation4 + $0xc8] sm:$0xff]
        %v2297 = vld [vmem:[#allocation4 + $0xd0] sm:$0xff]
        %v2298 = vld [vmem:[#allocation4 + $0xd8] sm:$0xff]
        %v2299 = vld [vmem:[#allocation4 + $0xe0] sm:$0xff]
        %v2300 = vld [vmem:[#allocation4 + $0xe8] sm:$0xff]
        %v2301 = vld [vmem:[#allocation4 + $0xf0] sm:$0xff]
        %v2302 = vld [vmem:[#allocation4 + $0xf8] sm:$0xff]
        %v2303 = vld [vmem:[#allocation4 + $0x100] sm:$0xff]
        %v2304 = vld [vmem:[#allocation4 + $0x108] sm:$0xff]
        %v2305 = vld [vmem:[#allocation4 + $0x110] sm:$0xff]
        %v2306 = vld [vmem:[#allocation4 + $0x118] sm:$0xff]
        %v2307 = vld [vmem:[#allocation4 + $0x120] sm:$0xff]
        %v2308 = vld [vmem:[#allocation4 + $0x128] sm:$0xff]
        %v2309 = vld [vmem:[#allocation4 + $0x130] sm:$0xff]
        %v2310 = vld [vmem:[#allocation4 + $0x138] sm:$0xff]
        %v2311 = vld [vmem:[#allocation4 + $0x140] sm:$0xff]
        %v2312 = vld [vmem:[#allocation4 + $0x148] sm:$0xff]
        %v2313 = vld [vmem:[#allocation4 + $0x150] sm:$0xff]
        %v2314 = vld [vmem:[#allocation4 + $0x158] sm:$0xff]
        %v2315 = vld [vmem:[#allocation4 + $0x160] sm:$0xff]
        %v2316 = vld [vmem:[#allocation4 + $0x168] sm:$0xff]
        %v2317 = vld [vmem:[#allocation4 + $0x170] sm:$0xff]
        %v2318 = vld [vmem:[#allocation4 + $0x178] sm:$0xff]
        %v2319 = vld [vmem:[#allocation4 + $0x180] sm:$0xff]
        %v2320 = vld [vmem:[#allocation4 + $0x188] sm:$0xff]
        %v2321 = vld [vmem:[#allocation4 + $0x190] sm:$0xff]
        %v2322 = vld [vmem:[#allocation4 + $0x198] sm:$0xff]
        %v2323 = vld [vmem:[#allocation4 + $0x1a0] sm:$0xff]
        %v2324 = vld [vmem:[#allocation4 + $0x1a8] sm:$0xff]
        %v2325 = vld [vmem:[#allocation4 + $0x1b0] sm:$0xff]
        %v2326 = vld [vmem:[#allocation4 + $0x1b8] sm:$0xff]
        %v2327 = vld [vmem:[#allocation4 + $0x1c0] sm:$0xff]
        %v2328 = vld [vmem:[#allocation4 + $0x1c8] sm:$0xff]
        %v2329 = vld [vmem:[#allocation4 + $0x1d0] sm:$0xff]
        %v2330 = vld [vmem:[#allocation4 + $0x1d8] sm:$0xff]
        %v2331 = vld [vmem:[#allocation4 + $0x1e0] sm:$0xff]
        %v2332 = vld [vmem:[#allocation4 + $0x1e8] sm:$0xff]
        %v2333 = vld [vmem:[#allocation4 + $0x1f0] sm:$0xff]
        %v2334 = vld [vmem:[#allocation4 + $0x1f8] sm:$0xff]
        %v2335 = vld [vmem:[#allocation4 + $0x200] sm:$0xff]
        %v2336 = vld [vmem:[#allocation4 + $0x208] sm:$0xff]
        %v2337 = vld [vmem:[#allocation4 + $0x210] sm:$0xff]
        %v2338 = vld [vmem:[#allocation4 + $0x218] sm:$0xff]
        %v2339 = vld [vmem:[#allocation4 + $0x220] sm:$0xff]
        %v2340 = vld [vmem:[#allocation4 + $0x228] sm:$0xff]
        %v2341 = vld [vmem:[#allocation4 + $0x230] sm:$0xff]
        %v2342 = vld [vmem:[#allocation4 + $0x238] sm:$0xff]
        %v2343 = vld [vmem:[#allocation4 + $0x240] sm:$0xff]
        %v2344 = vld [vmem:[#allocation4 + $0x248] sm:$0xff]
        %v2345 = vld [vmem:[#allocation4 + $0x250] sm:$0xff]
        %v2346 = vld [vmem:[#allocation4 + $0x258] sm:$0xff]
        %v2347 = vld [vmem:[#allocation4 + $0x260] sm:$0xff]
        %v2348 = vld [vmem:[#allocation4 + $0x268] sm:$0xff]
        %v2349 = vld [vmem:[#allocation4 + $0x270] sm:$0xff]
        %v2350 = vld [vmem:[#allocation4 + $0x278] sm:$0xff]
        %v2351 = vld [vmem:[#allocation4 + $0x280] sm:$0xff]
        %v2352 = vld [vmem:[#allocation4 + $0x288] sm:$0xff]
        %v2353 = vld [vmem:[#allocation4 + $0x290] sm:$0xff]
        %v2354 = vld [vmem:[#allocation4 + $0x298] sm:$0xff]
        %v2355 = vld [vmem:[#allocation4 + $0x2a0] sm:$0xff]
        %v2356 = vld [vmem:[#allocation4 + $0x2a8] sm:$0xff]
        %v2357 = vld [vmem:[#allocation4 + $0x2b0] sm:$0xff]
        %v2358 = vld [vmem:[#allocation4 + $0x2b8] sm:$0xff]
        %v2359 = vld [vmem:[#allocation4 + $0x2c0] sm:$0xff]
        %v2360 = vld [vmem:[#allocation4 + $0x2c8] sm:$0xff]
        %v2361 = vld [vmem:[#allocation4 + $0x2d0] sm:$0xff]
        %v2362 = vld [vmem:[#allocation4 + $0x2d8] sm:$0xff]
        %v2363 = vld [vmem:[#allocation4 + $0x2e0] sm:$0xff]
        %v2364 = vld [vmem:[#allocation4 + $0x2e8] sm:$0xff]
        %v2365 = vld [vmem:[#allocation4 + $0x2f0] sm:$0xff]
        %v2366 = vld [vmem:[#allocation4 + $0x2f8] sm:$0xff]
        %v2367 = vld [vmem:[#allocation4 + $0x300] sm:$0xff]
        %v2368 = vld [vmem:[#allocation4 + $0x308] sm:$0xff]
        %v2369 = vld [vmem:[#allocation4 + $0x310] sm:$0xff]
        %v2370 = vld [vmem:[#allocation4 + $0x318] sm:$0xff]
        %v2371 = vld [vmem:[#allocation4 + $0x320] sm:$0xff]
        %v2372 = vld [vmem:[#allocation4 + $0x328] sm:$0xff]
        %v2373 = vld [vmem:[#allocation4 + $0x330] sm:$0xff]
        %v2374 = vld [vmem:[#allocation4 + $0x338] sm:$0xff]
        %v2375 = vld [vmem:[#allocation4 + $0x340] sm:$0xff]
        %v2376 = vld [vmem:[#allocation4 + $0x348] sm:$0xff]
        %v2377 = vld [vmem:[#allocation4 + $0x350] sm:$0xff]
        %v2378 = vld [vmem:[#allocation4 + $0x358] sm:$0xff]
        %v2379 = vld [vmem:[#allocation4 + $0x360] sm:$0xff]
        %v2380 = vld [vmem:[#allocation4 + $0x368] sm:$0xff]
        %v2381 = vld [vmem:[#allocation4 + $0x370] sm:$0xff]
        %v2382 = vld [vmem:[#allocation4 + $0x378] sm:$0xff]
        %v2383 = vld [vmem:[#allocation4 + $0x380] sm:$0xff]
        %v2384 = vld [vmem:[#allocation4 + $0x388] sm:$0xff]
        %v2385 = vld [vmem:[#allocation4 + $0x390] sm:$0xff]
        %v2386 = vld [vmem:[#allocation4 + $0x398] sm:$0xff]
        %v2387 = vld [vmem:[#allocation4 + $0x3a0] sm:$0xff]
        %v2388 = vld [vmem:[#allocation4 + $0x3a8] sm:$0xff]
        %v2389 = vld [vmem:[#allocation4 + $0x3b0] sm:$0xff]
        %v2390 = vld [vmem:[#allocation4 + $0x3b8] sm:$0xff]
        %v2391 = vld [vmem:[#allocation4 + $0x3c0] sm:$0xff]
        %v2392 = vld [vmem:[#allocation4 + $0x3c8] sm:$0xff]
        %v2393 = vld [vmem:[#allocation4 + $0x3d0] sm:$0xff]
        %v2394 = vld [vmem:[#allocation4 + $0x3d8] sm:$0xff]
        %v2395 = vld [vmem:[#allocation4 + $0x3e0] sm:$0xff]
        %v2396 = vld [vmem:[#allocation4 + $0x3e8] sm:$0xff]
        %v2397 = vld [vmem:[#allocation4 + $0x3f0] sm:$0xff]
        %v2398 = vld [vmem:[#allocation4 + $0x3f8] sm:$0xff]
        %v2527 = vunpack.c.l.b16 %v2271
        %v2528 = vunpack.c.h.b16 %v2271
        %v2529 = vunpack.c.l.b16 %v2272
        %v2530 = vunpack.c.h.b16 %v2272
        %v2531 = vunpack.c.l.b16 %v2273
        %v2532 = vunpack.c.h.b16 %v2273
        %v2533 = vunpack.c.l.b16 %v2274
        %v2534 = vunpack.c.h.b16 %v2274
        %v2535 = vunpack.c.l.b16 %v2275
        %v2536 = vunpack.c.h.b16 %v2275
        %v2537 = vunpack.c.l.b16 %v2276
        %v2538 = vunpack.c.h.b16 %v2276
        %v2539 = vunpack.c.l.b16 %v2277
        %v2540 = vunpack.c.h.b16 %v2277
        %v2541 = vunpack.c.l.b16 %v2278
        %v2542 = vunpack.c.h.b16 %v2278
        %v2543 = vunpack.c.l.b16 %v2279
        %v2544 = vunpack.c.h.b16 %v2279
        %v2545 = vunpack.c.l.b16 %v2280
        %v2546 = vunpack.c.h.b16 %v2280
        %v2547 = vunpack.c.l.b16 %v2281
        %v2548 = vunpack.c.h.b16 %v2281
        %v2549 = vunpack.c.l.b16 %v2282
        %v2550 = vunpack.c.h.b16 %v2282
        %v2551 = vunpack.c.l.b16 %v2283
        %v2552 = vunpack.c.h.b16 %v2283
        %v2553 = vunpack.c.l.b16 %v2284
        %v2554 = vunpack.c.h.b16 %v2284
        %v2555 = vunpack.c.l.b16 %v2285
        %v2556 = vunpack.c.h.b16 %v2285
        %v2557 = vunpack.c.l.b16 %v2286
        %v2558 = vunpack.c.h.b16 %v2286
        %v2559 = vunpack.c.l.b16 %v2287
        %v2560 = vunpack.c.h.b16 %v2287
        %v2561 = vunpack.c.l.b16 %v2288
        %v2562 = vunpack.c.h.b16 %v2288
        %v2563 = vunpack.c.l.b16 %v2289
        %v2564 = vunpack.c.h.b16 %v2289
        %v2565 = vunpack.c.l.b16 %v2290
        %v2566 = vunpack.c.h.b16 %v2290
        %v2567 = vunpack.c.l.b16 %v2291
        %v2568 = vunpack.c.h.b16 %v2291
        %v2569 = vunpack.c.l.b16 %v2292
        %v2570 = vunpack.c.h.b16 %v2292
        %v2571 = vunpack.c.l.b16 %v2293
        %v2572 = vunpack.c.h.b16 %v2293
        %v2573 = vunpack.c.l.b16 %v2294
        %v2574 = vunpack.c.h.b16 %v2294
        %v2575 = vunpack.c.l.b16 %v2295
        %v2576 = vunpack.c.h.b16 %v2295
        %v2577 = vunpack.c.l.b16 %v2296
        %v2578 = vunpack.c.h.b16 %v2296
        %v2579 = vunpack.c.l.b16 %v2297
        %v2580 = vunpack.c.h.b16 %v2297
        %v2581 = vunpack.c.l.b16 %v2298
        %v2582 = vunpack.c.h.b16 %v2298
        %v2583 = vunpack.c.l.b16 %v2299
        %v2584 = vunpack.c.h.b16 %v2299
        %v2585 = vunpack.c.l.b16 %v2300
        %v2586 = vunpack.c.h.b16 %v2300
        %v2587 = vunpack.c.l.b16 %v2301
        %v2588 = vunpack.c.h.b16 %v2301
        %v2589 = vunpack.c.l.b16 %v2302
        %v2590 = vunpack.c.h.b16 %v2302
        %v2591 = vunpack.c.l.b16 %v2303
        %v2592 = vunpack.c.h.b16 %v2303
        %v2593 = vunpack.c.l.b16 %v2304
        %v2594 = vunpack.c.h.b16 %v2304
        %v2595 = vunpack.c.l.b16 %v2305
        %v2596 = vunpack.c.h.b16 %v2305
        %v2597 = vunpack.c.l.b16 %v2306
        %v2598 = vunpack.c.h.b16 %v2306
        %v2599 = vunpack.c.l.b16 %v2307
        %v2600 = vunpack.c.h.b16 %v2307
        %v2601 = vunpack.c.l.b16 %v2308
        %v2602 = vunpack.c.h.b16 %v2308
        %v2603 = vunpack.c.l.b16 %v2309
        %v2604 = vunpack.c.h.b16 %v2309
        %v2605 = vunpack.c.l.b16 %v2310
        %v2606 = vunpack.c.h.b16 %v2310
        %v2607 = vunpack.c.l.b16 %v2311
        %v2608 = vunpack.c.h.b16 %v2311
        %v2609 = vunpack.c.l.b16 %v2312
        %v2610 = vunpack.c.h.b16 %v2312
        %v2611 = vunpack.c.l.b16 %v2313
        %v2612 = vunpack.c.h.b16 %v2313
        %v2613 = vunpack.c.l.b16 %v2314
        %v2614 = vunpack.c.h.b16 %v2314
        %v2615 = vunpack.c.l.b16 %v2315
        %v2616 = vunpack.c.h.b16 %v2315
        %v2617 = vunpack.c.l.b16 %v2316
        %v2618 = vunpack.c.h.b16 %v2316
        %v2619 = vunpack.c.l.b16 %v2317
        %v2620 = vunpack.c.h.b16 %v2317
        %v2621 = vunpack.c.l.b16 %v2318
        %v2622 = vunpack.c.h.b16 %v2318
        %v2623 = vunpack.c.l.b16 %v2319
        %v2624 = vunpack.c.h.b16 %v2319
        %v2625 = vunpack.c.l.b16 %v2320
        %v2626 = vunpack.c.h.b16 %v2320
        %v2627 = vunpack.c.l.b16 %v2321
        %v2628 = vunpack.c.h.b16 %v2321
        %v2629 = vunpack.c.l.b16 %v2322
        %v2630 = vunpack.c.h.b16 %v2322
        %v2631 = vunpack.c.l.b16 %v2323
        %v2632 = vunpack.c.h.b16 %v2323
        %v2633 = vunpack.c.l.b16 %v2324
        %v2634 = vunpack.c.h.b16 %v2324
        %v2635 = vunpack.c.l.b16 %v2325
        %v2636 = vunpack.c.h.b16 %v2325
        %v2637 = vunpack.c.l.b16 %v2326
        %v2638 = vunpack.c.h.b16 %v2326
        %v2639 = vunpack.c.l.b16 %v2327
        %v2640 = vunpack.c.h.b16 %v2327
        %v2641 = vunpack.c.l.b16 %v2328
        %v2642 = vunpack.c.h.b16 %v2328
        %v2643 = vunpack.c.l.b16 %v2329
        %v2644 = vunpack.c.h.b16 %v2329
        %v2645 = vunpack.c.l.b16 %v2330
        %v2646 = vunpack.c.h.b16 %v2330
        %v2647 = vunpack.c.l.b16 %v2331
        %v2648 = vunpack.c.h.b16 %v2331
        %v2649 = vunpack.c.l.b16 %v2332
        %v2650 = vunpack.c.h.b16 %v2332
        %v2651 = vunpack.c.l.b16 %v2333
        %v2652 = vunpack.c.h.b16 %v2333
        %v2653 = vunpack.c.l.b16 %v2334
        %v2654 = vunpack.c.h.b16 %v2334
        %v2655 = vunpack.c.l.b16 %v2335
        %v2656 = vunpack.c.h.b16 %v2335
        %v2657 = vunpack.c.l.b16 %v2336
        %v2658 = vunpack.c.h.b16 %v2336
        %v2659 = vunpack.c.l.b16 %v2337
        %v2660 = vunpack.c.h.b16 %v2337
        %v2661 = vunpack.c.l.b16 %v2338
        %v2662 = vunpack.c.h.b16 %v2338
        %v2663 = vunpack.c.l.b16 %v2339
        %v2664 = vunpack.c.h.b16 %v2339
        %v2665 = vunpack.c.l.b16 %v2340
        %v2666 = vunpack.c.h.b16 %v2340
        %v2667 = vunpack.c.l.b16 %v2341
        %v2668 = vunpack.c.h.b16 %v2341
        %v2669 = vunpack.c.l.b16 %v2342
        %v2670 = vunpack.c.h.b16 %v2342
        %v2671 = vunpack.c.l.b16 %v2343
        %v2672 = vunpack.c.h.b16 %v2343
        %v2673 = vunpack.c.l.b16 %v2344
        %v2674 = vunpack.c.h.b16 %v2344
        %v2675 = vunpack.c.l.b16 %v2345
        %v2676 = vunpack.c.h.b16 %v2345
        %v2677 = vunpack.c.l.b16 %v2346
        %v2678 = vunpack.c.h.b16 %v2346
        %v2679 = vunpack.c.l.b16 %v2347
        %v2680 = vunpack.c.h.b16 %v2347
        %v2681 = vunpack.c.l.b16 %v2348
        %v2682 = vunpack.c.h.b16 %v2348
        %v2683 = vunpack.c.l.b16 %v2349
        %v2684 = vunpack.c.h.b16 %v2349
        %v2685 = vunpack.c.l.b16 %v2350
        %v2686 = vunpack.c.h.b16 %v2350
        %v2687 = vunpack.c.l.b16 %v2351
        %v2688 = vunpack.c.h.b16 %v2351
        %v2689 = vunpack.c.l.b16 %v2352
        %v2690 = vunpack.c.h.b16 %v2352
        %v2691 = vunpack.c.l.b16 %v2353
        %v2692 = vunpack.c.h.b16 %v2353
        %v2693 = vunpack.c.l.b16 %v2354
        %v2694 = vunpack.c.h.b16 %v2354
        %v2695 = vunpack.c.l.b16 %v2355
        %v2696 = vunpack.c.h.b16 %v2355
        %v2697 = vunpack.c.l.b16 %v2356
        %v2698 = vunpack.c.h.b16 %v2356
        %v2699 = vunpack.c.l.b16 %v2357
        %v2700 = vunpack.c.h.b16 %v2357
        %v2701 = vunpack.c.l.b16 %v2358
        %v2702 = vunpack.c.h.b16 %v2358
        %v2703 = vunpack.c.l.b16 %v2359
        %v2704 = vunpack.c.h.b16 %v2359
        %v2705 = vunpack.c.l.b16 %v2360
        %v2706 = vunpack.c.h.b16 %v2360
        %v2707 = vunpack.c.l.b16 %v2361
        %v2708 = vunpack.c.h.b16 %v2361
        %v2709 = vunpack.c.l.b16 %v2362
        %v2710 = vunpack.c.h.b16 %v2362
        %v2711 = vunpack.c.l.b16 %v2363
        %v2712 = vunpack.c.h.b16 %v2363
        %v2713 = vunpack.c.l.b16 %v2364
        %v2714 = vunpack.c.h.b16 %v2364
        %v2715 = vunpack.c.l.b16 %v2365
        %v2716 = vunpack.c.h.b16 %v2365
        %v2717 = vunpack.c.l.b16 %v2366
        %v2718 = vunpack.c.h.b16 %v2366
        %v2719 = vunpack.c.l.b16 %v2367
        %v2720 = vunpack.c.h.b16 %v2367
        %v2721 = vunpack.c.l.b16 %v2368
        %v2722 = vunpack.c.h.b16 %v2368
        %v2723 = vunpack.c.l.b16 %v2369
        %v2724 = vunpack.c.h.b16 %v2369
        %v2725 = vunpack.c.l.b16 %v2370
        %v2726 = vunpack.c.h.b16 %v2370
        %v2727 = vunpack.c.l.b16 %v2371
        %v2728 = vunpack.c.h.b16 %v2371
        %v2729 = vunpack.c.l.b16 %v2372
        %v2730 = vunpack.c.h.b16 %v2372
        %v2731 = vunpack.c.l.b16 %v2373
        %v2732 = vunpack.c.h.b16 %v2373
        %v2733 = vunpack.c.l.b16 %v2374
        %v2734 = vunpack.c.h.b16 %v2374
        %v2735 = vunpack.c.l.b16 %v2375
        %v2736 = vunpack.c.h.b16 %v2375
        %v2737 = vunpack.c.l.b16 %v2376
        %v2738 = vunpack.c.h.b16 %v2376
        %v2739 = vunpack.c.l.b16 %v2377
        %v2740 = vunpack.c.h.b16 %v2377
        %v2741 = vunpack.c.l.b16 %v2378
        %v2742 = vunpack.c.h.b16 %v2378
        %v2743 = vunpack.c.l.b16 %v2379
        %v2744 = vunpack.c.h.b16 %v2379
        %v2745 = vunpack.c.l.b16 %v2380
        %v2746 = vunpack.c.h.b16 %v2380
        %v2747 = vunpack.c.l.b16 %v2381
        %v2748 = vunpack.c.h.b16 %v2381
        %v2749 = vunpack.c.l.b16 %v2382
        %v2750 = vunpack.c.h.b16 %v2382
        %v2751 = vunpack.c.l.b16 %v2383
        %v2752 = vunpack.c.h.b16 %v2383
        %v2753 = vunpack.c.l.b16 %v2384
        %v2754 = vunpack.c.h.b16 %v2384
        %v2755 = vunpack.c.l.b16 %v2385
        %v2756 = vunpack.c.h.b16 %v2385
        %v2757 = vunpack.c.l.b16 %v2386
        %v2758 = vunpack.c.h.b16 %v2386
        %v2759 = vunpack.c.l.b16 %v2387
        %v2760 = vunpack.c.h.b16 %v2387
        %v2761 = vunpack.c.l.b16 %v2388
        %v2762 = vunpack.c.h.b16 %v2388
        %v2763 = vunpack.c.l.b16 %v2389
        %v2764 = vunpack.c.h.b16 %v2389
        %v2765 = vunpack.c.l.b16 %v2390
        %v2766 = vunpack.c.h.b16 %v2390
        %v2767 = vunpack.c.l.b16 %v2391
        %v2768 = vunpack.c.h.b16 %v2391
        %v2769 = vunpack.c.l.b16 %v2392
        %v2770 = vunpack.c.h.b16 %v2392
        %v2771 = vunpack.c.l.b16 %v2393
        %v2772 = vunpack.c.h.b16 %v2393
        %v2773 = vunpack.c.l.b16 %v2394
        %v2774 = vunpack.c.h.b16 %v2394
        %v2775 = vunpack.c.l.b16 %v2395
        %v2776 = vunpack.c.h.b16 %v2395
        %v2777 = vunpack.c.l.b16 %v2396
        %v2778 = vunpack.c.h.b16 %v2396
        %v2779 = vunpack.c.l.b16 %v2397
        %v2780 = vunpack.c.h.b16 %v2397
        %v2781 = vunpack.c.l.b16 %v2398
        %v2782 = vunpack.c.h.b16 %v2398
        %v2783 = vpack.c.b16 %v2535, %v2527
        %v2784 = vpack.c.b16 %v2536, %v2528
        %v2785 = vpack.c.b16 %v2537, %v2529
        %v2786 = vpack.c.b16 %v2538, %v2530
        %v2787 = vpack.c.b16 %v2539, %v2531
        %v2788 = vpack.c.b16 %v2540, %v2532
        %v2789 = vpack.c.b16 %v2541, %v2533
        %v2790 = vpack.c.b16 %v2542, %v2534
        %v2791 = vpack.c.b16 %v2551, %v2543
        %v2792 = vpack.c.b16 %v2552, %v2544
        %v2793 = vpack.c.b16 %v2553, %v2545
        %v2794 = vpack.c.b16 %v2554, %v2546
        %v2795 = vpack.c.b16 %v2555, %v2547
        %v2796 = vpack.c.b16 %v2556, %v2548
        %v2797 = vpack.c.b16 %v2557, %v2549
        %v2798 = vpack.c.b16 %v2558, %v2550
        %v2799 = vpack.c.b16 %v2567, %v2559
        %v2800 = vpack.c.b16 %v2568, %v2560
        %v2801 = vpack.c.b16 %v2569, %v2561
        %v2802 = vpack.c.b16 %v2570, %v2562
        %v2803 = vpack.c.b16 %v2571, %v2563
        %v2804 = vpack.c.b16 %v2572, %v2564
        %v2805 = vpack.c.b16 %v2573, %v2565
        %v2806 = vpack.c.b16 %v2574, %v2566
        %v2807 = vpack.c.b16 %v2583, %v2575
        %v2808 = vpack.c.b16 %v2584, %v2576
        %v2809 = vpack.c.b16 %v2585, %v2577
        %v2810 = vpack.c.b16 %v2586, %v2578
        %v2811 = vpack.c.b16 %v2587, %v2579
        %v2812 = vpack.c.b16 %v2588, %v2580
        %v2813 = vpack.c.b16 %v2589, %v2581
        %v2814 = vpack.c.b16 %v2590, %v2582
        %v2815 = vpack.c.b16 %v2599, %v2591
        %v2816 = vpack.c.b16 %v2600, %v2592
        %v2817 = vpack.c.b16 %v2601, %v2593
        %v2818 = vpack.c.b16 %v2602, %v2594
        %v2819 = vpack.c.b16 %v2603, %v2595
        %v2820 = vpack.c.b16 %v2604, %v2596
        %v2821 = vpack.c.b16 %v2605, %v2597
        %v2822 = vpack.c.b16 %v2606, %v2598
        %v2823 = vpack.c.b16 %v2615, %v2607
        %v2824 = vpack.c.b16 %v2616, %v2608
        %v2825 = vpack.c.b16 %v2617, %v2609
        %v2826 = vpack.c.b16 %v2618, %v2610
        %v2827 = vpack.c.b16 %v2619, %v2611
        %v2828 = vpack.c.b16 %v2620, %v2612
        %v2829 = vpack.c.b16 %v2621, %v2613
        %v2830 = vpack.c.b16 %v2622, %v2614
        %v2831 = vpack.c.b16 %v2631, %v2623
        %v2832 = vpack.c.b16 %v2632, %v2624
        %v2833 = vpack.c.b16 %v2633, %v2625
        %v2834 = vpack.c.b16 %v2634, %v2626
        %v2835 = vpack.c.b16 %v2635, %v2627
        %v2836 = vpack.c.b16 %v2636, %v2628
        %v2837 = vpack.c.b16 %v2637, %v2629
        %v2838 = vpack.c.b16 %v2638, %v2630
        %v2839 = vpack.c.b16 %v2647, %v2639
        %v2840 = vpack.c.b16 %v2648, %v2640
        %v2841 = vpack.c.b16 %v2649, %v2641
        %v2842 = vpack.c.b16 %v2650, %v2642
        %v2843 = vpack.c.b16 %v2651, %v2643
        %v2844 = vpack.c.b16 %v2652, %v2644
        %v2845 = vpack.c.b16 %v2653, %v2645
        %v2846 = vpack.c.b16 %v2654, %v2646
        %v2847 = vpack.c.b16 %v2663, %v2655
        %v2848 = vpack.c.b16 %v2664, %v2656
        %v2849 = vpack.c.b16 %v2665, %v2657
        %v2850 = vpack.c.b16 %v2666, %v2658
        %v2851 = vpack.c.b16 %v2667, %v2659
        %v2852 = vpack.c.b16 %v2668, %v2660
        %v2853 = vpack.c.b16 %v2669, %v2661
        %v2854 = vpack.c.b16 %v2670, %v2662
        %v2855 = vpack.c.b16 %v2679, %v2671
        %v2856 = vpack.c.b16 %v2680, %v2672
        %v2857 = vpack.c.b16 %v2681, %v2673
        %v2858 = vpack.c.b16 %v2682, %v2674
        %v2859 = vpack.c.b16 %v2683, %v2675
        %v2860 = vpack.c.b16 %v2684, %v2676
        %v2861 = vpack.c.b16 %v2685, %v2677
        %v2862 = vpack.c.b16 %v2686, %v2678
        %v2863 = vpack.c.b16 %v2695, %v2687
        %v2864 = vpack.c.b16 %v2696, %v2688
        %v2865 = vpack.c.b16 %v2697, %v2689
        %v2866 = vpack.c.b16 %v2698, %v2690
        %v2867 = vpack.c.b16 %v2699, %v2691
        %v2868 = vpack.c.b16 %v2700, %v2692
        %v2869 = vpack.c.b16 %v2701, %v2693
        %v2870 = vpack.c.b16 %v2702, %v2694
        %v2871 = vpack.c.b16 %v2711, %v2703
        %v2872 = vpack.c.b16 %v2712, %v2704
        %v2873 = vpack.c.b16 %v2713, %v2705
        %v2874 = vpack.c.b16 %v2714, %v2706
        %v2875 = vpack.c.b16 %v2715, %v2707
        %v2876 = vpack.c.b16 %v2716, %v2708
        %v2877 = vpack.c.b16 %v2717, %v2709
        %v2878 = vpack.c.b16 %v2718, %v2710
        %v2879 = vpack.c.b16 %v2727, %v2719
        %v2880 = vpack.c.b16 %v2728, %v2720
        %v2881 = vpack.c.b16 %v2729, %v2721
        %v2882 = vpack.c.b16 %v2730, %v2722
        %v2883 = vpack.c.b16 %v2731, %v2723
        %v2884 = vpack.c.b16 %v2732, %v2724
        %v2885 = vpack.c.b16 %v2733, %v2725
        %v2886 = vpack.c.b16 %v2734, %v2726
        %v2887 = vpack.c.b16 %v2743, %v2735
        %v2888 = vpack.c.b16 %v2744, %v2736
        %v2889 = vpack.c.b16 %v2745, %v2737
        %v2890 = vpack.c.b16 %v2746, %v2738
        %v2891 = vpack.c.b16 %v2747, %v2739
        %v2892 = vpack.c.b16 %v2748, %v2740
        %v2893 = vpack.c.b16 %v2749, %v2741
        %v2894 = vpack.c.b16 %v2750, %v2742
        %v2895 = vpack.c.b16 %v2759, %v2751
        %v2896 = vpack.c.b16 %v2760, %v2752
        %v2897 = vpack.c.b16 %v2761, %v2753
        %v2898 = vpack.c.b16 %v2762, %v2754
        %v2899 = vpack.c.b16 %v2763, %v2755
        %v2900 = vpack.c.b16 %v2764, %v2756
        %v2901 = vpack.c.b16 %v2765, %v2757
        %v2902 = vpack.c.b16 %v2766, %v2758
        %v2903 = vpack.c.b16 %v2775, %v2767
        %v2904 = vpack.c.b16 %v2776, %v2768
        %v2905 = vpack.c.b16 %v2777, %v2769
        %v2906 = vpack.c.b16 %v2778, %v2770
        %v2907 = vpack.c.b16 %v2779, %v2771
        %v2908 = vpack.c.b16 %v2780, %v2772
        %v2909 = vpack.c.b16 %v2781, %v2773
        %v2910 = vpack.c.b16 %v2782, %v2774
        %3039 = vmatpush.bf16.msra.mxu0 %v2839
        %3040 = vmatpush.bf16.msra.mxu0 %v2831
        %3041 = vmatpush.bf16.msra.mxu0 %v2823
        %3042 = vmatpush.bf16.msra.mxu0 %v2815
        %3043 = vmatpush.bf16.msra.mxu0 %v2807
        %3044 = vmatpush.bf16.msra.mxu0 %v2799
        %3045 = vmatpush.bf16.msra.mxu0 %v2791
        %3046 = vmatpush.bf16.msra.mxu0 %v2783
        %3047 = vmatmul.bf16.gmra.mxu0 %v2263
        %v3048 = vpop.f32.mrf.mxu0
        %v3049 = vadd.f32 0.0, %v3048
        %v3050 = vpop.f32.mrf.mxu0
        %v3051 = vadd.f32 0.0, %v3050
        %3052 = vmatmul.bf16.gmra.mxu0 %v2265
        %v3053 = vpop.f32.mrf.mxu0
        %v3054 = vadd.f32 0.0, %v3053
        %v3055 = vpop.f32.mrf.mxu0
        %v3056 = vadd.f32 0.0, %v3055
        %3057 = vmatmul.bf16.gmra.mxu0 %v2267
        %v3058 = vpop.f32.mrf.mxu0
        %v3059 = vadd.f32 0.0, %v3058
        %v3060 = vpop.f32.mrf.mxu0
        %v3061 = vadd.f32 0.0, %v3060
        %3062 = vmatmul.bf16.gmra.mxu0 %v2269
        %v3063 = vpop.f32.mrf.mxu0
        %v3064 = vadd.f32 0.0, %v3063
        %v3065 = vpop.f32.mrf.mxu0
        %v3066 = vadd.f32 0.0, %v3065
        %3067 = vdwg.mxu0
        %3068 = vmatpush.bf16.msra.mxu0 %v2903
        %3069 = vmatpush.bf16.msra.mxu0 %v2895
        %3070 = vmatpush.bf16.msra.mxu0 %v2887
        %3071 = vmatpush.bf16.msra.mxu0 %v2879
        %3072 = vmatpush.bf16.msra.mxu0 %v2871
        %3073 = vmatpush.bf16.msra.mxu0 %v2863
        %3074 = vmatpush.bf16.msra.mxu0 %v2855
        %3075 = vmatpush.bf16.msra.mxu0 %v2847
        %3076 = vmatmul.bf16.gmra.mxu0 %v2264
        %v3077 = vpop.f32.mrf.mxu0
        %v3078 = vadd.f32 %v3049, %v3077
        %v3079 = vpop.f32.mrf.mxu0
        %v3080 = vadd.f32 %v3051, %v3079
        %3081 = vmatmul.bf16.gmra.mxu0 %v2266
        %v3082 = vpop.f32.mrf.mxu0
        %v3083 = vadd.f32 %v3054, %v3082
        %v3084 = vpop.f32.mrf.mxu0
        %v3085 = vadd.f32 %v3056, %v3084
        %3086 = vmatmul.bf16.gmra.mxu0 %v2268
        %v3087 = vpop.f32.mrf.mxu0
        %v3088 = vadd.f32 %v3059, %v3087
        %v3089 = vpop.f32.mrf.mxu0
        %v3090 = vadd.f32 %v3061, %v3089
        %3091 = vmatmul.bf16.gmra.mxu0 %v2270
        %v3092 = vpop.f32.mrf.mxu0
        %v3093 = vadd.f32 %v3064, %v3092
        %v3094 = vpop.f32.mrf.mxu0
        %v3095 = vadd.f32 %v3066, %v3094
        %3096 = vdwg.mxu0
        %3097 = vmatpush.bf16.msra.mxu0 %v2840
        %3098 = vmatpush.bf16.msra.mxu0 %v2832
        %3099 = vmatpush.bf16.msra.mxu0 %v2824
        %3100 = vmatpush.bf16.msra.mxu0 %v2816
        %3101 = vmatpush.bf16.msra.mxu0 %v2808
        %3102 = vmatpush.bf16.msra.mxu0 %v2800
        %3103 = vmatpush.bf16.msra.mxu0 %v2792
        %3104 = vmatpush.bf16.msra.mxu0 %v2784
        %3105 = vmatmul.bf16.gmra.mxu0 %v2263
        %v3106 = vpop.f32.mrf.mxu0
        %v3107 = vadd.f32 0.0, %v3106
        %v3108 = vpop.f32.mrf.mxu0
        %v3109 = vadd.f32 0.0, %v3108
        %3110 = vmatmul.bf16.gmra.mxu0 %v2265
        %v3111 = vpop.f32.mrf.mxu0
        %v3112 = vadd.f32 0.0, %v3111
        %v3113 = vpop.f32.mrf.mxu0
        %v3114 = vadd.f32 0.0, %v3113
        %3115 = vmatmul.bf16.gmra.mxu0 %v2267
        %v3116 = vpop.f32.mrf.mxu0
        %v3117 = vadd.f32 0.0, %v3116
        %v3118 = vpop.f32.mrf.mxu0
        %v3119 = vadd.f32 0.0, %v3118
        %3120 = vmatmul.bf16.gmra.mxu0 %v2269
        %v3121 = vpop.f32.mrf.mxu0
        %v3122 = vadd.f32 0.0, %v3121
        %v3123 = vpop.f32.mrf.mxu0
        %v3124 = vadd.f32 0.0, %v3123
        %3125 = vdwg.mxu0
        %3126 = vmatpush.bf16.msra.mxu0 %v2904
        %3127 = vmatpush.bf16.msra.mxu0 %v2896
        %3128 = vmatpush.bf16.msra.mxu0 %v2888
        %3129 = vmatpush.bf16.msra.mxu0 %v2880
        %3130 = vmatpush.bf16.msra.mxu0 %v2872
        %3131 = vmatpush.bf16.msra.mxu0 %v2864
        %3132 = vmatpush.bf16.msra.mxu0 %v2856
        %3133 = vmatpush.bf16.msra.mxu0 %v2848
        %3134 = vmatmul.bf16.gmra.mxu0 %v2264
        %v3135 = vpop.f32.mrf.mxu0
        %v3136 = vadd.f32 %v3107, %v3135
        %v3137 = vpop.f32.mrf.mxu0
        %v3138 = vadd.f32 %v3109, %v3137
        %3139 = vmatmul.bf16.gmra.mxu0 %v2266
        %v3140 = vpop.f32.mrf.mxu0
        %v3141 = vadd.f32 %v3112, %v3140
        %v3142 = vpop.f32.mrf.mxu0
        %v3143 = vadd.f32 %v3114, %v3142
        %3144 = vmatmul.bf16.gmra.mxu0 %v2268
        %v3145 = vpop.f32.mrf.mxu0
        %v3146 = vadd.f32 %v3117, %v3145
        %v3147 = vpop.f32.mrf.mxu0
        %v3148 = vadd.f32 %v3119, %v3147
        %3149 = vmatmul.bf16.gmra.mxu0 %v2270
        %v3150 = vpop.f32.mrf.mxu0
        %v3151 = vadd.f32 %v3122, %v3150
        %v3152 = vpop.f32.mrf.mxu0
        %v3153 = vadd.f32 %v3124, %v3152
        %3154 = vdwg.mxu0
        %3155 = vmatpush.bf16.msra.mxu0 %v2841
        %3156 = vmatpush.bf16.msra.mxu0 %v2833
        %3157 = vmatpush.bf16.msra.mxu0 %v2825
        %3158 = vmatpush.bf16.msra.mxu0 %v2817
        %3159 = vmatpush.bf16.msra.mxu0 %v2809
        %3160 = vmatpush.bf16.msra.mxu0 %v2801
        %3161 = vmatpush.bf16.msra.mxu0 %v2793
        %3162 = vmatpush.bf16.msra.mxu0 %v2785
        %3163 = vmatmul.bf16.gmra.mxu0 %v2263
        %v3164 = vpop.f32.mrf.mxu0
        %v3165 = vadd.f32 0.0, %v3164
        %v3166 = vpop.f32.mrf.mxu0
        %v3167 = vadd.f32 0.0, %v3166
        %3168 = vmatmul.bf16.gmra.mxu0 %v2265
        %v3169 = vpop.f32.mrf.mxu0
        %v3170 = vadd.f32 0.0, %v3169
        %v3171 = vpop.f32.mrf.mxu0
        %v3172 = vadd.f32 0.0, %v3171
        %3173 = vmatmul.bf16.gmra.mxu0 %v2267
        %v3174 = vpop.f32.mrf.mxu0
        %v3175 = vadd.f32 0.0, %v3174
        %v3176 = vpop.f32.mrf.mxu0
        %v3177 = vadd.f32 0.0, %v3176
        %3178 = vmatmul.bf16.gmra.mxu0 %v2269
        %v3179 = vpop.f32.mrf.mxu0
        %v3180 = vadd.f32 0.0, %v3179
        %v3181 = vpop.f32.mrf.mxu0
        %v3182 = vadd.f32 0.0, %v3181
        %3183 = vdwg.mxu0
        %3184 = vmatpush.bf16.msra.mxu0 %v2905
        %3185 = vmatpush.bf16.msra.mxu0 %v2897
        %3186 = vmatpush.bf16.msra.mxu0 %v2889
        %3187 = vmatpush.bf16.msra.mxu0 %v2881
        %3188 = vmatpush.bf16.msra.mxu0 %v2873
        %3189 = vmatpush.bf16.msra.mxu0 %v2865
        %3190 = vmatpush.bf16.msra.mxu0 %v2857
        %3191 = vmatpush.bf16.msra.mxu0 %v2849
        %3192 = vmatmul.bf16.gmra.mxu0 %v2264
        %v3193 = vpop.f32.mrf.mxu0
        %v3194 = vadd.f32 %v3165, %v3193
        %v3195 = vpop.f32.mrf.mxu0
        %v3196 = vadd.f32 %v3167, %v3195
        %3197 = vmatmul.bf16.gmra.mxu0 %v2266
        %v3198 = vpop.f32.mrf.mxu0
        %v3199 = vadd.f32 %v3170, %v3198
        %v3200 = vpop.f32.mrf.mxu0
        %v3201 = vadd.f32 %v3172, %v3200
        %3202 = vmatmul.bf16.gmra.mxu0 %v2268
        %v3203 = vpop.f32.mrf.mxu0
        %v3204 = vadd.f32 %v3175, %v3203
        %v3205 = vpop.f32.mrf.mxu0
        %v3206 = vadd.f32 %v3177, %v3205
        %3207 = vmatmul.bf16.gmra.mxu0 %v2270
        %v3208 = vpop.f32.mrf.mxu0
        %v3209 = vadd.f32 %v3180, %v3208
        %v3210 = vpop.f32.mrf.mxu0
        %v3211 = vadd.f32 %v3182, %v3210
        %3212 = vdwg.mxu0
        %3213 = vmatpush.bf16.msra.mxu0 %v2842
        %3214 = vmatpush.bf16.msra.mxu0 %v2834
        %3215 = vmatpush.bf16.msra.mxu0 %v2826
        %3216 = vmatpush.bf16.msra.mxu0 %v2818
        %3217 = vmatpush.bf16.msra.mxu0 %v2810
        %3218 = vmatpush.bf16.msra.mxu0 %v2802
        %3219 = vmatpush.bf16.msra.mxu0 %v2794
        %3220 = vmatpush.bf16.msra.mxu0 %v2786
        %3221 = vmatmul.bf16.gmra.mxu0 %v2263
        %v3222 = vpop.f32.mrf.mxu0
        %v3223 = vadd.f32 0.0, %v3222
        %v3224 = vpop.f32.mrf.mxu0
        %v3225 = vadd.f32 0.0, %v3224
        %3226 = vmatmul.bf16.gmra.mxu0 %v2265
        %v3227 = vpop.f32.mrf.mxu0
        %v3228 = vadd.f32 0.0, %v3227
        %v3229 = vpop.f32.mrf.mxu0
        %v3230 = vadd.f32 0.0, %v3229
        %3231 = vmatmul.bf16.gmra.mxu0 %v2267
        %v3232 = vpop.f32.mrf.mxu0
        %v3233 = vadd.f32 0.0, %v3232
        %v3234 = vpop.f32.mrf.mxu0
        %v3235 = vadd.f32 0.0, %v3234
        %3236 = vmatmul.bf16.gmra.mxu0 %v2269
        %v3237 = vpop.f32.mrf.mxu0
        %v3238 = vadd.f32 0.0, %v3237
        %v3239 = vpop.f32.mrf.mxu0
        %v3240 = vadd.f32 0.0, %v3239
        %3241 = vdwg.mxu0
        %3242 = vmatpush.bf16.msra.mxu0 %v2906
        %3243 = vmatpush.bf16.msra.mxu0 %v2898
        %3244 = vmatpush.bf16.msra.mxu0 %v2890
        %3245 = vmatpush.bf16.msra.mxu0 %v2882
        %3246 = vmatpush.bf16.msra.mxu0 %v2874
        %3247 = vmatpush.bf16.msra.mxu0 %v2866
        %3248 = vmatpush.bf16.msra.mxu0 %v2858
        %3249 = vmatpush.bf16.msra.mxu0 %v2850
        %3250 = vmatmul.bf16.gmra.mxu0 %v2264
        %v3251 = vpop.f32.mrf.mxu0
        %v3252 = vadd.f32 %v3223, %v3251
        %v3253 = vpop.f32.mrf.mxu0
        %v3254 = vadd.f32 %v3225, %v3253
        %3255 = vmatmul.bf16.gmra.mxu0 %v2266
        %v3256 = vpop.f32.mrf.mxu0
        %v3257 = vadd.f32 %v3228, %v3256
        %v3258 = vpop.f32.mrf.mxu0
        %v3259 = vadd.f32 %v3230, %v3258
        %3260 = vmatmul.bf16.gmra.mxu0 %v2268
        %v3261 = vpop.f32.mrf.mxu0
        %v3262 = vadd.f32 %v3233, %v3261
        %v3263 = vpop.f32.mrf.mxu0
        %v3264 = vadd.f32 %v3235, %v3263
        %3265 = vmatmul.bf16.gmra.mxu0 %v2270
        %v3266 = vpop.f32.mrf.mxu0
        %v3267 = vadd.f32 %v3238, %v3266
        %v3268 = vpop.f32.mrf.mxu0
        %v3269 = vadd.f32 %v3240, %v3268
        %3270 = vdwg.mxu0
        %3271 = vmatpush.bf16.msra.mxu0 %v2843
        %3272 = vmatpush.bf16.msra.mxu0 %v2835
        %3273 = vmatpush.bf16.msra.mxu0 %v2827
        %3274 = vmatpush.bf16.msra.mxu0 %v2819
        %3275 = vmatpush.bf16.msra.mxu0 %v2811
        %3276 = vmatpush.bf16.msra.mxu0 %v2803
        %3277 = vmatpush.bf16.msra.mxu0 %v2795
        %3278 = vmatpush.bf16.msra.mxu0 %v2787
        %3279 = vmatmul.bf16.gmra.mxu0 %v2263
        %v3280 = vpop.f32.mrf.mxu0
        %v3281 = vadd.f32 0.0, %v3280
        %v3282 = vpop.f32.mrf.mxu0
        %v3283 = vadd.f32 0.0, %v3282
        %3284 = vmatmul.bf16.gmra.mxu0 %v2265
        %v3285 = vpop.f32.mrf.mxu0
        %v3286 = vadd.f32 0.0, %v3285
        %v3287 = vpop.f32.mrf.mxu0
        %v3288 = vadd.f32 0.0, %v3287
        %3289 = vmatmul.bf16.gmra.mxu0 %v2267
        %v3290 = vpop.f32.mrf.mxu0
        %v3291 = vadd.f32 0.0, %v3290
        %v3292 = vpop.f32.mrf.mxu0
        %v3293 = vadd.f32 0.0, %v3292
        %3294 = vmatmul.bf16.gmra.mxu0 %v2269
        %v3295 = vpop.f32.mrf.mxu0
        %v3296 = vadd.f32 0.0, %v3295
        %v3297 = vpop.f32.mrf.mxu0
        %v3298 = vadd.f32 0.0, %v3297
        %3299 = vdwg.mxu0
        %3300 = vmatpush.bf16.msra.mxu0 %v2907
        %3301 = vmatpush.bf16.msra.mxu0 %v2899
        %3302 = vmatpush.bf16.msra.mxu0 %v2891
        %3303 = vmatpush.bf16.msra.mxu0 %v2883
        %3304 = vmatpush.bf16.msra.mxu0 %v2875
        %3305 = vmatpush.bf16.msra.mxu0 %v2867
        %3306 = vmatpush.bf16.msra.mxu0 %v2859
        %3307 = vmatpush.bf16.msra.mxu0 %v2851
        %3308 = vmatmul.bf16.gmra.mxu0 %v2264
        %v3309 = vpop.f32.mrf.mxu0
        %v3310 = vadd.f32 %v3281, %v3309
        %v3311 = vpop.f32.mrf.mxu0
        %v3312 = vadd.f32 %v3283, %v3311
        %3313 = vmatmul.bf16.gmra.mxu0 %v2266
        %v3314 = vpop.f32.mrf.mxu0
        %v3315 = vadd.f32 %v3286, %v3314
        %v3316 = vpop.f32.mrf.mxu0
        %v3317 = vadd.f32 %v3288, %v3316
        %3318 = vmatmul.bf16.gmra.mxu0 %v2268
        %v3319 = vpop.f32.mrf.mxu0
        %v3320 = vadd.f32 %v3291, %v3319
        %v3321 = vpop.f32.mrf.mxu0
        %v3322 = vadd.f32 %v3293, %v3321
        %3323 = vmatmul.bf16.gmra.mxu0 %v2270
        %v3324 = vpop.f32.mrf.mxu0
        %v3325 = vadd.f32 %v3296, %v3324
        %v3326 = vpop.f32.mrf.mxu0
        %v3327 = vadd.f32 %v3298, %v3326
        %3328 = vdwg.mxu0
        %3329 = vmatpush.bf16.msra.mxu0 %v2844
        %3330 = vmatpush.bf16.msra.mxu0 %v2836
        %3331 = vmatpush.bf16.msra.mxu0 %v2828
        %3332 = vmatpush.bf16.msra.mxu0 %v2820
        %3333 = vmatpush.bf16.msra.mxu0 %v2812
        %3334 = vmatpush.bf16.msra.mxu0 %v2804
        %3335 = vmatpush.bf16.msra.mxu0 %v2796
        %3336 = vmatpush.bf16.msra.mxu0 %v2788
        %3337 = vmatmul.bf16.gmra.mxu0 %v2263
        %v3338 = vpop.f32.mrf.mxu0
        %v3339 = vadd.f32 0.0, %v3338
        %v3340 = vpop.f32.mrf.mxu0
        %v3341 = vadd.f32 0.0, %v3340
        %3342 = vmatmul.bf16.gmra.mxu0 %v2265
        %v3343 = vpop.f32.mrf.mxu0
        %v3344 = vadd.f32 0.0, %v3343
        %v3345 = vpop.f32.mrf.mxu0
        %v3346 = vadd.f32 0.0, %v3345
        %3347 = vmatmul.bf16.gmra.mxu0 %v2267
        %v3348 = vpop.f32.mrf.mxu0
        %v3349 = vadd.f32 0.0, %v3348
        %v3350 = vpop.f32.mrf.mxu0
        %v3351 = vadd.f32 0.0, %v3350
        %3352 = vmatmul.bf16.gmra.mxu0 %v2269
        %v3353 = vpop.f32.mrf.mxu0
        %v3354 = vadd.f32 0.0, %v3353
        %v3355 = vpop.f32.mrf.mxu0
        %v3356 = vadd.f32 0.0, %v3355
        %3357 = vdwg.mxu0
        %3358 = vmatpush.bf16.msra.mxu0 %v2908
        %3359 = vmatpush.bf16.msra.mxu0 %v2900
        %3360 = vmatpush.bf16.msra.mxu0 %v2892
        %3361 = vmatpush.bf16.msra.mxu0 %v2884
        %3362 = vmatpush.bf16.msra.mxu0 %v2876
        %3363 = vmatpush.bf16.msra.mxu0 %v2868
        %3364 = vmatpush.bf16.msra.mxu0 %v2860
        %3365 = vmatpush.bf16.msra.mxu0 %v2852
        %3366 = vmatmul.bf16.gmra.mxu0 %v2264
        %v3367 = vpop.f32.mrf.mxu0
        %v3368 = vadd.f32 %v3339, %v3367
        %v3369 = vpop.f32.mrf.mxu0
        %v3370 = vadd.f32 %v3341, %v3369
        %3371 = vmatmul.bf16.gmra.mxu0 %v2266
        %v3372 = vpop.f32.mrf.mxu0
        %v3373 = vadd.f32 %v3344, %v3372
        %v3374 = vpop.f32.mrf.mxu0
        %v3375 = vadd.f32 %v3346, %v3374
        %3376 = vmatmul.bf16.gmra.mxu0 %v2268
        %v3377 = vpop.f32.mrf.mxu0
        %v3378 = vadd.f32 %v3349, %v3377
        %v3379 = vpop.f32.mrf.mxu0
        %v3380 = vadd.f32 %v3351, %v3379
        %3381 = vmatmul.bf16.gmra.mxu0 %v2270
        %v3382 = vpop.f32.mrf.mxu0
        %v3383 = vadd.f32 %v3354, %v3382
        %v3384 = vpop.f32.mrf.mxu0
        %v3385 = vadd.f32 %v3356, %v3384
        %3386 = vdwg.mxu0
        %3387 = vmatpush.bf16.msra.mxu0 %v2845
        %3388 = vmatpush.bf16.msra.mxu0 %v2837
        %3389 = vmatpush.bf16.msra.mxu0 %v2829
        %3390 = vmatpush.bf16.msra.mxu0 %v2821
        %3391 = vmatpush.bf16.msra.mxu0 %v2813
        %3392 = vmatpush.bf16.msra.mxu0 %v2805
        %3393 = vmatpush.bf16.msra.mxu0 %v2797
        %3394 = vmatpush.bf16.msra.mxu0 %v2789
        %3395 = vmatmul.bf16.gmra.mxu0 %v2263
        %v3396 = vpop.f32.mrf.mxu0
        %v3397 = vadd.f32 0.0, %v3396
        %v3398 = vpop.f32.mrf.mxu0
        %v3399 = vadd.f32 0.0, %v3398
        %3400 = vmatmul.bf16.gmra.mxu0 %v2265
        %v3401 = vpop.f32.mrf.mxu0
        %v3402 = vadd.f32 0.0, %v3401
        %v3403 = vpop.f32.mrf.mxu0
        %v3404 = vadd.f32 0.0, %v3403
        %3405 = vmatmul.bf16.gmra.mxu0 %v2267
        %v3406 = vpop.f32.mrf.mxu0
        %v3407 = vadd.f32 0.0, %v3406
        %v3408 = vpop.f32.mrf.mxu0
        %v3409 = vadd.f32 0.0, %v3408
        %3410 = vmatmul.bf16.gmra.mxu0 %v2269
        %v3411 = vpop.f32.mrf.mxu0
        %v3412 = vadd.f32 0.0, %v3411
        %v3413 = vpop.f32.mrf.mxu0
        %v3414 = vadd.f32 0.0, %v3413
        %3415 = vdwg.mxu0
        %3416 = vmatpush.bf16.msra.mxu0 %v2909
        %3417 = vmatpush.bf16.msra.mxu0 %v2901
        %3418 = vmatpush.bf16.msra.mxu0 %v2893
        %3419 = vmatpush.bf16.msra.mxu0 %v2885
        %3420 = vmatpush.bf16.msra.mxu0 %v2877
        %3421 = vmatpush.bf16.msra.mxu0 %v2869
        %3422 = vmatpush.bf16.msra.mxu0 %v2861
        %3423 = vmatpush.bf16.msra.mxu0 %v2853
        %3424 = vmatmul.bf16.gmra.mxu0 %v2264
        %v3425 = vpop.f32.mrf.mxu0
        %v3426 = vadd.f32 %v3397, %v3425
        %v3427 = vpop.f32.mrf.mxu0
        %v3428 = vadd.f32 %v3399, %v3427
        %3429 = vmatmul.bf16.gmra.mxu0 %v2266
        %v3430 = vpop.f32.mrf.mxu0
        %v3431 = vadd.f32 %v3402, %v3430
        %v3432 = vpop.f32.mrf.mxu0
        %v3433 = vadd.f32 %v3404, %v3432
        %3434 = vmatmul.bf16.gmra.mxu0 %v2268
        %v3435 = vpop.f32.mrf.mxu0
        %v3436 = vadd.f32 %v3407, %v3435
        %v3437 = vpop.f32.mrf.mxu0
        %v3438 = vadd.f32 %v3409, %v3437
        %3439 = vmatmul.bf16.gmra.mxu0 %v2270
        %v3440 = vpop.f32.mrf.mxu0
        %v3441 = vadd.f32 %v3412, %v3440
        %v3442 = vpop.f32.mrf.mxu0
        %v3443 = vadd.f32 %v3414, %v3442
        %3444 = vdwg.mxu0
        %3445 = vmatpush.bf16.msra.mxu0 %v2846
        %3446 = vmatpush.bf16.msra.mxu0 %v2838
        %3447 = vmatpush.bf16.msra.mxu0 %v2830
        %3448 = vmatpush.bf16.msra.mxu0 %v2822
        %3449 = vmatpush.bf16.msra.mxu0 %v2814
        %3450 = vmatpush.bf16.msra.mxu0 %v2806
        %3451 = vmatpush.bf16.msra.mxu0 %v2798
        %3452 = vmatpush.bf16.msra.mxu0 %v2790
        %3453 = vmatmul.bf16.gmra.mxu0 %v2263
        %v3454 = vpop.f32.mrf.mxu0
        %v3455 = vadd.f32 0.0, %v3454
        %v3456 = vpop.f32.mrf.mxu0
        %v3457 = vadd.f32 0.0, %v3456
        %3458 = vmatmul.bf16.gmra.mxu0 %v2265
        %v3459 = vpop.f32.mrf.mxu0
        %v3460 = vadd.f32 0.0, %v3459
        %v3461 = vpop.f32.mrf.mxu0
        %v3462 = vadd.f32 0.0, %v3461
        %3463 = vmatmul.bf16.gmra.mxu0 %v2267
        %v3464 = vpop.f32.mrf.mxu0
        %v3465 = vadd.f32 0.0, %v3464
        %v3466 = vpop.f32.mrf.mxu0
        %v3467 = vadd.f32 0.0, %v3466
        %3468 = vmatmul.bf16.gmra.mxu0 %v2269
        %v3469 = vpop.f32.mrf.mxu0
        %v3470 = vadd.f32 0.0, %v3469
        %v3471 = vpop.f32.mrf.mxu0
        %v3472 = vadd.f32 0.0, %v3471
        %3473 = vdwg.mxu0
        %3474 = vmatpush.bf16.msra.mxu0 %v2910
        %3475 = vmatpush.bf16.msra.mxu0 %v2902
        %3476 = vmatpush.bf16.msra.mxu0 %v2894
        %3477 = vmatpush.bf16.msra.mxu0 %v2886
        %3478 = vmatpush.bf16.msra.mxu0 %v2878
        %3479 = vmatpush.bf16.msra.mxu0 %v2870
        %3480 = vmatpush.bf16.msra.mxu0 %v2862
        %3481 = vmatpush.bf16.msra.mxu0 %v2854
        %3482 = vmatmul.bf16.gmra.mxu0 %v2264
        %v3483 = vpop.f32.mrf.mxu0
        %v3484 = vadd.f32 %v3455, %v3483
        %v3485 = vpop.f32.mrf.mxu0
        %v3486 = vadd.f32 %v3457, %v3485
        %3487 = vmatmul.bf16.gmra.mxu0 %v2266
        %v3488 = vpop.f32.mrf.mxu0
        %v3489 = vadd.f32 %v3460, %v3488
        %v3490 = vpop.f32.mrf.mxu0
        %v3491 = vadd.f32 %v3462, %v3490
        %3492 = vmatmul.bf16.gmra.mxu0 %v2268
        %v3493 = vpop.f32.mrf.mxu0
        %v3494 = vadd.f32 %v3465, %v3493
        %v3495 = vpop.f32.mrf.mxu0
        %v3496 = vadd.f32 %v3467, %v3495
        %3497 = vmatmul.bf16.gmra.mxu0 %v2270
        %v3498 = vpop.f32.mrf.mxu0
        %v3499 = vadd.f32 %v3470, %v3498
        %v3500 = vpop.f32.mrf.mxu0
        %v3501 = vadd.f32 %v3472, %v3500
        %3502 = vdwg.mxu0
        %v3503 = vmax.f32 %v3078, %v3194
        %v3504 = vmax.f32 %v3136, %v3252
        %v3505 = vmax.f32 %v3080, %v3196
        %v3506 = vmax.f32 %v3138, %v3254
        %v3507 = vmax.f32 %v3083, %v3199
        %v3508 = vmax.f32 %v3141, %v3257
        %v3509 = vmax.f32 %v3085, %v3201
        %v3510 = vmax.f32 %v3143, %v3259
        %v3511 = vmax.f32 %v3088, %v3204
        %v3512 = vmax.f32 %v3146, %v3262
        %v3513 = vmax.f32 %v3090, %v3206
        %v3514 = vmax.f32 %v3148, %v3264
        %v3515 = vmax.f32 %v3093, %v3209
        %v3516 = vmax.f32 %v3151, %v3267
        %v3517 = vmax.f32 %v3095, %v3211
        %v3518 = vmax.f32 %v3153, %v3269
        %v3519 = vmax.f32 %v3310, %v3426
        %v3520 = vmax.f32 %v3368, %v3484
        %v3521 = vmax.f32 %v3312, %v3428
        %v3522 = vmax.f32 %v3370, %v3486
        %v3523 = vmax.f32 %v3315, %v3431
        %v3524 = vmax.f32 %v3373, %v3489
        %v3525 = vmax.f32 %v3317, %v3433
        %v3526 = vmax.f32 %v3375, %v3491
        %v3527 = vmax.f32 %v3320, %v3436
        %v3528 = vmax.f32 %v3378, %v3494
        %v3529 = vmax.f32 %v3322, %v3438
        %v3530 = vmax.f32 %v3380, %v3496
        %v3531 = vmax.f32 %v3325, %v3441
        %v3532 = vmax.f32 %v3383, %v3499
        %v3533 = vmax.f32 %v3327, %v3443
        %v3534 = vmax.f32 %v3385, %v3501
        %v3535 = vmax.f32 %v3503, %v3519
        %v3536 = vmax.f32 %v3504, %v3520
        %v3537 = vmax.f32 %v3505, %v3521
        %v3538 = vmax.f32 %v3506, %v3522
        %v3539 = vmax.f32 %v3507, %v3523
        %v3540 = vmax.f32 %v3508, %v3524
        %v3541 = vmax.f32 %v3509, %v3525
        %v3542 = vmax.f32 %v3510, %v3526
        %v3543 = vmax.f32 %v3511, %v3527
        %v3544 = vmax.f32 %v3512, %v3528
        %v3545 = vmax.f32 %v3513, %v3529
        %v3546 = vmax.f32 %v3514, %v3530
        %v3547 = vmax.f32 %v3515, %v3531
        %v3548 = vmax.f32 %v3516, %v3532
        %v3549 = vmax.f32 %v3517, %v3533
        %v3550 = vmax.f32 %v3518, %v3534
        %s3551 = scalar_lea.vmem %s7, 16
        %v3552 = vld [vmem:[%s3551] ss:$8 sm:$0x3]
        %v3554 = vperm.slane %v3552, 0
        %v3555 = vperm.slane %v3552, 1
        %v3558 = vadd.f32 %v3535, %v3554
        %v3559 = vadd.f32 %v3536, %v3555
        %v3560 = vadd.f32 %v3537, %v3554
        %v3561 = vadd.f32 %v3538, %v3555
        %v3562 = vadd.f32 %v3539, %v3554
        %v3563 = vadd.f32 %v3540, %v3555
        %v3564 = vadd.f32 %v3541, %v3554
        %v3565 = vadd.f32 %v3542, %v3555
        %v3566 = vadd.f32 %v3543, %v3554
        %v3567 = vadd.f32 %v3544, %v3555
        %v3568 = vadd.f32 %v3545, %v3554
        %v3569 = vadd.f32 %v3546, %v3555
        %v3570 = vadd.f32 %v3547, %v3554
        %v3571 = vadd.f32 %v3548, %v3555
        %v3572 = vadd.f32 %v3549, %v3554
        %v3573 = vadd.f32 %v3550, %v3555
        %v3574 = vmul.f32 %v3558, 0.001
        %v3575 = vmul.f32 %v3559, 0.001
        %v3576 = vmul.f32 %v3560, 0.001
        %v3577 = vmul.f32 %v3561, 0.001
        %v3578 = vmul.f32 %v3562, 0.001
        %v3579 = vmul.f32 %v3563, 0.001
        %v3580 = vmul.f32 %v3564, 0.001
        %v3581 = vmul.f32 %v3565, 0.001
        %v3582 = vmul.f32 %v3566, 0.001
        %v3583 = vmul.f32 %v3567, 0.001
        %v3584 = vmul.f32 %v3568, 0.001
        %v3585 = vmul.f32 %v3569, 0.001
        %v3586 = vmul.f32 %v3570, 0.001
        %v3587 = vmul.f32 %v3571, 0.001
        %v3588 = vmul.f32 %v3572, 0.001
        %v3589 = vmul.f32 %v3573, 0.001
        %v3590 = vmax.f32 %v3558, %v3574
        %v3591 = vmax.f32 %v3559, %v3575
        %v3592 = vmax.f32 %v3560, %v3576
        %v3593 = vmax.f32 %v3561, %v3577
        %v3594 = vmax.f32 %v3562, %v3578
        %v3595 = vmax.f32 %v3563, %v3579
        %v3596 = vmax.f32 %v3564, %v3580
        %v3597 = vmax.f32 %v3565, %v3581
        %v3598 = vmax.f32 %v3566, %v3582
        %v3599 = vmax.f32 %v3567, %v3583
        %v3600 = vmax.f32 %v3568, %v3584
        %v3601 = vmax.f32 %v3569, %v3585
        %v3602 = vmax.f32 %v3570, %v3586
        %v3603 = vmax.f32 %v3571, %v3587
        %v3604 = vmax.f32 %v3572, %v3588
        %v3605 = vmax.f32 %v3573, %v3589
        %v3606 = vld [vmem:[%s6 + $0x20] sm:$0x3]
        %v3607 = vunpack.c.l.bf16 %v3606
        %v3608 = vld [vmem:[%s6 + $0x28] sm:$0xf]
        %v3609 = vld [vmem:[%s6 + $0x2c] sm:$0xf]
        %v3610 = vld [vmem:[%s6 + $0x30] sm:$0xf]
        %v3611 = vld [vmem:[%s6 + $0x34] sm:$0xf]
        %v3612 = vld [vmem:[%s6 + $0x38] sm:$0xf]
        %v3613 = vld [vmem:[%s6 + $0x3c] sm:$0xf]
        %v3614 = vld [vmem:[%s6 + $0x40] sm:$0xf]
        %v3615 = vld [vmem:[%s6 + $0x44] sm:$0xf]
        %v3616 = vld [vmem:[%s6 + $0x48] sm:$0xf]
        %v3617 = vld [vmem:[%s6 + $0x4c] sm:$0xf]
        %v3618 = vld [vmem:[%s6 + $0x50] sm:$0xf]
        %v3619 = vld [vmem:[%s6 + $0x54] sm:$0xf]
        %v3620 = vld [vmem:[%s6 + $0x58] sm:$0xf]
        %v3621 = vld [vmem:[%s6 + $0x5c] sm:$0xf]
        %v3622 = vld [vmem:[%s6 + $0x60] sm:$0xf]
        %v3623 = vld [vmem:[%s6 + $0x64] sm:$0xf]
        %v3624 = vld [vmem:[%s6 + $0x68] sm:$0xf]
        %v3625 = vld [vmem:[%s6 + $0x6c] sm:$0xf]
        %v3626 = vld [vmem:[%s6 + $0x70] sm:$0xf]
        %v3627 = vld [vmem:[%s6 + $0x74] sm:$0xf]
        %v3628 = vld [vmem:[%s6 + $0x78] sm:$0xf]
        %v3629 = vld [vmem:[%s6 + $0x7c] sm:$0xf]
        %v3630 = vld [vmem:[%s6 + $0x80] sm:$0xf]
        %v3631 = vld [vmem:[%s6 + $0x84] sm:$0xf]
        %v3632 = vld [vmem:[%s6 + $0x88] sm:$0xf]
        %v3633 = vld [vmem:[%s6 + $0x8c] sm:$0xf]
        %v3634 = vld [vmem:[%s6 + $0x90] sm:$0xf]
        %v3635 = vld [vmem:[%s6 + $0x94] sm:$0xf]
        %v3636 = vld [vmem:[%s6 + $0x98] sm:$0xf]
        %v3637 = vld [vmem:[%s6 + $0x9c] sm:$0xf]
        %v3638 = vld [vmem:[%s6 + $0xa0] sm:$0xf]
        %v3639 = vld [vmem:[%s6 + $0xa4] sm:$0xf]
        %v3640 = vpack.c.bf16 %v3592, %v3590
        %v3641 = vpack.c.bf16 %v3593, %v3591
        %v3642 = vpack.c.bf16 %v3596, %v3594
        %v3643 = vpack.c.bf16 %v3597, %v3595
        %v3644 = vpack.c.bf16 %v3600, %v3598
        %v3645 = vpack.c.bf16 %v3601, %v3599
        %v3646 = vpack.c.bf16 %v3604, %v3602
        %v3647 = vpack.c.bf16 %v3605, %v3603
        %v3680 = vunpack.c.l.b16 %v3608
        %v3681 = vunpack.c.l.b16 %v3609
        %v3682 = vunpack.c.l.b16 %v3610
        %v3683 = vunpack.c.l.b16 %v3611
        %v3684 = vunpack.c.l.b16 %v3612
        %v3685 = vunpack.c.l.b16 %v3613
        %v3686 = vunpack.c.l.b16 %v3614
        %v3687 = vunpack.c.l.b16 %v3615
        %v3688 = vunpack.c.l.b16 %v3616
        %v3689 = vunpack.c.l.b16 %v3617
        %v3690 = vunpack.c.l.b16 %v3618
        %v3691 = vunpack.c.l.b16 %v3619
        %v3692 = vunpack.c.l.b16 %v3620
        %v3693 = vunpack.c.l.b16 %v3621
        %v3694 = vunpack.c.l.b16 %v3622
        %v3695 = vunpack.c.l.b16 %v3623
        %v3696 = vunpack.c.l.b16 %v3624
        %v3697 = vunpack.c.l.b16 %v3625
        %v3698 = vunpack.c.l.b16 %v3626
        %v3699 = vunpack.c.l.b16 %v3627
        %v3700 = vunpack.c.l.b16 %v3628
        %v3701 = vunpack.c.l.b16 %v3629
        %v3702 = vunpack.c.l.b16 %v3630
        %v3703 = vunpack.c.l.b16 %v3631
        %v3704 = vunpack.c.l.b16 %v3632
        %v3705 = vunpack.c.l.b16 %v3633
        %v3706 = vunpack.c.l.b16 %v3634
        %v3707 = vunpack.c.l.b16 %v3635
        %v3708 = vunpack.c.l.b16 %v3636
        %v3709 = vunpack.c.l.b16 %v3637
        %v3710 = vunpack.c.l.b16 %v3638
        %v3711 = vunpack.c.l.b16 %v3639
        %v3712 = vpack.c.b16 %v3681, %v3680
        %v3713 = vpack.c.b16 %v3683, %v3682
        %v3714 = vpack.c.b16 %v3685, %v3684
        %v3715 = vpack.c.b16 %v3687, %v3686
        %v3716 = vpack.c.b16 %v3689, %v3688
        %v3717 = vpack.c.b16 %v3691, %v3690
        %v3718 = vpack.c.b16 %v3693, %v3692
        %v3719 = vpack.c.b16 %v3695, %v3694
        %v3720 = vpack.c.b16 %v3697, %v3696
        %v3721 = vpack.c.b16 %v3699, %v3698
        %v3722 = vpack.c.b16 %v3701, %v3700
        %v3723 = vpack.c.b16 %v3703, %v3702
        %v3724 = vpack.c.b16 %v3705, %v3704
        %v3725 = vpack.c.b16 %v3707, %v3706
        %v3726 = vpack.c.b16 %v3709, %v3708
        %v3727 = vpack.c.b16 %v3711, %v3710
        %3744 = vmatpush.bf16.msra.mxu0 %v3719
        %3745 = vmatpush.bf16.msra.mxu0 %v3718
        %3746 = vmatpush.bf16.msra.mxu0 %v3717
        %3747 = vmatpush.bf16.msra.mxu0 %v3716
        %3748 = vmatpush.bf16.msra.mxu0 %v3715
        %3749 = vmatpush.bf16.msra.mxu0 %v3714
        %3750 = vmatpush.bf16.msra.mxu0 %v3713
        %3751 = vmatpush.bf16.msra.mxu0 %v3712
        %3752 = vmatmul.bf16.gmra.mxu0 %v3640
        %v3753 = vpop.f32.mrf.mxu0
        %v3754 = vadd.f32 0.0, %v3753
        %v3755 = vpop.f32.mrf.mxu0
        %v3756 = vadd.f32 0.0, %v3755
        %3757 = vmatmul.bf16.gmra.mxu0 %v3642
        %v3758 = vpop.f32.mrf.mxu0
        %v3759 = vadd.f32 0.0, %v3758
        %v3760 = vpop.f32.mrf.mxu0
        %v3761 = vadd.f32 0.0, %v3760
        %3762 = vmatmul.bf16.gmra.mxu0 %v3644
        %v3763 = vpop.f32.mrf.mxu0
        %v3764 = vadd.f32 0.0, %v3763
        %v3765 = vpop.f32.mrf.mxu0
        %v3766 = vadd.f32 0.0, %v3765
        %3767 = vmatmul.bf16.gmra.mxu0 %v3646
        %v3768 = vpop.f32.mrf.mxu0
        %v3769 = vadd.f32 0.0, %v3768
        %v3770 = vpop.f32.mrf.mxu0
        %v3771 = vadd.f32 0.0, %v3770
        %3772 = vdwg.mxu0
        %3773 = vmatpush.bf16.msra.mxu0 %v3727
        %3774 = vmatpush.bf16.msra.mxu0 %v3726
        %3775 = vmatpush.bf16.msra.mxu0 %v3725
        %3776 = vmatpush.bf16.msra.mxu0 %v3724
        %3777 = vmatpush.bf16.msra.mxu0 %v3723
        %3778 = vmatpush.bf16.msra.mxu0 %v3722
        %3779 = vmatpush.bf16.msra.mxu0 %v3721
        %3780 = vmatpush.bf16.msra.mxu0 %v3720
        %3781 = vmatmul.bf16.gmra.mxu0 %v3641
        %v3782 = vpop.f32.mrf.mxu0
        %v3783 = vadd.f32 %v3754, %v3782
        %v3784 = vpop.f32.mrf.mxu0
        %v3785 = vadd.f32 %v3756, %v3784
        %3786 = vmatmul.bf16.gmra.mxu0 %v3643
        %v3787 = vpop.f32.mrf.mxu0
        %v3788 = vadd.f32 %v3759, %v3787
        %v3789 = vpop.f32.mrf.mxu0
        %v3790 = vadd.f32 %v3761, %v3789
        %3791 = vmatmul.bf16.gmra.mxu0 %v3645
        %v3792 = vpop.f32.mrf.mxu0
        %v3793 = vadd.f32 %v3764, %v3792
        %v3794 = vpop.f32.mrf.mxu0
        %v3795 = vadd.f32 %v3766, %v3794
        %3796 = vmatmul.bf16.gmra.mxu0 %v3647
        %v3797 = vpop.f32.mrf.mxu0
        %v3798 = vadd.f32 %v3769, %v3797
        %v3799 = vpop.f32.mrf.mxu0
        %v3800 = vadd.f32 %v3771, %v3799
        %3801 = vdwg.mxu0
        %vm3802 = vcmask 31744
        %v3804 = vsel %vm3802, %v2239, 0
        %v3807 = vsel %vm3802, %v2240, 0
        %v3810 = vsel %vm3802, %v2241, 0
        %v3813 = vsel %vm3802, %v2242, 0
        %v3816 = vsel %vm3802, %v2243, 0
        %v3819 = vsel %vm3802, %v2244, 0
        %v3822 = vsel %vm3802, %v2245, 0
        %v3825 = vsel %vm3802, %v2246, 0
        %vm3827 = vcmask 1043456
        %v3829 = vsel %vm3827, %v3607, 0
        %3831 = vmatpush.msra.mxu0 0.0
        %3832 = vmatpush.msra.mxu0 0.0
        %3833 = vmatpush.msra.mxu0 0.0
        %3834 = vmatpush.msra.mxu0 0.0
        %3835 = vmatpush.msra.mxu0 0.0
        %3836 = vmatpush.msra.mxu0 0.0
        %3837 = vmatpush.msra.mxu0 0.0
        %3838 = vmatpush.msra.mxu0 0.0
        %3839 = vmatpush.msra.mxu0 0.0
        %3840 = vmatpush.msra.mxu0 0.0
        %3841 = vmatpush.msra.mxu0 0.0
        %3842 = vmatpush.msra.mxu0 0.0
        %3843 = vmatpush.msra.mxu0 0.0
        %3844 = vmatpush.msra.mxu0 0.0
        %3845 = vmatpush.msra.mxu0 0.0
        %3846 = vmatpush.msra.mxu0 %v3829
        %3847 = vmatmul.f32.gmra.mxu0 %v3804
        %v3848 = vpop.f32.mrf.mxu0
        %v3849 = vadd.f32 %v3783, %v3848
        %3850 = vmatmul.f32.gmra.mxu0 %v3807
        %v3851 = vpop.f32.mrf.mxu0
        %v3852 = vadd.f32 %v3785, %v3851
        %3853 = vmatmul.f32.gmra.mxu0 %v3810
        %v3854 = vpop.f32.mrf.mxu0
        %v3855 = vadd.f32 %v3788, %v3854
        %3856 = vmatmul.f32.gmra.mxu0 %v3813
        %v3857 = vpop.f32.mrf.mxu0
        %v3858 = vadd.f32 %v3790, %v3857
        %3859 = vmatmul.f32.gmra.mxu0 %v3816
        %v3860 = vpop.f32.mrf.mxu0
        %v3861 = vadd.f32 %v3793, %v3860
        %3862 = vmatmul.f32.gmra.mxu0 %v3819
        %v3863 = vpop.f32.mrf.mxu0
        %v3864 = vadd.f32 %v3795, %v3863
        %3865 = vmatmul.f32.gmra.mxu0 %v3822
        %v3866 = vpop.f32.mrf.mxu0
        %v3867 = vadd.f32 %v3798, %v3866
        %3868 = vmatmul.f32.gmra.mxu0 %v3825
        %v3869 = vpop.f32.mrf.mxu0
        %v3870 = vadd.f32 %v3800, %v3869
        %3871 = vdwg.mxu0
        %v3872 = vld [vmem:[%s7 + $0x2] ss:$0 sm:$0xff]
        %v3873 = vadd.f32 %v3849, %v3872
        %v3874 = vadd.f32 %v3852, %v3872
        %v3875 = vadd.f32 %v3855, %v3872
        %v3876 = vadd.f32 %v3858, %v3872
        %v3877 = vadd.f32 %v3861, %v3872
        %v3878 = vadd.f32 %v3864, %v3872
        %v3879 = vadd.f32 %v3867, %v3872
        %v3880 = vadd.f32 %v3870, %v3872
        %v3881 = vmax.f32 %v3873, 0.0
        %v3882 = vmax.f32 %v3874, 0.0
        %v3883 = vmax.f32 %v3875, 0.0
        %v3884 = vmax.f32 %v3876, 0.0
        %v3885 = vmax.f32 %v3877, 0.0
        %v3886 = vmax.f32 %v3878, 0.0
        %v3887 = vmax.f32 %v3879, 0.0
        %v3888 = vmax.f32 %v3880, 0.0
        %v3889 = vld [vmem:[%s6 + $0xa8] sm:$0xf]
        %v3890 = vld [vmem:[%s6 + $0xac] sm:$0xf]
        %v3891 = vld [vmem:[%s6 + $0xb0] sm:$0xf]
        %v3892 = vld [vmem:[%s6 + $0xb4] sm:$0xf]
        %v3893 = vld [vmem:[%s6 + $0xb8] sm:$0xf]
        %v3894 = vld [vmem:[%s6 + $0xbc] sm:$0xf]
        %v3895 = vld [vmem:[%s6 + $0xc0] sm:$0xf]
        %v3896 = vunpack.c.l.bf16 %v3889
        %v3897 = vunpack.c.l.bf16 %v3890
        %v3898 = vunpack.c.l.bf16 %v3891
        %v3899 = vunpack.c.l.bf16 %v3892
        %v3900 = vunpack.c.l.bf16 %v3893
        %v3901 = vunpack.c.l.bf16 %v3894
        %v3902 = vunpack.c.l.bf16 %v3895
        %v3903 = vld [vmem:[%s7 + $0x3] ss:$0 sm:$0xff]
        %vm3904 = vcmask 457728
        %v3906 = vsel %vm3904, %v3881, 0
        %v3909 = vsel %vm3904, %v3882, 0
        %v3912 = vsel %vm3904, %v3883, 0
        %v3915 = vsel %vm3904, %v3884, 0
        %v3918 = vsel %vm3904, %v3885, 0
        %v3921 = vsel %vm3904, %v3886, 0
        %v3924 = vsel %vm3904, %v3887, 0
        %v3927 = vsel %vm3904, %v3888, 0
        %3929 = vmatpush.msra.mxu0 0.0
        %3930 = vmatpush.msra.mxu0 0.0
        %3931 = vmatpush.msra.mxu0 0.0
        %3932 = vmatpush.msra.mxu0 0.0
        %3933 = vmatpush.msra.mxu0 0.0
        %3934 = vmatpush.msra.mxu0 0.0
        %3935 = vmatpush.msra.mxu0 0.0
        %3936 = vmatpush.msra.mxu0 0.0
        %3937 = vmatpush.msra.mxu0 0.0
        %3938 = vmatpush.msra.mxu0 %v3902
        %3939 = vmatpush.msra.mxu0 %v3901
        %3940 = vmatpush.msra.mxu0 %v3900
        %3941 = vmatpush.msra.mxu0 %v3899
        %3942 = vmatpush.msra.mxu0 %v3898
        %3943 = vmatpush.msra.mxu0 %v3897
        %3944 = vmatpush.msra.mxu0 %v3896
        %3945 = vmatmul.f32.gmra.mxu0 %v3906
        %v3946 = vpop.f32.mrf.mxu0
        %v3947 = vadd.f32 %v3903, %v3946
        %3948 = vmatmul.f32.gmra.mxu0 %v3909
        %v3949 = vpop.f32.mrf.mxu0
        %v3950 = vadd.f32 %v3903, %v3949
        %3951 = vmatmul.f32.gmra.mxu0 %v3912
        %v3952 = vpop.f32.mrf.mxu0
        %v3953 = vadd.f32 %v3903, %v3952
        %3954 = vmatmul.f32.gmra.mxu0 %v3915
        %v3955 = vpop.f32.mrf.mxu0
        %v3956 = vadd.f32 %v3903, %v3955
        %3957 = vmatmul.f32.gmra.mxu0 %v3918
        %v3958 = vpop.f32.mrf.mxu0
        %v3959 = vadd.f32 %v3903, %v3958
        %3960 = vmatmul.f32.gmra.mxu0 %v3921
        %v3961 = vpop.f32.mrf.mxu0
        %v3962 = vadd.f32 %v3903, %v3961
        %3963 = vmatmul.f32.gmra.mxu0 %v3924
        %v3964 = vpop.f32.mrf.mxu0
        %v3965 = vadd.f32 %v3903, %v3964
        %3966 = vmatmul.f32.gmra.mxu0 %v3927
        %v3967 = vpop.f32.mrf.mxu0
        %v3968 = vadd.f32 %v3903, %v3967
        %3969 = vdwg.mxu0
        %v3970 = vmax.f32 %v3947, 0.0
        %v3971 = vmax.f32 %v3950, 0.0
        %v3972 = vmax.f32 %v3953, 0.0
        %v3973 = vmax.f32 %v3956, 0.0
        %v3974 = vmax.f32 %v3959, 0.0
        %v3975 = vmax.f32 %v3962, 0.0
        %v3976 = vmax.f32 %v3965, 0.0
        %v3977 = vmax.f32 %v3968, 0.0
        %v3978 = vld [vmem:[%s6 + $0xc8] sm:$0xf]
        %v3979 = vld [vmem:[%s6 + $0xcc] sm:$0xf]
        %v3980 = vld [vmem:[%s6 + $0xd0] sm:$0xf]
        %v3981 = vld [vmem:[%s6 + $0xd4] sm:$0x3]
        %v3982 = vunpack.c.l.bf16 %v3978
        %v3983 = vunpack.c.l.bf16 %v3979
        %v3984 = vunpack.c.l.bf16 %v3980
        %v3985 = vunpack.c.l.bf16 %v3981
        %v3986 = vld [vmem:[%s7 + $0x4] ss:$0 sm:$0xff]
        %vm3987 = vcmask 228352
        %v3989 = vsel %vm3987, %v3970, 0
        %v3992 = vsel %vm3987, %v3971, 0
        %v3995 = vsel %vm3987, %v3972, 0
        %v3998 = vsel %vm3987, %v3973, 0
        %v4001 = vsel %vm3987, %v3974, 0
        %v4004 = vsel %vm3987, %v3975, 0
        %v4007 = vsel %vm3987, %v3976, 0
        %v4010 = vsel %vm3987, %v3977, 0
        %v4013 = vsel %vm3827, %v3985, 0
        %4015 = vmatpush.msra.mxu0 0.0
        %4016 = vmatpush.msra.mxu0 0.0
        %4017 = vmatpush.msra.mxu0 0.0
        %4018 = vmatpush.msra.mxu0 0.0
        %4019 = vmatpush.msra.mxu0 0.0
        %4020 = vmatpush.msra.mxu0 0.0
        %4021 = vmatpush.msra.mxu0 0.0
        %4022 = vmatpush.msra.mxu0 0.0
        %4023 = vmatpush.msra.mxu0 0.0
        %4024 = vmatpush.msra.mxu0 0.0
        %4025 = vmatpush.msra.mxu0 0.0
        %4026 = vmatpush.msra.mxu0 0.0
        %4027 = vmatpush.msra.mxu0 %v4013
        %4028 = vmatpush.msra.mxu0 %v3984
        %4029 = vmatpush.msra.mxu0 %v3983
        %4030 = vmatpush.msra.mxu0 %v3982
        %4031 = vmatmul.f32.gmra.mxu0 %v3989
        %v4032 = vpop.f32.mrf.mxu0
        %v4033 = vadd.f32 %v3986, %v4032
        %4034 = vmatmul.f32.gmra.mxu0 %v3992
        %v4035 = vpop.f32.mrf.mxu0
        %v4036 = vadd.f32 %v3986, %v4035
        %4037 = vmatmul.f32.gmra.mxu0 %v3995
        %v4038 = vpop.f32.mrf.mxu0
        %v4039 = vadd.f32 %v3986, %v4038
        %4040 = vmatmul.f32.gmra.mxu0 %v3998
        %v4041 = vpop.f32.mrf.mxu0
        %v4042 = vadd.f32 %v3986, %v4041
        %4043 = vmatmul.f32.gmra.mxu0 %v4001
        %v4044 = vpop.f32.mrf.mxu0
        %v4045 = vadd.f32 %v3986, %v4044
        %4046 = vmatmul.f32.gmra.mxu0 %v4004
        %v4047 = vpop.f32.mrf.mxu0
        %v4048 = vadd.f32 %v3986, %v4047
        %4049 = vmatmul.f32.gmra.mxu0 %v4007
        %v4050 = vpop.f32.mrf.mxu0
        %v4051 = vadd.f32 %v3986, %v4050
        %4052 = vmatmul.f32.gmra.mxu0 %v4010
        %v4053 = vpop.f32.mrf.mxu0
        %v4054 = vadd.f32 %v3986, %v4053
        %4055 = vdwg.mxu0
        %v4056 = vld [vmem:[%s385] sm:$0xff]
        %v4057 = vld [vmem:[%s385 + $0x8] sm:$0xff]
        %v4058 = vld [vmem:[%s385 + $0x10] sm:$0xff]
        %v4059 = vld [vmem:[%s385 + $0x18] sm:$0xff]
        %v4060 = vld [vmem:[%s385 + $0x20] sm:$0xff]
        %v4061 = vld [vmem:[%s385 + $0x28] sm:$0xff]
        %v4062 = vld [vmem:[%s385 + $0x30] sm:$0xff]
        %v4063 = vld [vmem:[%s385 + $0x38] sm:$0xff]
        %vm4064 = vcmp.eq.s32.totalorder %v4056, 0
        %vm4065 = vcmp.eq.s32.totalorder %v4057, 0
        %vm4066 = vcmp.eq.s32.totalorder %v4058, 0
        %vm4067 = vcmp.eq.s32.totalorder %v4059, 0
        %vm4068 = vcmp.eq.s32.totalorder %v4060, 0
        %vm4069 = vcmp.eq.s32.totalorder %v4061, 0
        %vm4070 = vcmp.eq.s32.totalorder %v4062, 0
        %vm4071 = vcmp.eq.s32.totalorder %v4063, 0
        %v4072 = vsel %vm4064, 1, 0
        %v4073 = vsel %vm4065, 1, 0
        %v4074 = vsel %vm4066, 1, 0
        %v4075 = vsel %vm4067, 1, 0
        %v4076 = vsel %vm4068, 1, 0
        %v4077 = vsel %vm4069, 1, 0
        %v4078 = vsel %vm4070, 1, 0
        %v4079 = vsel %vm4071, 1, 0
        %4080 = vset.pattern.permute.xlu0 0
        %4081 = vperm.xlu0 %4080, %v4072
        %v4082 = vpop.permute.xlu0 %4081
        %4083 = vset.pattern.permute.xlu0 0
        %4084 = vperm.xlu0 %4083, %v4073
        %v4085 = vpop.permute.xlu0 %4084
        %4086 = vset.pattern.permute.xlu0 0
        %4087 = vperm.xlu0 %4086, %v4074
        %v4088 = vpop.permute.xlu0 %4087
        %4089 = vset.pattern.permute.xlu0 0
        %4090 = vperm.xlu0 %4089, %v4075
        %v4091 = vpop.permute.xlu0 %4090
        %4092 = vset.pattern.permute.xlu0 0
        %4093 = vperm.xlu0 %4092, %v4076
        %v4094 = vpop.permute.xlu0 %4093
        %4095 = vset.pattern.permute.xlu0 0
        %4096 = vperm.xlu0 %4095, %v4077
        %v4097 = vpop.permute.xlu0 %4096
        %4098 = vset.pattern.permute.xlu0 0
        %4099 = vperm.xlu0 %4098, %v4078
        %v4100 = vpop.permute.xlu0 %4099
        %4101 = vset.pattern.permute.xlu0 0
        %4102 = vperm.xlu0 %4101, %v4079
        %v4103 = vpop.permute.xlu0 %4102
        %vm4104 = vcmp.eq.s32.totalorder %v4082, 1
        %vm4105 = vcmp.eq.s32.totalorder %v4085, 1
        %vm4106 = vcmp.eq.s32.totalorder %v4088, 1
        %vm4107 = vcmp.eq.s32.totalorder %v4091, 1
        %vm4108 = vcmp.eq.s32.totalorder %v4094, 1
        %vm4109 = vcmp.eq.s32.totalorder %v4097, 1
        %vm4110 = vcmp.eq.s32.totalorder %v4100, 1
        %vm4111 = vcmp.eq.s32.totalorder %v4103, 1
        %v4112 = vsel %vm4104, %v4033, 0.0
        %v4113 = vsel %vm4105, %v4036, 0.0
        %v4114 = vsel %vm4106, %v4039, 0.0
        %v4115 = vsel %vm4107, %v4042, 0.0
        %v4116 = vsel %vm4108, %v4045, 0.0
        %v4117 = vsel %vm4109, %v4048, 0.0
        %v4118 = vsel %vm4110, %v4051, 0.0
        %v4119 = vsel %vm4111, %v4054, 0.0
        %vm4120 = vcmp.eq.s32.totalorder %v4056, 1
        %vm4121 = vcmp.eq.s32.totalorder %v4057, 1
        %vm4122 = vcmp.eq.s32.totalorder %v4058, 1
        %vm4123 = vcmp.eq.s32.totalorder %v4059, 1
        %vm4124 = vcmp.eq.s32.totalorder %v4060, 1
        %vm4125 = vcmp.eq.s32.totalorder %v4061, 1
        %vm4126 = vcmp.eq.s32.totalorder %v4062, 1
        %vm4127 = vcmp.eq.s32.totalorder %v4063, 1
        %v4128 = vsel %vm4120, 1, 0
        %v4129 = vsel %vm4121, 1, 0
        %v4130 = vsel %vm4122, 1, 0
        %v4131 = vsel %vm4123, 1, 0
        %v4132 = vsel %vm4124, 1, 0
        %v4133 = vsel %vm4125, 1, 0
        %v4134 = vsel %vm4126, 1, 0
        %v4135 = vsel %vm4127, 1, 0
        %4136 = vset.pattern.permute.xlu0 0
        %4137 = vperm.xlu0 %4136, %v4128
        %v4138 = vpop.permute.xlu0 %4137
        %4139 = vset.pattern.permute.xlu0 0
        %4140 = vperm.xlu0 %4139, %v4129
        %v4141 = vpop.permute.xlu0 %4140
        %4142 = vset.pattern.permute.xlu0 0
        %4143 = vperm.xlu0 %4142, %v4130
        %v4144 = vpop.permute.xlu0 %4143
        %4145 = vset.pattern.permute.xlu0 0
        %4146 = vperm.xlu0 %4145, %v4131
        %v4147 = vpop.permute.xlu0 %4146
        %4148 = vset.pattern.permute.xlu0 0
        %4149 = vperm.xlu0 %4148, %v4132
        %v4150 = vpop.permute.xlu0 %4149
        %4151 = vset.pattern.permute.xlu0 0
        %4152 = vperm.xlu0 %4151, %v4133
        %v4153 = vpop.permute.xlu0 %4152
        %4154 = vset.pattern.permute.xlu0 0
        %4155 = vperm.xlu0 %4154, %v4134
        %v4156 = vpop.permute.xlu0 %4155
        %4157 = vset.pattern.permute.xlu0 0
        %4158 = vperm.xlu0 %4157, %v4135
        %v4159 = vpop.permute.xlu0 %4158
        %vm4160 = vcmp.eq.s32.totalorder %v4138, 1
        %vm4161 = vcmp.eq.s32.totalorder %v4141, 1
        %vm4162 = vcmp.eq.s32.totalorder %v4144, 1
        %vm4163 = vcmp.eq.s32.totalorder %v4147, 1
        %vm4164 = vcmp.eq.s32.totalorder %v4150, 1
        %vm4165 = vcmp.eq.s32.totalorder %v4153, 1
        %vm4166 = vcmp.eq.s32.totalorder %v4156, 1
        %vm4167 = vcmp.eq.s32.totalorder %v4159, 1
        %4176 = vrot.lane.b32.xlu0 %v4112, 5
        %v4177 = vpop.permute.xlu0 %4176
        %4178 = vrot.lane.b32.xlu0 %v4113, 5
        %v4179 = vpop.permute.xlu0 %4178
        %4180 = vrot.lane.b32.xlu0 %v4114, 5
        %v4181 = vpop.permute.xlu0 %4180
        %4182 = vrot.lane.b32.xlu0 %v4115, 5
        %v4183 = vpop.permute.xlu0 %4182
        %4184 = vrot.lane.b32.xlu0 %v4116, 5
        %v4185 = vpop.permute.xlu0 %4184
        %4186 = vrot.lane.b32.xlu0 %v4117, 5
        %v4187 = vpop.permute.xlu0 %4186
        %4188 = vrot.lane.b32.xlu0 %v4118, 5
        %v4189 = vpop.permute.xlu0 %4188
        %4190 = vrot.lane.b32.xlu0 %v4119, 5
        %v4191 = vpop.permute.xlu0 %4190
        %v4200 = vsel %vm4160, %v4033, %v4177
        %v4201 = vsel %vm4161, %v4036, %v4179
        %v4202 = vsel %vm4162, %v4039, %v4181
        %v4203 = vsel %vm4163, %v4042, %v4183
        %v4204 = vsel %vm4164, %v4045, %v4185
        %v4205 = vsel %vm4165, %v4048, %v4187
        %v4206 = vsel %vm4166, %v4051, %v4189
        %v4207 = vsel %vm4167, %v4054, %v4191
        %4216 = vrot.lane.b32.xlu0 %v4200, 123
        %v4217 = vpop.permute.xlu0 %4216
        %4218 = vrot.lane.b32.xlu0 %v4201, 123
        %v4219 = vpop.permute.xlu0 %4218
        %4220 = vrot.lane.b32.xlu0 %v4202, 123
        %v4221 = vpop.permute.xlu0 %4220
        %4222 = vrot.lane.b32.xlu0 %v4203, 123
        %v4223 = vpop.permute.xlu0 %4222
        %4224 = vrot.lane.b32.xlu0 %v4204, 123
        %v4225 = vpop.permute.xlu0 %4224
        %4226 = vrot.lane.b32.xlu0 %v4205, 123
        %v4227 = vpop.permute.xlu0 %4226
        %4228 = vrot.lane.b32.xlu0 %v4206, 123
        %v4229 = vpop.permute.xlu0 %4228
        %4230 = vrot.lane.b32.xlu0 %v4207, 123
        %v4231 = vpop.permute.xlu0 %4230
        %vm4240 = vcmask 39936
        %4241 = vst.msk [vmem:[%s391] sm:$0xff] %vm4240, %v4217
        %4242 = vst.msk [vmem:[%s391 + $0x8] sm:$0xff] %vm4240, %v4219
        %4243 = vst.msk [vmem:[%s391 + $0x10] sm:$0xff] %vm4240, %v4221
        %4244 = vst.msk [vmem:[%s391 + $0x18] sm:$0xff] %vm4240, %v4223
        %4245 = vst.msk [vmem:[%s391 + $0x20] sm:$0xff] %vm4240, %v4225
        %4246 = vst.msk [vmem:[%s391 + $0x28] sm:$0xff] %vm4240, %v4227
        %4247 = vst.msk [vmem:[%s391 + $0x30] sm:$0xff] %vm4240, %v4229
        %4248 = vst.msk [vmem:[%s391 + $0x38] sm:$0xff] %vm4240, %v4231
        %s4249 = smul.u32 8, %s21
        %p4250 = scmp.lt.s32.totalorder %s4249, 15
        %s4251 = scalar_select %p4250, %s4249, 15
        %s4252 = smul.addr %s4251, 8
        %s4253 = scalar_lea.vmem %s8, %s4252
        // Predicated region
        $region61: #{net_forward.1} parent=51 // pred_check
          %p4254 = pneg %p222
        $region62: #{net_forward.1} parent=51 // pred_check_branch
          %4256 = sbr.rel (%p4254) target = $region64
        $region63: #{net_forward.1} parent=51 // pred_region
          %s4257 = smul.u32 8, %s21
        $region64: #{net_forward.1} parent=51 // pred_fallthru
          _
      $region52: #{net_forward.1} parent=5 // pred_fallthru
        _
      %p4258 = scmp.le.s32.totalorder 2, %s16
      // Predicated region
      $region65: #{net_forward.1} parent=5 // pred_check
        %p4259 = pneg %p4258
      $region66: #{net_forward.1} parent=5 // pred_check_branch
        %4261 = sbr.rel (%p4259) target = $region68
      $region67: #{net_forward.1} parent=5 // pred_region
        %s4262 = ssub.s32 %s16, 2
        // Predicated region
        $region69: #{net_forward.1} parent=67 // pred_check
          %p4263 = pneg %p228
        $region70: #{net_forward.1} parent=67 // pred_check_branch
          %4265 = sbr.rel (%p4263) target = $region72
        $region71: #{net_forward.1} parent=67 // pred_region
          %s4266 = smul.u32 8, %s22
          %p4267 = scmp.lt.s32.totalorder %s4266, 15
          %s4268 = scalar_select %p4267, %s4266, 15
          %s4269 = smul.addr %s4268, 8
          %s4270 = scalar_lea.vmem %s8, %s4269
        $region72: #{net_forward.1} parent=67 // pred_fallthru
          _
      $region68: #{net_forward.1} parent=5 // pred_fallthru
        _
    $region6: #{net_forward.1} parent=1 // loop_footer
      %s20 = sadd.s32 1, %s16
    $region7: #{net_forward.1} parent=1 // loop_footer_branch
      %15 = sbr.rel target = $region3
    $region8: #{net_forward.1} parent=1 // loop_exit
      _
    %4271 = vsyncpa [#allocation3], 1
    %s4272 = scalar_lea.sflag [#allocation3], 1
    %4273 = vsyncpa %s4272, 1
    %4274 = vsyncpa [#allocation5], 1

</llo_original>
